<compile_context>
chip_gen: v5e
topology: v5e:2x2
jax: 0.10.0
libtpu: 0.0.40
codegen_flags: <defaults>
</compile_context>

<pallas_src>
import math

import jax
import jax.numpy as jnp
from jax import lax
from jax.experimental import pallas as pl
from jax.experimental.pallas import tpu as pltpu


# ------------------------------ tile helpers --------------------------------

def _pick_tile(dim, target, align):
    """Largest `align`-aligned tile <= target that divides dim.  Small dims
    (<= target) use the full dim (always legal: a block equal to the full
    array dim satisfies the (8,128) rule).  If nothing divides, only fall
    back to the full dim when it stays bounded; otherwise fail loudly rather
    than silently creating a huge block (VMEM OOM)."""
    if dim <= target:
        return dim
    t = (target // align) * align
    while t >= align:
        if dim % t == 0:
            return t
        t -= align
    if dim <= 4 * target:
        return dim
    # TODO(synk): support ragged last blocks via pl.cdiv grids + masking.
    raise ValueError(
        f"no {align}-aligned tile <= {target} divides dim {dim}; "
        f"pad this dimension to a friendlier size")


# ----------------------------- Pallas kernels -------------------------------

def _matmul_bias_kernel(x_ref, wt_ref, b_ref, o_ref, acc_ref):
    """Tiled  y = x @ W^T + b.  wt_ref already holds W^T tiles (tk, tn)."""
    @pl.when(pl.program_id(2) == 0)
    def _init():
        acc_ref[...] = jnp.zeros_like(acc_ref)

    acc_ref[...] += jnp.dot(x_ref[...], wt_ref[...],
                            preferred_element_type=jnp.float32)

    @pl.when(pl.program_id(2) == pl.num_programs(2) - 1)
    def _finalize():
        o_ref[...] = (acc_ref[...] + b_ref[...].astype(jnp.float32)
                      ).astype(o_ref.dtype)


def _attn_kernel(q_ref, k_ref, v_ref, o_ref, w_ref, m_ref, l_ref, acc_ref):
    """Flash-style attention over one (batch, q-tile, kv-tile) grid step,
    processing all heads per step.

    q_ref : (tq, 1, 1, H, Dh)      k_ref/v_ref : (tkv, 1, 1, H, Dh)
    o_ref : (tq, 1, H, Dh)         w_ref       : (H, tq, tkv) pre-softmax logits
    m_ref/l_ref : (H, tq, 1) f32   acc_ref     : (tq, H, Dh) f32
    """
    ki = pl.program_id(2)
    H = w_ref.shape[0]

    @pl.when(ki == 0)
    def _init():
        m_ref[...] = jnp.full_like(m_ref, -jnp.inf)
        l_ref[...] = jnp.zeros_like(l_ref)
        acc_ref[...] = jnp.zeros_like(acc_ref)

    # Per-head 2-D MXU matmuls; every per-head temporary is consumed by a ref
    # store inside the loop body, so live ranges stay bounded.
    for h in range(H):                                        # static unroll
        q = q_ref[:, 0, 0, h, :]                              # (tq, Dh)
        k = k_ref[:, 0, 0, h, :]                              # (tkv, Dh)
        v = v_ref[:, 0, 0, h, :]                              # (tkv, Dh)

        # logits = q @ k^T (contract Dh).
        # TODO(synk): cache K^T across the qi axis (needs a kv-outer grid with
        # resident per-qi softmax state) to remove redundant XLU transposes.
        s = lax.dot_general(q, k, (((1,), (1,)), ((), ())),
                            preferred_element_type=jnp.float32)   # (tq, tkv)
        w_ref[h] = s.astype(w_ref.dtype)     # exact pre-softmax logits (lane-dense)

        # online (flash) softmax update for this head
        m_prev = m_ref[h]                                     # (tq, 1)
        m_new = jnp.maximum(m_prev, jnp.max(s, axis=-1, keepdims=True))
        alpha = jnp.exp(m_prev - m_new)                       # (tq, 1)
        p = jnp.exp(s - m_new)                                # (tq, tkv) f32
        l_ref[h] = alpha * l_ref[h] + jnp.sum(p, axis=-1, keepdims=True)
        pv = jnp.dot(p.astype(v.dtype), v,
                     preferred_element_type=jnp.float32)      # (tq, Dh)
        acc_ref[:, h, :] = alpha * acc_ref[:, h, :] + pv
        m_ref[h] = m_new
        # TODO(synk): dropout is a no-op here (module default dropout=0.0).

    @pl.when(ki == pl.num_programs(2) - 1)
    def _finalize():
        for h in range(H):
            inv_l = pl.reciprocal(l_ref[h], approx=True)      # (tq, 1), EUP slot
            acc_ref[:, h, :] = acc_ref[:, h, :] * inv_l
        # Single store of all heads for this (batch, q-tile) block.
        o_ref[:, 0, :, :] = acc_ref[...].astype(o_ref.dtype)


# ------------------------------ JAX wrappers ---------------------------------

def pallas_linear(x, w_t, b, *, tm_target=512, tn_target=512, tk_target=512,
                  vmem_limit_bytes=48 * 1024 * 1024):
    """x: (M, K);  w_t: (K, N) pre-transposed weight;  b: (N,)."""
    m, kdim = x.shape
    n = w_t.shape[1]
    tm = _pick_tile(m, tm_target, 8)
    tn = _pick_tile(n, tn_target, 128)
    tk = _pick_tile(kdim, tk_target, 128)
    grid = (m // tm, n // tn, kdim // tk)
    itemsize = jnp.dtype(x.dtype).itemsize
    return pl.pallas_call(
        _matmul_bias_kernel,
        grid=grid,
        out_shape=jax.ShapeDtypeStruct((m, n), x.dtype),
        in_specs=[
            pl.BlockSpec((tm, tk), lambda i, j, k: (i, k)),
            pl.BlockSpec((tk, tn), lambda i, j, k: (k, j)),
            pl.BlockSpec((1, tn), lambda i, j, k: (0, j)),
        ],
        out_specs=pl.BlockSpec((tm, tn), lambda i, j, k: (i, j)),
        scratch_shapes=[pltpu.VMEM((tm, tn), jnp.float32)],
        compiler_params=pltpu.CompilerParams(
            dimension_semantics=("parallel", "parallel", "arbitrary"),
            vmem_limit_bytes=vmem_limit_bytes),
        cost_estimate=pl.CostEstimate(
            flops=2 * m * n * kdim, transcendentals=0,
            bytes_accessed=(m * kdim + kdim * n + m * n) * itemsize),
    )(x, w_t, b.reshape(1, n))


def pallas_attention(qkv5, T, B, H, Dh, out_dtype, *, tq_target=128,
                     tkv_target=512, weights_dtype=jnp.float32,
                     vmem_limit_bytes=48 * 1024 * 1024):
    """qkv5: (T, B, 3, H, Dh) fused projection output.

    Returns attn (T, B, H, Dh) and pre-softmax attn_weights (B*H, T, T).
    The KV axis is tiled (tkv) with an online softmax, so the per-step VMEM
    footprint is bounded for long T (v7x 64 MiB VMEM); when T <= tkv_target
    the kernel degenerates to a single kv step (no K/V re-fetch across qi)."""
    tq = _pick_tile(T, tq_target, 8)
    tkv = _pick_tile(T, tkv_target, 128)
    grid = (B, T // tq, T // tkv)
    E = H * Dh
    in_bytes = jnp.dtype(qkv5.dtype).itemsize
    w_bytes = jnp.dtype(weights_dtype).itemsize
    return pl.pallas_call(
        _attn_kernel,
        grid=grid,
        out_shape=(
            jax.ShapeDtypeStruct((T, B, H, Dh), out_dtype),
            jax.ShapeDtypeStruct((B * H, T, T), weights_dtype),
        ),
        in_specs=[
            # q / k / v selected out of the same fused projection array purely
            # via index_map (axis 2 = {q,k,v}); no XLA transpose / slice ops.
            pl.BlockSpec((tq, 1, 1, H, Dh), lambda b, qi, ki: (qi, b, 0, 0, 0)),
            pl.BlockSpec((tkv, 1, 1, H, Dh), lambda b, qi, ki: (ki, b, 1, 0, 0)),
            pl.BlockSpec((tkv, 1, 1, H, Dh), lambda b, qi, ki: (ki, b, 2, 0, 0)),
        ],
        out_specs=(
            pl.BlockSpec((tq, 1, H, Dh), lambda b, qi, ki: (qi, b, 0, 0)),
            pl.BlockSpec((H, tq, tkv), lambda b, qi, ki: (b, qi, ki)),
        ),
        scratch_shapes=[
            pltpu.VMEM((H, tq, 1), jnp.float32),    # running max m
            pltpu.VMEM((H, tq, 1), jnp.float32),    # running sum l
            pltpu.VMEM((tq, H, Dh), jnp.float32),   # f32 output accumulator
        ],
        compiler_params=pltpu.CompilerParams(
            dimension_semantics=("parallel", "parallel", "arbitrary"),
            vmem_limit_bytes=vmem_limit_bytes),
        cost_estimate=pl.CostEstimate(
            flops=4 * B * H * T * T * Dh,
            transcendentals=B * H * T * T,
            bytes_accessed=(4 * T * B * E) * in_bytes + B * H * T * T * w_bytes),
    )(qkv5, qkv5, qkv5)


def path_multihead_attention(query, packed, num_heads,
                             weights_dtype=jnp.float32):
    """Forward pass of PathMultiheadAttention.

    query:  (tgt_len, bsz, embed_dim)
    packed: output of pack_params()
    returns (attn (tgt_len, bsz, embed_dim),
             attn_weights (bsz*num_heads, tgt_len, tgt_len))   [pre-softmax]
    """
    T, B, E = query.shape
    H = num_heads
    Dh = E // H
    assert Dh * H == E

    x = query.reshape(T * B, E)

    # Fused q/k/v projection: one pass over x, one wide (M, 3E) matmul.
    qkv = pallas_linear(x, packed["w_qkv_t"], packed["b_qkv"])   # (T*B, 3E)

    # Free reshape (no data movement): column = p*E + h*Dh + d.
    qkv5 = qkv.reshape(T, B, 3, H, Dh)

    attn4, attn_weights = pallas_attention(qkv5, T, B, H, Dh, query.dtype,
                                           weights_dtype=weights_dtype)

    # (T, B, H, Dh) -> (T*B, E): free reshape (no transpose), matches torch's
    # transpose(0,1).view(T, B, E) layout.
    attn_flat = attn4.reshape(T * B, E)
    out = pallas_linear(attn_flat, packed["w_out_t"], packed["b_out"])
    return out.reshape(T, B, E), attn_weights


# --------------------------- parameter construction --------------------------

def xavier_uniform(key, shape, gain=1.0):
    fan_out, fan_in = shape
    a = gain * math.sqrt(6.0 / (fan_in + fan_out))
    return jax.random.uniform(key, shape, jnp.float32, -a, a)


def init_params(key, embed_dim):
    """Torch-layout parameters (weights are (out_dim, in_dim))."""
    ks = jax.random.split(key, 7)
    g = 1.0 / math.sqrt(2.0)            # qkv_same_dim path of reset_parameters()
    bound = 1.0 / math.sqrt(embed_dim)  # nn.Linear default bias init
    return {
        "wq": xavier_uniform(ks[0], (embed_dim, embed_dim), gain=g),
        "wk": xavier_uniform(ks[1], (embed_dim, embed_dim), gain=g),
        "wv": xavier_uniform(ks[2], (embed_dim, embed_dim), gain=g),
        "wo": xavier_uniform(ks[3], (embed_dim, embed_dim), gain=1.0),
        "bq": jax.random.uniform(ks[4], (embed_dim,), jnp.float32, -bound, bound),
        "bk": jax.random.uniform(ks[5], (embed_dim,), jnp.float32, -bound, bound),
        "bv": jax.random.uniform(ks[6], (embed_dim,), jnp.float32, -bound, bound),
        "bo": jnp.zeros((embed_dim,), jnp.float32),   # out_proj bias -> 0
    }


def pack_params(params, dtype=None):
    """One-time packing: fuse q/k/v weights and pre-transpose (no per-forward
    w.T transposes, no per-forward concat).  Pass dtype=jnp.bfloat16 (and feed
    bf16 activations) to hit the bf16 MXU fast path; accumulation stays f32."""
    w_qkv = jnp.concatenate([params["wq"], params["wk"], params["wv"]], axis=0)
    b_qkv = jnp.concatenate([params["bq"], params["bk"], params["bv"]], axis=0)
    cast = (lambda a: a.astype(dtype)) if dtype is not None else (lambda a: a)
    return {
        "w_qkv_t": cast(jnp.asarray(w_qkv.T)),        # (E, 3E)
        "b_qkv": cast(b_qkv),                          # (3E,)
        "w_out_t": cast(jnp.asarray(params["wo"].T)),  # (E, E)
        "b_out": cast(params["bo"]),                   # (E,)
    }


# ------------------------------ pure-JAX reference ---------------------------

def reference(query, params, num_heads):
    T, B, E = query.shape
    H, Dh = num_heads, E // num_heads
    x = query.reshape(T * B, E)
    q = x @ params["wq"].T + params["bq"]
    k = x @ params["wk"].T + params["bk"]
    v = x @ params["wv"].T + params["bv"]
    sh = lambda t: t.reshape(T, B * H, Dh).transpose(1, 0, 2)
    q, k, v = sh(q), sh(k), sh(v)
    logits = jnp.einsum("ntd,nsd->nts", q, k)
    probs = jax.nn.softmax(logits, axis=-1)
    attn = jnp.einsum("nts,nsd->ntd", probs, v)
    attn = attn.transpose(1, 0, 2).reshape(T * B, E)
    out = (attn @ params["wo"].T + params["bo"]).reshape(T, B, E)
    return out, logits


# ----------------------------------- main ------------------------------------

if __name__ == "__main__":
    tgt_len, bsz, embed_dim, num_heads = 8, 2, 32, 4

    key = jax.random.PRNGKey(0)
    k_param, k_query = jax.random.split(key)
    params = init_params(k_param, embed_dim)
    packed = pack_params(params)
    query = jax.random.normal(k_query, (tgt_len, bsz, embed_dim), jnp.float32)

    fwd = jax.jit(path_multihead_attention, static_argnums=(2,))
    attn, attn_weights = fwd(query, packed, num_heads)
    attn = jax.block_until_ready(attn)
    attn_weights = jax.block_until_ready(attn_weights)

    ref_attn, ref_w = reference(query, params, num_heads)
    assert attn.shape == (tgt_len, bsz, embed_dim)
    assert attn_weights.shape == (bsz * num_heads, tgt_len, tgt_len)
    # attn_weights are exact pre-softmax logits (no approx ops on that path).
    assert jnp.allclose(attn_weights, ref_w, rtol=1e-4, atol=1e-4)
    # attn goes through the online softmax + approx EUP reciprocal -> looser tol.
    assert jnp.allclose(attn, ref_attn, rtol=1e-2, atol=1e-2)

    print("KERNEL_OK")
</pallas_src>

<mosaic_0001>
module attributes {stable_mosaic.version = 11 : i64} {
  func.func @_matmul_bias_kernel(%arg0: i32, %arg1: i32, %arg2: i32, %arg3: memref<16x32xf32, #tpu.memory_space<vmem>>, %arg4: memref<32x96xf32, #tpu.memory_space<vmem>>, %arg5: memref<1x96xf32, #tpu.memory_space<vmem>>, %arg6: memref<16x96xf32, #tpu.memory_space<vmem>>, %arg7: memref<16x96xf32, #tpu.memory_space<vmem>>) attributes {dimension_semantics = [#tpu.dimension_semantics<parallel>, #tpu.dimension_semantics<parallel>, #tpu.dimension_semantics<arbitrary>], iteration_bounds = array<i64: 1, 1, 1>, scalar_prefetch = 0 : i64, scratch_operands = 1 : i64, tpu.core_type = #tpu.core_type<tc>, window_params = [{transform_indices = @transform_0, window_bounds = array<i64: 16, 32>}, {transform_indices = @transform_1, window_bounds = array<i64: 32, 96>}, {transform_indices = @transform_2, window_bounds = array<i64: 1, 96>}, {transform_indices = @transform_3, window_bounds = array<i64: 16, 96>}]} {
    %c0_i32 = arith.constant 0 : i32
    %0 = arith.cmpi eq, %arg2, %c0_i32 : i32
    %1 = arith.extui %0 : i1 to i32
    %c0_i32_0 = arith.constant 0 : i32
    %2 = arith.cmpi ne, %1, %c0_i32_0 : i32
    scf.if %2 {
      %cst_10 = arith.constant 0.000000e+00 : f32
      %12 = vector.broadcast %cst_10 : f32 to vector<16x96xf32>
      %c0_11 = arith.constant 0 : index
      %c0_12 = arith.constant 0 : index
      %13 = vector.load %arg7[%c0_11, %c0_12] : memref<16x96xf32, #tpu.memory_space<vmem>>, vector<16x96xf32>
      tpu.vector_store %arg7[%c0_11, %c0_12], %12 {strides = array<i32>} : memref<16x96xf32, #tpu.memory_space<vmem>>, vector<16x96xf32>,
    } else {
    }
    %c0 = arith.constant 0 : index
    %c0_1 = arith.constant 0 : index
    %3 = vector.load %arg7[%c0, %c0_1] : memref<16x96xf32, #tpu.memory_space<vmem>>, vector<16x96xf32>
    %c0_2 = arith.constant 0 : index
    %c0_3 = arith.constant 0 : index
    %4 = vector.load %arg3[%c0_2, %c0_3] : memref<16x32xf32, #tpu.memory_space<vmem>>, vector<16x32xf32>
    %c0_4 = arith.constant 0 : index
    %c0_5 = arith.constant 0 : index
    %5 = vector.load %arg4[%c0_4, %c0_5] : memref<32x96xf32, #tpu.memory_space<vmem>>, vector<32x96xf32>
    %cst = arith.constant dense<0.000000e+00> : vector<16x96xf32>
    %6 = tpu.matmul %4, %5, %cst {dimension_numbers = #tpu.dot_dimension_numbers<[1], [0], [0], [1], [0, 0, 1, 1], [], []>} : vector<16x32xf32>, vector<32x96xf32>, vector<16x96xf32> -> vector<16x96xf32>
    %7 = arith.addf %3, %6 : vector<16x96xf32>
    %c0_6 = arith.constant 0 : index
    %c0_7 = arith.constant 0 : index
    %8 = vector.load %arg7[%c0_6, %c0_7] : memref<16x96xf32, #tpu.memory_space<vmem>>, vector<16x96xf32>
    tpu.vector_store %arg7[%c0_6, %c0_7], %7 {strides = array<i32>} : memref<16x96xf32, #tpu.memory_space<vmem>>, vector<16x96xf32>,
    %c0_i32_8 = arith.constant 0 : i32
    %9 = arith.cmpi eq, %arg2, %c0_i32_8 : i32
    %10 = arith.extui %9 : i1 to i32
    %c0_i32_9 = arith.constant 0 : i32
    %11 = arith.cmpi ne, %10, %c0_i32_9 : i32
    scf.if %11 {
      %c0_10 = arith.constant 0 : index
      %c0_11 = arith.constant 0 : index
      %12 = vector.load %arg7[%c0_10, %c0_11] : memref<16x96xf32, #tpu.memory_space<vmem>>, vector<16x96xf32>
      %c0_12 = arith.constant 0 : index
      %c0_13 = arith.constant 0 : index
      %13 = vector.load %arg5[%c0_12, %c0_13] : memref<1x96xf32, #tpu.memory_space<vmem>>, vector<1x96xf32>
      %14 = vector.broadcast %13 : vector<1x96xf32> to vector<16x96xf32>
      %15 = arith.addf %12, %14 : vector<16x96xf32>
      %c0_14 = arith.constant 0 : index
      %c0_15 = arith.constant 0 : index
      %16 = vector.load %arg6[%c0_14, %c0_15] : memref<16x96xf32, #tpu.memory_space<vmem>>, vector<16x96xf32>
      tpu.vector_store %arg6[%c0_14, %c0_15], %15 {strides = array<i32>} : memref<16x96xf32, #tpu.memory_space<vmem>>, vector<16x96xf32>,
    } else {
    }
    return
  }
  func.func @transform_0(%arg0: i32, %arg1: i32, %arg2: i32) -> (i32, i32) {
    %c0_i32 = arith.constant 0 : i32
    return %arg0, %arg2 : i32, i32
  }
  func.func @transform_1(%arg0: i32, %arg1: i32, %arg2: i32) -> (i32, i32) {
    %c0_i32 = arith.constant 0 : i32
    return %arg2, %arg1 : i32, i32
  }
  func.func @transform_2(%arg0: i32, %arg1: i32, %arg2: i32) -> (i32, i32) {
    %c0_i32 = arith.constant 0 : i32
    %c0_i32_0 = arith.constant 0 : i32
    return %c0_i32, %arg1 : i32, i32
  }
  func.func @transform_3(%arg0: i32, %arg1: i32, %arg2: i32) -> (i32, i32) {
    %c0_i32 = arith.constant 0 : i32
    return %arg0, %arg1 : i32, i32
  }
}

module attributes {stable_mosaic.version = 11 : i64} {
  func.func @_attn_kernel(%arg0: i32, %arg1: i32, %arg2: i32, %arg3: memref<8x1x1x4x8xf32, #tpu.memory_space<vmem>>, %arg4: memref<8x1x1x4x8xf32, #tpu.memory_space<vmem>>, %arg5: memref<8x1x1x4x8xf32, #tpu.memory_space<vmem>>, %arg6: memref<8x1x4x8xf32, #tpu.memory_space<vmem>>, %arg7: memref<4x8x8xf32, #tpu.memory_space<vmem>>, %arg8: memref<4x8x1xf32, #tpu.memory_space<vmem>>, %arg9: memref<4x8x1xf32, #tpu.memory_space<vmem>>, %arg10: memref<8x4x8xf32, #tpu.memory_space<vmem>>) attributes {dimension_semantics = [#tpu.dimension_semantics<parallel>, #tpu.dimension_semantics<parallel>, #tpu.dimension_semantics<arbitrary>], iteration_bounds = array<i64: 2, 1, 1>, scalar_prefetch = 0 : i64, scratch_operands = 3 : i64, tpu.core_type = #tpu.core_type<tc>, window_params = [{transform_indices = @transform_0, window_bounds = array<i64: 8, 1, 1, 4, 8>}, {transform_indices = @transform_1, window_bounds = array<i64: 8, 1, 1, 4, 8>}, {transform_indices = @transform_2, window_bounds = array<i64: 8, 1, 1, 4, 8>}, {transform_indices = @transform_3, window_bounds = array<i64: 8, 1, 4, 8>}, {transform_indices = @transform_4, window_bounds = array<i64: 4, 8, 8>}]} {
    %c0_i32 = arith.constant 0 : i32
    %0 = arith.cmpi eq, %arg2, %c0_i32 : i32
    %1 = arith.extui %0 : i1 to i32
    %c0_i32_0 = arith.constant 0 : i32
    %2 = arith.cmpi ne, %1, %c0_i32_0 : i32
    scf.if %2 {
      %cst_158 = arith.constant 0xFF800000 : f32
      %170 = vector.broadcast %cst_158 : f32 to vector<4x8x1xf32>
      %c0_159 = arith.constant 0 : index
      %c0_160 = arith.constant 0 : index
      %c0_161 = arith.constant 0 : index
      %171 = vector.load %arg8[%c0_159, %c0_160, %c0_161] : memref<4x8x1xf32, #tpu.memory_space<vmem>>, vector<4x8x1xf32>
      tpu.vector_store %arg8[%c0_159, %c0_160, %c0_161], %170 {strides = array<i32>} : memref<4x8x1xf32, #tpu.memory_space<vmem>>, vector<4x8x1xf32>,
      %cst_162 = arith.constant 0.000000e+00 : f32
      %172 = vector.broadcast %cst_162 : f32 to vector<4x8x1xf32>
      %c0_163 = arith.constant 0 : index
      %c0_164 = arith.constant 0 : index
      %c0_165 = arith.constant 0 : index
      %173 = vector.load %arg9[%c0_163, %c0_164, %c0_165] : memref<4x8x1xf32, #tpu.memory_space<vmem>>, vector<4x8x1xf32>
      tpu.vector_store %arg9[%c0_163, %c0_164, %c0_165], %172 {strides = array<i32>} : memref<4x8x1xf32, #tpu.memory_space<vmem>>, vector<4x8x1xf32>,
      %cst_166 = arith.constant 0.000000e+00 : f32
      %174 = vector.broadcast %cst_166 : f32 to vector<8x4x8xf32>
      %c0_167 = arith.constant 0 : index
      %c0_168 = arith.constant 0 : index
      %c0_169 = arith.constant 0 : index
      %175 = vector.load %arg10[%c0_167, %c0_168, %c0_169] : memref<8x4x8xf32, #tpu.memory_space<vmem>>, vector<8x4x8xf32>
      tpu.vector_store %arg10[%c0_167, %c0_168, %c0_169], %174 {strides = array<i32>} : memref<8x4x8xf32, #tpu.memory_space<vmem>>, vector<8x4x8xf32>,
    } else {
    }
    %c0 = arith.constant 0 : index
    %c0_1 = arith.constant 0 : index
    %c0_2 = arith.constant 0 : index
    %c0_3 = arith.constant 0 : index
    %c0_4 = arith.constant 0 : index
    %3 = vector.load %arg3[%c0, %c0_1, %c0_2, %c0_3, %c0_4] : memref<8x1x1x4x8xf32, #tpu.memory_space<vmem>>, vector<8x1x1x1x8xf32>
    %4 = vector.shape_cast %3 : vector<8x1x1x1x8xf32> to vector<8x8xf32>
    %c0_5 = arith.constant 0 : index
    %c0_6 = arith.constant 0 : index
    %c0_7 = arith.constant 0 : index
    %c0_8 = arith.constant 0 : index
    %c0_9 = arith.constant 0 : index
    %5 = vector.load %arg4[%c0_5, %c0_6, %c0_7, %c0_8, %c0_9] : memref<8x1x1x4x8xf32, #tpu.memory_space<vmem>>, vector<8x1x1x1x8xf32>
    %6 = vector.shape_cast %5 : vector<8x1x1x1x8xf32> to vector<8x8xf32>
    %c0_10 = arith.constant 0 : index
    %c0_11 = arith.constant 0 : index
    %c0_12 = arith.constant 0 : index
    %c0_13 = arith.constant 0 : index
    %c0_14 = arith.constant 0 : index
    %7 = vector.load %arg5[%c0_10, %c0_11, %c0_12, %c0_13, %c0_14] : memref<8x1x1x4x8xf32, #tpu.memory_space<vmem>>, vector<8x1x1x1x8xf32>
    %8 = vector.shape_cast %7 : vector<8x1x1x1x8xf32> to vector<8x8xf32>
    %cst = arith.constant dense<0.000000e+00> : vector<8x8xf32>
    %9 = tpu.matmul %4, %6, %cst {dimension_numbers = #tpu.dot_dimension_numbers<[1], [1], [0], [0], [0, 0, 1, 0], [], []>} : vector<8x8xf32>, vector<8x8xf32>, vector<8x8xf32> -> vector<8x8xf32>
    %c0_15 = arith.constant 0 : index
    %c0_16 = arith.constant 0 : index
    %c0_17 = arith.constant 0 : index
    %10 = vector.load %arg7[%c0_15, %c0_16, %c0_17] : memref<4x8x8xf32, #tpu.memory_space<vmem>>, vector<1x8x8xf32>
    %11 = vector.shape_cast %10 : vector<1x8x8xf32> to vector<8x8xf32>
    %12 = vector.shape_cast %9 : vector<8x8xf32> to vector<1x8x8xf32>
    tpu.vector_store %arg7[%c0_15, %c0_16, %c0_17], %12 {strides = array<i32>} : memref<4x8x8xf32, #tpu.memory_space<vmem>>, vector<1x8x8xf32>,
    %c0_18 = arith.constant 0 : index
    %c0_19 = arith.constant 0 : index
    %c0_20 = arith.constant 0 : index
    %13 = vector.load %arg8[%c0_18, %c0_19, %c0_20] : memref<4x8x1xf32, #tpu.memory_space<vmem>>, vector<1x8x1xf32>
    %14 = vector.shape_cast %13 : vector<1x8x1xf32> to vector<8x1xf32>
    %cst_21 = arith.constant dense<0xFF800000> : vector<8xf32>
    %15 = vector.multi_reduction <maximumf>, %9, %cst_21 [1] : vector<8x8xf32> to vector<8xf32>
    %16 = vector.shape_cast %15 : vector<8xf32> to vector<8x1xf32>
    %17 = arith.maximumf %14, %16 : vector<8x1xf32>
    %18 = arith.subf %14, %17 : vector<8x1xf32>
    %19 = math.exp %18 : vector<8x1xf32>
    %20 = vector.broadcast %17 : vector<8x1xf32> to vector<8x8xf32>
    %21 = arith.subf %9, %20 : vector<8x8xf32>
    %22 = math.exp %21 : vector<8x8xf32>
    %c0_22 = arith.constant 0 : index
    %c0_23 = arith.constant 0 : index
    %c0_24 = arith.constant 0 : index
    %23 = vector.load %arg9[%c0_22, %c0_23, %c0_24] : memref<4x8x1xf32, #tpu.memory_space<vmem>>, vector<1x8x1xf32>
    %24 = vector.shape_cast %23 : vector<1x8x1xf32> to vector<8x1xf32>
    %25 = arith.mulf %19, %24 : vector<8x1xf32>
    %cst_25 = arith.constant dense<0.000000e+00> : vector<8xf32>
    %26 = vector.multi_reduction <add>, %22, %cst_25 [1] : vector<8x8xf32> to vector<8xf32>
    %27 = vector.shape_cast %26 : vector<8xf32> to vector<8x1xf32>
    %28 = arith.addf %25, %27 : vector<8x1xf32>
    %c0_26 = arith.constant 0 : index
    %c0_27 = arith.constant 0 : index
    %c0_28 = arith.constant 0 : index
    %29 = vector.load %arg9[%c0_26, %c0_27, %c0_28] : memref<4x8x1xf32, #tpu.memory_space<vmem>>, vector<1x8x1xf32>
    %30 = vector.shape_cast %29 : vector<1x8x1xf32> to vector<8x1xf32>
    %31 = vector.shape_cast %28 : vector<8x1xf32> to vector<1x8x1xf32>
    tpu.vector_store %arg9[%c0_26, %c0_27, %c0_28], %31 {strides = array<i32>} : memref<4x8x1xf32, #tpu.memory_space<vmem>>, vector<1x8x1xf32>,
    %cst_29 = arith.constant dense<0.000000e+00> : vector<8x8xf32>
    %32 = tpu.matmul %22, %8, %cst_29 {dimension_numbers = #tpu.dot_dimension_numbers<[1], [0], [0], [1], [0, 0, 1, 1], [], []>} : vector<8x8xf32>, vector<8x8xf32>, vector<8x8xf32> -> vector<8x8xf32>
    %c0_30 = arith.constant 0 : index
    %c0_31 = arith.constant 0 : index
    %c0_32 = arith.constant 0 : index
    %33 = vector.load %arg10[%c0_30, %c0_31, %c0_32] : memref<8x4x8xf32, #tpu.memory_space<vmem>>, vector<8x1x8xf32>
    %34 = vector.shape_cast %33 : vector<8x1x8xf32> to vector<8x8xf32>
    %35 = vector.broadcast %19 : vector<8x1xf32> to vector<8x8xf32>
    %36 = arith.mulf %35, %34 : vector<8x8xf32>
    %37 = arith.addf %36, %32 : vector<8x8xf32>
    %c0_33 = arith.constant 0 : index
    %c0_34 = arith.constant 0 : index
    %c0_35 = arith.constant 0 : index
    %38 = vector.load %arg10[%c0_33, %c0_34, %c0_35] : memref<8x4x8xf32, #tpu.memory_space<vmem>>, vector<8x1x8xf32>
    %39 = vector.shape_cast %38 : vector<8x1x8xf32> to vector<8x8xf32>
    %40 = vector.shape_cast %37 : vector<8x8xf32> to vector<8x1x8xf32>
    tpu.vector_store %arg10[%c0_33, %c0_34, %c0_35], %40 {strides = array<i32>} : memref<8x4x8xf32, #tpu.memory_space<vmem>>, vector<8x1x8xf32>,
    %c0_36 = arith.constant 0 : index
    %c0_37 = arith.constant 0 : index
    %c0_38 = arith.constant 0 : index
    %41 = vector.load %arg8[%c0_36, %c0_37, %c0_38] : memref<4x8x1xf32, #tpu.memory_space<vmem>>, vector<1x8x1xf32>
    %42 = vector.shape_cast %41 : vector<1x8x1xf32> to vector<8x1xf32>
    %43 = vector.shape_cast %17 : vector<8x1xf32> to vector<1x8x1xf32>
    tpu.vector_store %arg8[%c0_36, %c0_37, %c0_38], %43 {strides = array<i32>} : memref<4x8x1xf32, #tpu.memory_space<vmem>>, vector<1x8x1xf32>,
    %c0_39 = arith.constant 0 : index
    %c0_40 = arith.constant 0 : index
    %c0_41 = arith.constant 0 : index
    %c1 = arith.constant 1 : index
    %c0_42 = arith.constant 0 : index
    %44 = vector.load %arg3[%c0_39, %c0_40, %c0_41, %c1, %c0_42] : memref<8x1x1x4x8xf32, #tpu.memory_space<vmem>>, vector<8x1x1x1x8xf32>
    %45 = vector.shape_cast %44 : vector<8x1x1x1x8xf32> to vector<8x8xf32>
    %c0_43 = arith.constant 0 : index
    %c0_44 = arith.constant 0 : index
    %c0_45 = arith.constant 0 : index
    %c1_46 = arith.constant 1 : index
    %c0_47 = arith.constant 0 : index
    %46 = vector.load %arg4[%c0_43, %c0_44, %c0_45, %c1_46, %c0_47] : memref<8x1x1x4x8xf32, #tpu.memory_space<vmem>>, vector<8x1x1x1x8xf32>
    %47 = vector.shape_cast %46 : vector<8x1x1x1x8xf32> to vector<8x8xf32>
    %c0_48 = arith.constant 0 : index
    %c0_49 = arith.constant 0 : index
    %c0_50 = arith.constant 0 : index
    %c1_51 = arith.constant 1 : index
    %c0_52 = arith.constant 0 : index
    %48 = vector.load %arg5[%c0_48, %c0_49, %c0_50, %c1_51, %c0_52] : memref<8x1x1x4x8xf32, #tpu.memory_space<vmem>>, vector<8x1x1x1x8xf32>
    %49 = vector.shape_cast %48 : vector<8x1x1x1x8xf32> to vector<8x8xf32>
    %cst_53 = arith.constant dense<0.000000e+00> : vector<8x8xf32>
    %50 = tpu.matmul %45, %47, %cst_53 {dimension_numbers = #tpu.dot_dimension_numbers<[1], [1], [0], [0], [0, 0, 1, 0], [], []>} : vector<8x8xf32>, vector<8x8xf32>, vector<8x8xf32> -> vector<8x8xf32>
    %c1_54 = arith.constant 1 : index
    %c0_55 = arith.constant 0 : index
    %c0_56 = arith.constant 0 : index
    %51 = vector.load %arg7[%c1_54, %c0_55, %c0_56] : memref<4x8x8xf32, #tpu.memory_space<vmem>>, vector<1x8x8xf32>
    %52 = vector.shape_cast %51 : vector<1x8x8xf32> to vector<8x8xf32>
    %53 = vector.shape_cast %50 : vector<8x8xf32> to vector<1x8x8xf32>
    tpu.vector_store %arg7[%c1_54, %c0_55, %c0_56], %53 {strides = array<i32>} : memref<4x8x8xf32, #tpu.memory_space<vmem>>, vector<1x8x8xf32>,
    %c1_57 = arith.constant 1 : index
    %c0_58 = arith.constant 0 : index
    %c0_59 = arith.constant 0 : index
    %54 = vector.load %arg8[%c1_57, %c0_58, %c0_59] : memref<4x8x1xf32, #tpu.memory_space<vmem>>, vector<1x8x1xf32>
    %55 = vector.shape_cast %54 : vector<1x8x1xf32> to vector<8x1xf32>
    %cst_60 = arith.constant dense<0xFF800000> : vector<8xf32>
    %56 = vector.multi_reduction <maximumf>, %50, %cst_60 [1] : vector<8x8xf32> to vector<8xf32>
    %57 = vector.shape_cast %56 : vector<8xf32> to vector<8x1xf32>
    %58 = arith.maximumf %55, %57 : vector<8x1xf32>
    %59 = arith.subf %55, %58 : vector<8x1xf32>
    %60 = math.exp %59 : vector<8x1xf32>
    %61 = vector.broadcast %58 : vector<8x1xf32> to vector<8x8xf32>
    %62 = arith.subf %50, %61 : vector<8x8xf32>
    %63 = math.exp %62 : vector<8x8xf32>
    %c1_61 = arith.constant 1 : index
    %c0_62 = arith.constant 0 : index
    %c0_63 = arith.constant 0 : index
    %64 = vector.load %arg9[%c1_61, %c0_62, %c0_63] : memref<4x8x1xf32, #tpu.memory_space<vmem>>, vector<1x8x1xf32>
    %65 = vector.shape_cast %64 : vector<1x8x1xf32> to vector<8x1xf32>
    %66 = arith.mulf %60, %65 : vector<8x1xf32>
    %cst_64 = arith.constant dense<0.000000e+00> : vector<8xf32>
    %67 = vector.multi_reduction <add>, %63, %cst_64 [1] : vector<8x8xf32> to vector<8xf32>
    %68 = vector.shape_cast %67 : vector<8xf32> to vector<8x1xf32>
    %69 = arith.addf %66, %68 : vector<8x1xf32>
    %c1_65 = arith.constant 1 : index
    %c0_66 = arith.constant 0 : index
    %c0_67 = arith.constant 0 : index
    %70 = vector.load %arg9[%c1_65, %c0_66, %c0_67] : memref<4x8x1xf32, #tpu.memory_space<vmem>>, vector<1x8x1xf32>
    %71 = vector.shape_cast %70 : vector<1x8x1xf32> to vector<8x1xf32>
    %72 = vector.shape_cast %69 : vector<8x1xf32> to vector<1x8x1xf32>
    tpu.vector_store %arg9[%c1_65, %c0_66, %c0_67], %72 {strides = array<i32>} : memref<4x8x1xf32, #tpu.memory_space<vmem>>, vector<1x8x1xf32>,
    %cst_68 = arith.constant dense<0.000000e+00> : vector<8x8xf32>
    %73 = tpu.matmul %63, %49, %cst_68 {dimension_numbers = #tpu.dot_dimension_numbers<[1], [0], [0], [1], [0, 0, 1, 1], [], []>} : vector<8x8xf32>, vector<8x8xf32>, vector<8x8xf32> -> vector<8x8xf32>
    %c0_69 = arith.constant 0 : index
    %c1_70 = arith.constant 1 : index
    %c0_71 = arith.constant 0 : index
    %74 = vector.load %arg10[%c0_69, %c1_70, %c0_71] : memref<8x4x8xf32, #tpu.memory_space<vmem>>, vector<8x1x8xf32>
    %75 = vector.shape_cast %74 : vector<8x1x8xf32> to vector<8x8xf32>
    %76 = vector.broadcast %60 : vector<8x1xf32> to vector<8x8xf32>
    %77 = arith.mulf %76, %75 : vector<8x8xf32>
    %78 = arith.addf %77, %73 : vector<8x8xf32>
    %c0_72 = arith.constant 0 : index
    %c1_73 = arith.constant 1 : index
    %c0_74 = arith.constant 0 : index
    %79 = vector.load %arg10[%c0_72, %c1_73, %c0_74] : memref<8x4x8xf32, #tpu.memory_space<vmem>>, vector<8x1x8xf32>
    %80 = vector.shape_cast %79 : vector<8x1x8xf32> to vector<8x8xf32>
    %81 = vector.shape_cast %78 : vector<8x8xf32> to vector<8x1x8xf32>
    tpu.vector_store %arg10[%c0_72, %c1_73, %c0_74], %81 {strides = array<i32>} : memref<8x4x8xf32, #tpu.memory_space<vmem>>, vector<8x1x8xf32>,
    %c1_75 = arith.constant 1 : index
    %c0_76 = arith.constant 0 : index
    %c0_77 = arith.constant 0 : index
    %82 = vector.load %arg8[%c1_75, %c0_76, %c0_77] : memref<4x8x1xf32, #tpu.memory_space<vmem>>, vector<1x8x1xf32>
    %83 = vector.shape_cast %82 : vector<1x8x1xf32> to vector<8x1xf32>
    %84 = vector.shape_cast %58 : vector<8x1xf32> to vector<1x8x1xf32>
    tpu.vector_store %arg8[%c1_75, %c0_76, %c0_77], %84 {strides = array<i32>} : memref<4x8x1xf32, #tpu.memory_space<vmem>>, vector<1x8x1xf32>,
    %c0_78 = arith.constant 0 : index
    %c0_79 = arith.constant 0 : index
    %c0_80 = arith.constant 0 : index
    %c2 = arith.constant 2 : index
    %c0_81 = arith.constant 0 : index
    %85 = vector.load %arg3[%c0_78, %c0_79, %c0_80, %c2, %c0_81] : memref<8x1x1x4x8xf32, #tpu.memory_space<vmem>>, vector<8x1x1x1x8xf32>
    %86 = vector.shape_cast %85 : vector<8x1x1x1x8xf32> to vector<8x8xf32>
    %c0_82 = arith.constant 0 : index
    %c0_83 = arith.constant 0 : index
    %c0_84 = arith.constant 0 : index
    %c2_85 = arith.constant 2 : index
    %c0_86 = arith.constant 0 : index
    %87 = vector.load %arg4[%c0_82, %c0_83, %c0_84, %c2_85, %c0_86] : memref<8x1x1x4x8xf32, #tpu.memory_space<vmem>>, vector<8x1x1x1x8xf32>
    %88 = vector.shape_cast %87 : vector<8x1x1x1x8xf32> to vector<8x8xf32>
    %c0_87 = arith.constant 0 : index
    %c0_88 = arith.constant 0 : index
    %c0_89 = arith.constant 0 : index
    %c2_90 = arith.constant 2 : index
    %c0_91 = arith.constant 0 : index
    %89 = vector.load %arg5[%c0_87, %c0_88, %c0_89, %c2_90, %c0_91] : memref<8x1x1x4x8xf32, #tpu.memory_space<vmem>>, vector<8x1x1x1x8xf32>
    %90 = vector.shape_cast %89 : vector<8x1x1x1x8xf32> to vector<8x8xf32>
    %cst_92 = arith.constant dense<0.000000e+00> : vector<8x8xf32>
    %91 = tpu.matmul %86, %88, %cst_92 {dimension_numbers = #tpu.dot_dimension_numbers<[1], [1], [0], [0], [0, 0, 1, 0], [], []>} : vector<8x8xf32>, vector<8x8xf32>, vector<8x8xf32> -> vector<8x8xf32>
    %c2_93 = arith.constant 2 : index
    %c0_94 = arith.constant 0 : index
    %c0_95 = arith.constant 0 : index
    %92 = vector.load %arg7[%c2_93, %c0_94, %c0_95] : memref<4x8x8xf32, #tpu.memory_space<vmem>>, vector<1x8x8xf32>
    %93 = vector.shape_cast %92 : vector<1x8x8xf32> to vector<8x8xf32>
    %94 = vector.shape_cast %91 : vector<8x8xf32> to vector<1x8x8xf32>
    tpu.vector_store %arg7[%c2_93, %c0_94, %c0_95], %94 {strides = array<i32>} : memref<4x8x8xf32, #tpu.memory_space<vmem>>, vector<1x8x8xf32>,
    %c2_96 = arith.constant 2 : index
    %c0_97 = arith.constant 0 : index
    %c0_98 = arith.constant 0 : index
    %95 = vector.load %arg8[%c2_96, %c0_97, %c0_98] : memref<4x8x1xf32, #tpu.memory_space<vmem>>, vector<1x8x1xf32>
    %96 = vector.shape_cast %95 : vector<1x8x1xf32> to vector<8x1xf32>
    %cst_99 = arith.constant dense<0xFF800000> : vector<8xf32>
    %97 = vector.multi_reduction <maximumf>, %91, %cst_99 [1] : vector<8x8xf32> to vector<8xf32>
    %98 = vector.shape_cast %97 : vector<8xf32> to vector<8x1xf32>
    %99 = arith.maximumf %96, %98 : vector<8x1xf32>
    %100 = arith.subf %96, %99 : vector<8x1xf32>
    %101 = math.exp %100 : vector<8x1xf32>
    %102 = vector.broadcast %99 : vector<8x1xf32> to vector<8x8xf32>
    %103 = arith.subf %91, %102 : vector<8x8xf32>
    %104 = math.exp %103 : vector<8x8xf32>
    %c2_100 = arith.constant 2 : index
    %c0_101 = arith.constant 0 : index
    %c0_102 = arith.constant 0 : index
    %105 = vector.load %arg9[%c2_100, %c0_101, %c0_102] : memref<4x8x1xf32, #tpu.memory_space<vmem>>, vector<1x8x1xf32>
    %106 = vector.shape_cast %105 : vector<1x8x1xf32> to vector<8x1xf32>
    %107 = arith.mulf %101, %106 : vector<8x1xf32>
    %cst_103 = arith.constant dense<0.000000e+00> : vector<8xf32>
    %108 = vector.multi_reduction <add>, %104, %cst_103 [1] : vector<8x8xf32> to vector<8xf32>
    %109 = vector.shape_cast %108 : vector<8xf32> to vector<8x1xf32>
    %110 = arith.addf %107, %109 : vector<8x1xf32>
    %c2_104 = arith.constant 2 : index
    %c0_105 = arith.constant 0 : index
    %c0_106 = arith.constant 0 : index
    %111 = vector.load %arg9[%c2_104, %c0_105, %c0_106] : memref<4x8x1xf32, #tpu.memory_space<vmem>>, vector<1x8x1xf32>
    %112 = vector.shape_cast %111 : vector<1x8x1xf32> to vector<8x1xf32>
    %113 = vector.shape_cast %110 : vector<8x1xf32> to vector<1x8x1xf32>
    tpu.vector_store %arg9[%c2_104, %c0_105, %c0_106], %113 {strides = array<i32>} : memref<4x8x1xf32, #tpu.memory_space<vmem>>, vector<1x8x1xf32>,
    %cst_107 = arith.constant dense<0.000000e+00> : vector<8x8xf32>
    %114 = tpu.matmul %104, %90, %cst_107 {dimension_numbers = #tpu.dot_dimension_numbers<[1], [0], [0], [1], [0, 0, 1, 1], [], []>} : vector<8x8xf32>, vector<8x8xf32>, vector<8x8xf32> -> vector<8x8xf32>
    %c0_108 = arith.constant 0 : index
    %c2_109 = arith.constant 2 : index
    %c0_110 = arith.constant 0 : index
    %115 = vector.load %arg10[%c0_108, %c2_109, %c0_110] : memref<8x4x8xf32, #tpu.memory_space<vmem>>, vector<8x1x8xf32>
    %116 = vector.shape_cast %115 : vector<8x1x8xf32> to vector<8x8xf32>
    %117 = vector.broadcast %101 : vector<8x1xf32> to vector<8x8xf32>
    %118 = arith.mulf %117, %116 : vector<8x8xf32>
    %119 = arith.addf %118, %114 : vector<8x8xf32>
    %c0_111 = arith.constant 0 : index
    %c2_112 = arith.constant 2 : index
    %c0_113 = arith.constant 0 : index
    %120 = vector.load %arg10[%c0_111, %c2_112, %c0_113] : memref<8x4x8xf32, #tpu.memory_space<vmem>>, vector<8x1x8xf32>
    %121 = vector.shape_cast %120 : vector<8x1x8xf32> to vector<8x8xf32>
    %122 = vector.shape_cast %119 : vector<8x8xf32> to vector<8x1x8xf32>
    tpu.vector_store %arg10[%c0_111, %c2_112, %c0_113], %122 {strides = array<i32>} : memref<8x4x8xf32, #tpu.memory_space<vmem>>, vector<8x1x8xf32>,
    %c2_114 = arith.constant 2 : index
    %c0_115 = arith.constant 0 : index
    %c0_116 = arith.constant 0 : index
    %123 = vector.load %arg8[%c2_114, %c0_115, %c0_116] : memref<4x8x1xf32, #tpu.memory_space<vmem>>, vector<1x8x1xf32>
    %124 = vector.shape_cast %123 : vector<1x8x1xf32> to vector<8x1xf32>
    %125 = vector.shape_cast %99 : vector<8x1xf32> to vector<1x8x1xf32>
    tpu.vector_store %arg8[%c2_114, %c0_115, %c0_116], %125 {strides = array<i32>} : memref<4x8x1xf32, #tpu.memory_space<vmem>>, vector<1x8x1xf32>,
    %c0_117 = arith.constant 0 : index
    %c0_118 = arith.constant 0 : index
    %c0_119 = arith.constant 0 : index
    %c3 = arith.constant 3 : index
    %c0_120 = arith.constant 0 : index
    %126 = vector.load %arg3[%c0_117, %c0_118, %c0_119, %c3, %c0_120] : memref<8x1x1x4x8xf32, #tpu.memory_space<vmem>>, vector<8x1x1x1x8xf32>
    %127 = vector.shape_cast %126 : vector<8x1x1x1x8xf32> to vector<8x8xf32>
    %c0_121 = arith.constant 0 : index
    %c0_122 = arith.constant 0 : index
    %c0_123 = arith.constant 0 : index
    %c3_124 = arith.constant 3 : index
    %c0_125 = arith.constant 0 : index
    %128 = vector.load %arg4[%c0_121, %c0_122, %c0_123, %c3_124, %c0_125] : memref<8x1x1x4x8xf32, #tpu.memory_space<vmem>>, vector<8x1x1x1x8xf32>
    %129 = vector.shape_cast %128 : vector<8x1x1x1x8xf32> to vector<8x8xf32>
    %c0_126 = arith.constant 0 : index
    %c0_127 = arith.constant 0 : index
    %c0_128 = arith.constant 0 : index
    %c3_129 = arith.constant 3 : index
    %c0_130 = arith.constant 0 : index
    %130 = vector.load %arg5[%c0_126, %c0_127, %c0_128, %c3_129, %c0_130] : memref<8x1x1x4x8xf32, #tpu.memory_space<vmem>>, vector<8x1x1x1x8xf32>
    %131 = vector.shape_cast %130 : vector<8x1x1x1x8xf32> to vector<8x8xf32>
    %cst_131 = arith.constant dense<0.000000e+00> : vector<8x8xf32>
    %132 = tpu.matmul %127, %129, %cst_131 {dimension_numbers = #tpu.dot_dimension_numbers<[1], [1], [0], [0], [0, 0, 1, 0], [], []>} : vector<8x8xf32>, vector<8x8xf32>, vector<8x8xf32> -> vector<8x8xf32>
    %c3_132 = arith.constant 3 : index
    %c0_133 = arith.constant 0 : index
    %c0_134 = arith.constant 0 : index
    %133 = vector.load %arg7[%c3_132, %c0_133, %c0_134] : memref<4x8x8xf32, #tpu.memory_space<vmem>>, vector<1x8x8xf32>
    %134 = vector.shape_cast %133 : vector<1x8x8xf32> to vector<8x8xf32>
    %135 = vector.shape_cast %132 : vector<8x8xf32> to vector<1x8x8xf32>
    tpu.vector_store %arg7[%c3_132, %c0_133, %c0_134], %135 {strides = array<i32>} : memref<4x8x8xf32, #tpu.memory_space<vmem>>, vector<1x8x8xf32>,
    %c3_135 = arith.constant 3 : index
    %c0_136 = arith.constant 0 : index
    %c0_137 = arith.constant 0 : index
    %136 = vector.load %arg8[%c3_135, %c0_136, %c0_137] : memref<4x8x1xf32, #tpu.memory_space<vmem>>, vector<1x8x1xf32>
    %137 = vector.shape_cast %136 : vector<1x8x1xf32> to vector<8x1xf32>
    %cst_138 = arith.constant dense<0xFF800000> : vector<8xf32>
    %138 = vector.multi_reduction <maximumf>, %132, %cst_138 [1] : vector<8x8xf32> to vector<8xf32>
    %139 = vector.shape_cast %138 : vector<8xf32> to vector<8x1xf32>
    %140 = arith.maximumf %137, %139 : vector<8x1xf32>
    %141 = arith.subf %137, %140 : vector<8x1xf32>
    %142 = math.exp %141 : vector<8x1xf32>
    %143 = vector.broadcast %140 : vector<8x1xf32> to vector<8x8xf32>
    %144 = arith.subf %132, %143 : vector<8x8xf32>
    %145 = math.exp %144 : vector<8x8xf32>
    %c3_139 = arith.constant 3 : index
    %c0_140 = arith.constant 0 : index
    %c0_141 = arith.constant 0 : index
    %146 = vector.load %arg9[%c3_139, %c0_140, %c0_141] : memref<4x8x1xf32, #tpu.memory_space<vmem>>, vector<1x8x1xf32>
    %147 = vector.shape_cast %146 : vector<1x8x1xf32> to vector<8x1xf32>
    %148 = arith.mulf %142, %147 : vector<8x1xf32>
    %cst_142 = arith.constant dense<0.000000e+00> : vector<8xf32>
    %149 = vector.multi_reduction <add>, %145, %cst_142 [1] : vector<8x8xf32> to vector<8xf32>
    %150 = vector.shape_cast %149 : vector<8xf32> to vector<8x1xf32>
    %151 = arith.addf %148, %150 : vector<8x1xf32>
    %c3_143 = arith.constant 3 : index
    %c0_144 = arith.constant 0 : index
    %c0_145 = arith.constant 0 : index
    %152 = vector.load %arg9[%c3_143, %c0_144, %c0_145] : memref<4x8x1xf32, #tpu.memory_space<vmem>>, vector<1x8x1xf32>
    %153 = vector.shape_cast %152 : vector<1x8x1xf32> to vector<8x1xf32>
    %154 = vector.shape_cast %151 : vector<8x1xf32> to vector<1x8x1xf32>
    tpu.vector_store %arg9[%c3_143, %c0_144, %c0_145], %154 {strides = array<i32>} : memref<4x8x1xf32, #tpu.memory_space<vmem>>, vector<1x8x1xf32>,
    %cst_146 = arith.constant dense<0.000000e+00> : vector<8x8xf32>
    %155 = tpu.matmul %145, %131, %cst_146 {dimension_numbers = #tpu.dot_dimension_numbers<[1], [0], [0], [1], [0, 0, 1, 1], [], []>} : vector<8x8xf32>, vector<8x8xf32>, vector<8x8xf32> -> vector<8x8xf32>
    %c0_147 = arith.constant 0 : index
    %c3_148 = arith.constant 3 : index
    %c0_149 = arith.constant 0 : index
    %156 = vector.load %arg10[%c0_147, %c3_148, %c0_149] : memref<8x4x8xf32, #tpu.memory_space<vmem>>, vector<8x1x8xf32>
    %157 = vector.shape_cast %156 : vector<8x1x8xf32> to vector<8x8xf32>
    %158 = vector.broadcast %142 : vector<8x1xf32> to vector<8x8xf32>
    %159 = arith.mulf %158, %157 : vector<8x8xf32>
    %160 = arith.addf %159, %155 : vector<8x8xf32>
    %c0_150 = arith.constant 0 : index
    %c3_151 = arith.constant 3 : index
    %c0_152 = arith.constant 0 : index
    %161 = vector.load %arg10[%c0_150, %c3_151, %c0_152] : memref<8x4x8xf32, #tpu.memory_space<vmem>>, vector<8x1x8xf32>
    %162 = vector.shape_cast %161 : vector<8x1x8xf32> to vector<8x8xf32>
    %163 = vector.shape_cast %160 : vector<8x8xf32> to vector<8x1x8xf32>
    tpu.vector_store %arg10[%c0_150, %c3_151, %c0_152], %163 {strides = array<i32>} : memref<8x4x8xf32, #tpu.memory_space<vmem>>, vector<8x1x8xf32>,
    %c3_153 = arith.constant 3 : index
    %c0_154 = arith.constant 0 : index
    %c0_155 = arith.constant 0 : index
    %164 = vector.load %arg8[%c3_153, %c0_154, %c0_155] : memref<4x8x1xf32, #tpu.memory_space<vmem>>, vector<1x8x1xf32>
    %165 = vector.shape_cast %164 : vector<1x8x1xf32> to vector<8x1xf32>
    %166 = vector.shape_cast %140 : vector<8x1xf32> to vector<1x8x1xf32>
    tpu.vector_store %arg8[%c3_153, %c0_154, %c0_155], %166 {strides = array<i32>} : memref<4x8x1xf32, #tpu.memory_space<vmem>>, vector<1x8x1xf32>,
    %c0_i32_156 = arith.constant 0 : i32
    %167 = arith.cmpi eq, %arg2, %c0_i32_156 : i32
    %168 = arith.extui %167 : i1 to i32
    %c0_i32_157 = arith.constant 0 : i32
    %169 = arith.cmpi ne, %168, %c0_i32_157 : i32
    scf.if %169 {
      %c0_158 = arith.constant 0 : index
      %c0_159 = arith.constant 0 : index
      %c0_160 = arith.constant 0 : index
      %170 = vector.load %arg9[%c0_158, %c0_159, %c0_160] : memref<4x8x1xf32, #tpu.memory_space<vmem>>, vector<1x8x1xf32>
      %171 = vector.shape_cast %170 : vector<1x8x1xf32> to vector<8x1xf32>
      %172 = tpu.reciprocal %171 {approx = true} : vector<8x1xf32> -> vector<8x1xf32>
      %c0_161 = arith.constant 0 : index
      %c0_162 = arith.constant 0 : index
      %c0_163 = arith.constant 0 : index
      %173 = vector.load %arg10[%c0_161, %c0_162, %c0_163] : memref<8x4x8xf32, #tpu.memory_space<vmem>>, vector<8x1x8xf32>
      %174 = vector.shape_cast %173 : vector<8x1x8xf32> to vector<8x8xf32>
      %175 = vector.broadcast %172 : vector<8x1xf32> to vector<8x8xf32>
      %176 = arith.mulf %174, %175 : vector<8x8xf32>
      %c0_164 = arith.constant 0 : index
      %c0_165 = arith.constant 0 : index
      %c0_166 = arith.constant 0 : index
      %177 = vector.load %arg10[%c0_164, %c0_165, %c0_166] : memref<8x4x8xf32, #tpu.memory_space<vmem>>, vector<8x1x8xf32>
      %178 = vector.shape_cast %177 : vector<8x1x8xf32> to vector<8x8xf32>
      %179 = vector.shape_cast %176 : vector<8x8xf32> to vector<8x1x8xf32>
      tpu.vector_store %arg10[%c0_164, %c0_165, %c0_166], %179 {strides = array<i32>} : memref<8x4x8xf32, #tpu.memory_space<vmem>>, vector<8x1x8xf32>,
      %c1_167 = arith.constant 1 : index
      %c0_168 = arith.constant 0 : index
      %c0_169 = arith.constant 0 : index
      %180 = vector.load %arg9[%c1_167, %c0_168, %c0_169] : memref<4x8x1xf32, #tpu.memory_space<vmem>>, vector<1x8x1xf32>
      %181 = vector.shape_cast %180 : vector<1x8x1xf32> to vector<8x1xf32>
      %182 = tpu.reciprocal %181 {approx = true} : vector<8x1xf32> -> vector<8x1xf32>
      %c0_170 = arith.constant 0 : index
      %c1_171 = arith.constant 1 : index
      %c0_172 = arith.constant 0 : index
      %183 = vector.load %arg10[%c0_170, %c1_171, %c0_172] : memref<8x4x8xf32, #tpu.memory_space<vmem>>, vector<8x1x8xf32>
      %184 = vector.shape_cast %183 : vector<8x1x8xf32> to vector<8x8xf32>
      %185 = vector.broadcast %182 : vector<8x1xf32> to vector<8x8xf32>
      %186 = arith.mulf %184, %185 : vector<8x8xf32>
      %c0_173 = arith.constant 0 : index
      %c1_174 = arith.constant 1 : index
      %c0_175 = arith.constant 0 : index
      %187 = vector.load %arg10[%c0_173, %c1_174, %c0_175] : memref<8x4x8xf32, #tpu.memory_space<vmem>>, vector<8x1x8xf32>
      %188 = vector.shape_cast %187 : vector<8x1x8xf32> to vector<8x8xf32>
      %189 = vector.shape_cast %186 : vector<8x8xf32> to vector<8x1x8xf32>
      tpu.vector_store %arg10[%c0_173, %c1_174, %c0_175], %189 {strides = array<i32>} : memref<8x4x8xf32, #tpu.memory_space<vmem>>, vector<8x1x8xf32>,
      %c2_176 = arith.constant 2 : index
      %c0_177 = arith.constant 0 : index
      %c0_178 = arith.constant 0 : index
      %190 = vector.load %arg9[%c2_176, %c0_177, %c0_178] : memref<4x8x1xf32, #tpu.memory_space<vmem>>, vector<1x8x1xf32>
      %191 = vector.shape_cast %190 : vector<1x8x1xf32> to vector<8x1xf32>
      %192 = tpu.reciprocal %191 {approx = true} : vector<8x1xf32> -> vector<8x1xf32>
      %c0_179 = arith.constant 0 : index
      %c2_180 = arith.constant 2 : index
      %c0_181 = arith.constant 0 : index
      %193 = vector.load %arg10[%c0_179, %c2_180, %c0_181] : memref<8x4x8xf32, #tpu.memory_space<vmem>>, vector<8x1x8xf32>
      %194 = vector.shape_cast %193 : vector<8x1x8xf32> to vector<8x8xf32>
      %195 = vector.broadcast %192 : vector<8x1xf32> to vector<8x8xf32>
      %196 = arith.mulf %194, %195 : vector<8x8xf32>
      %c0_182 = arith.constant 0 : index
      %c2_183 = arith.constant 2 : index
      %c0_184 = arith.constant 0 : index
      %197 = vector.load %arg10[%c0_182, %c2_183, %c0_184] : memref<8x4x8xf32, #tpu.memory_space<vmem>>, vector<8x1x8xf32>
      %198 = vector.shape_cast %197 : vector<8x1x8xf32> to vector<8x8xf32>
      %199 = vector.shape_cast %196 : vector<8x8xf32> to vector<8x1x8xf32>
      tpu.vector_store %arg10[%c0_182, %c2_183, %c0_184], %199 {strides = array<i32>} : memref<8x4x8xf32, #tpu.memory_space<vmem>>, vector<8x1x8xf32>,
      %c3_185 = arith.constant 3 : index
      %c0_186 = arith.constant 0 : index
      %c0_187 = arith.constant 0 : index
      %200 = vector.load %arg9[%c3_185, %c0_186, %c0_187] : memref<4x8x1xf32, #tpu.memory_space<vmem>>, vector<1x8x1xf32>
      %201 = vector.shape_cast %200 : vector<1x8x1xf32> to vector<8x1xf32>
      %202 = tpu.reciprocal %201 {approx = true} : vector<8x1xf32> -> vector<8x1xf32>
      %c0_188 = arith.constant 0 : index
      %c3_189 = arith.constant 3 : index
      %c0_190 = arith.constant 0 : index
      %203 = vector.load %arg10[%c0_188, %c3_189, %c0_190] : memref<8x4x8xf32, #tpu.memory_space<vmem>>, vector<8x1x8xf32>
      %204 = vector.shape_cast %203 : vector<8x1x8xf32> to vector<8x8xf32>
      %205 = vector.broadcast %202 : vector<8x1xf32> to vector<8x8xf32>
      %206 = arith.mulf %204, %205 : vector<8x8xf32>
      %c0_191 = arith.constant 0 : index
      %c3_192 = arith.constant 3 : index
      %c0_193 = arith.constant 0 : index
      %207 = vector.load %arg10[%c0_191, %c3_192, %c0_193] : memref<8x4x8xf32, #tpu.memory_space<vmem>>, vector<8x1x8xf32>
      %208 = vector.shape_cast %207 : vector<8x1x8xf32> to vector<8x8xf32>
      %209 = vector.shape_cast %206 : vector<8x8xf32> to vector<8x1x8xf32>
      tpu.vector_store %arg10[%c0_191, %c3_192, %c0_193], %209 {strides = array<i32>} : memref<8x4x8xf32, #tpu.memory_space<vmem>>, vector<8x1x8xf32>,
      %c0_194 = arith.constant 0 : index
      %c0_195 = arith.constant 0 : index
      %c0_196 = arith.constant 0 : index
      %210 = vector.load %arg10[%c0_194, %c0_195, %c0_196] : memref<8x4x8xf32, #tpu.memory_space<vmem>>, vector<8x4x8xf32>
      %c0_197 = arith.constant 0 : index
      %c0_198 = arith.constant 0 : index
      %c0_199 = arith.constant 0 : index
      %c0_200 = arith.constant 0 : index
      %211 = vector.load %arg6[%c0_197, %c0_198, %c0_199, %c0_200] : memref<8x1x4x8xf32, #tpu.memory_space<vmem>>, vector<8x1x4x8xf32>
      %212 = vector.shape_cast %211 : vector<8x1x4x8xf32> to vector<8x4x8xf32>
      %213 = vector.shape_cast %210 : vector<8x4x8xf32> to vector<8x1x4x8xf32>
      tpu.vector_store %arg6[%c0_197, %c0_198, %c0_199, %c0_200], %213 {strides = array<i32>} : memref<8x1x4x8xf32, #tpu.memory_space<vmem>>, vector<8x1x4x8xf32>,
    } else {
    }
    return
  }
  func.func @transform_0(%arg0: i32, %arg1: i32, %arg2: i32) -> (i32, i32, i32, i32, i32) {
    %c0_i32 = arith.constant 0 : i32
    %c0_i32_0 = arith.constant 0 : i32
    %c0_i32_1 = arith.constant 0 : i32
    %c0_i32_2 = arith.constant 0 : i32
    return %arg1, %arg0, %c0_i32, %c0_i32_0, %c0_i32_1 : i32, i32, i32, i32, i32
  }
  func.func @transform_1(%arg0: i32, %arg1: i32, %arg2: i32) -> (i32, i32, i32, i32, i32) {
    %c1_i32 = arith.constant 1 : i32
    %c0_i32 = arith.constant 0 : i32
    %c0_i32_0 = arith.constant 0 : i32
    %c0_i32_1 = arith.constant 0 : i32
    return %arg2, %arg0, %c1_i32, %c0_i32, %c0_i32_0 : i32, i32, i32, i32, i32
  }
  func.func @transform_2(%arg0: i32, %arg1: i32, %arg2: i32) -> (i32, i32, i32, i32, i32) {
    %c2_i32 = arith.constant 2 : i32
    %c0_i32 = arith.constant 0 : i32
    %c0_i32_0 = arith.constant 0 : i32
    %c0_i32_1 = arith.constant 0 : i32
    return %arg2, %arg0, %c2_i32, %c0_i32, %c0_i32_0 : i32, i32, i32, i32, i32
  }
  func.func @transform_3(%arg0: i32, %arg1: i32, %arg2: i32) -> (i32, i32, i32, i32) {
    %c0_i32 = arith.constant 0 : i32
    %c0_i32_0 = arith.constant 0 : i32
    %c0_i32_1 = arith.constant 0 : i32
    return %arg1, %arg0, %c0_i32, %c0_i32_0 : i32, i32, i32, i32
  }
  func.func @transform_4(%arg0: i32, %arg1: i32, %arg2: i32) -> (i32, i32, i32) {
    %c0_i32 = arith.constant 0 : i32
    return %arg0, %arg1, %arg2 : i32, i32, i32
  }
}

module attributes {stable_mosaic.version = 11 : i64} {
  func.func @_matmul_bias_kernel(%arg0: i32, %arg1: i32, %arg2: i32, %arg3: memref<16x32xf32, #tpu.memory_space<vmem>>, %arg4: memref<32x32xf32, #tpu.memory_space<vmem>>, %arg5: memref<1x32xf32, #tpu.memory_space<vmem>>, %arg6: memref<16x32xf32, #tpu.memory_space<vmem>>, %arg7: memref<16x32xf32, #tpu.memory_space<vmem>>) attributes {dimension_semantics = [#tpu.dimension_semantics<parallel>, #tpu.dimension_semantics<parallel>, #tpu.dimension_semantics<arbitrary>], iteration_bounds = array<i64: 1, 1, 1>, scalar_prefetch = 0 : i64, scratch_operands = 1 : i64, tpu.core_type = #tpu.core_type<tc>, window_params = [{transform_indices = @transform_0, window_bounds = array<i64: 16, 32>}, {transform_indices = @transform_1, window_bounds = array<i64: 32, 32>}, {transform_indices = @transform_2, window_bounds = array<i64: 1, 32>}, {transform_indices = @transform_3, window_bounds = array<i64: 16, 32>}]} {
    %c0_i32 = arith.constant 0 : i32
    %0 = arith.cmpi eq, %arg2, %c0_i32 : i32
    %1 = arith.extui %0 : i1 to i32
    %c0_i32_0 = arith.constant 0 : i32
    %2 = arith.cmpi ne, %1, %c0_i32_0 : i32
    scf.if %2 {
      %cst_10 = arith.constant 0.000000e+00 : f32
      %12 = vector.broadcast %cst_10 : f32 to vector<16x32xf32>
      %c0_11 = arith.constant 0 : index
      %c0_12 = arith.constant 0 : index
      %13 = vector.load %arg7[%c0_11, %c0_12] : memref<16x32xf32, #tpu.memory_space<vmem>>, vector<16x32xf32>
      tpu.vector_store %arg7[%c0_11, %c0_12], %12 {strides = array<i32>} : memref<16x32xf32, #tpu.memory_space<vmem>>, vector<16x32xf32>,
    } else {
    }
    %c0 = arith.constant 0 : index
    %c0_1 = arith.constant 0 : index
    %3 = vector.load %arg7[%c0, %c0_1] : memref<16x32xf32, #tpu.memory_space<vmem>>, vector<16x32xf32>
    %c0_2 = arith.constant 0 : index
    %c0_3 = arith.constant 0 : index
    %4 = vector.load %arg3[%c0_2, %c0_3] : memref<16x32xf32, #tpu.memory_space<vmem>>, vector<16x32xf32>
    %c0_4 = arith.constant 0 : index
    %c0_5 = arith.constant 0 : index
    %5 = vector.load %arg4[%c0_4, %c0_5] : memref<32x32xf32, #tpu.memory_space<vmem>>, vector<32x32xf32>
    %cst = arith.constant dense<0.000000e+00> : vector<16x32xf32>
    %6 = tpu.matmul %4, %5, %cst {dimension_numbers = #tpu.dot_dimension_numbers<[1], [0], [0], [1], [0, 0, 1, 1], [], []>} : vector<16x32xf32>, vector<32x32xf32>, vector<16x32xf32> -> vector<16x32xf32>
    %7 = arith.addf %3, %6 : vector<16x32xf32>
    %c0_6 = arith.constant 0 : index
    %c0_7 = arith.constant 0 : index
    %8 = vector.load %arg7[%c0_6, %c0_7] : memref<16x32xf32, #tpu.memory_space<vmem>>, vector<16x32xf32>
    tpu.vector_store %arg7[%c0_6, %c0_7], %7 {strides = array<i32>} : memref<16x32xf32, #tpu.memory_space<vmem>>, vector<16x32xf32>,
    %c0_i32_8 = arith.constant 0 : i32
    %9 = arith.cmpi eq, %arg2, %c0_i32_8 : i32
    %10 = arith.extui %9 : i1 to i32
    %c0_i32_9 = arith.constant 0 : i32
    %11 = arith.cmpi ne, %10, %c0_i32_9 : i32
    scf.if %11 {
      %c0_10 = arith.constant 0 : index
      %c0_11 = arith.constant 0 : index
      %12 = vector.load %arg7[%c0_10, %c0_11] : memref<16x32xf32, #tpu.memory_space<vmem>>, vector<16x32xf32>
      %c0_12 = arith.constant 0 : index
      %c0_13 = arith.constant 0 : index
      %13 = vector.load %arg5[%c0_12, %c0_13] : memref<1x32xf32, #tpu.memory_space<vmem>>, vector<1x32xf32>
      %14 = vector.broadcast %13 : vector<1x32xf32> to vector<16x32xf32>
      %15 = arith.addf %12, %14 : vector<16x32xf32>
      %c0_14 = arith.constant 0 : index
      %c0_15 = arith.constant 0 : index
      %16 = vector.load %arg6[%c0_14, %c0_15] : memref<16x32xf32, #tpu.memory_space<vmem>>, vector<16x32xf32>
      tpu.vector_store %arg6[%c0_14, %c0_15], %15 {strides = array<i32>} : memref<16x32xf32, #tpu.memory_space<vmem>>, vector<16x32xf32>,
    } else {
    }
    return
  }
  func.func @transform_0(%arg0: i32, %arg1: i32, %arg2: i32) -> (i32, i32) {
    %c0_i32 = arith.constant 0 : i32
    return %arg0, %arg2 : i32, i32
  }
  func.func @transform_1(%arg0: i32, %arg1: i32, %arg2: i32) -> (i32, i32) {
    %c0_i32 = arith.constant 0 : i32
    return %arg2, %arg1 : i32, i32
  }
  func.func @transform_2(%arg0: i32, %arg1: i32, %arg2: i32) -> (i32, i32) {
    %c0_i32 = arith.constant 0 : i32
    %c0_i32_0 = arith.constant 0 : i32
    return %c0_i32, %arg1 : i32, i32
  }
  func.func @transform_3(%arg0: i32, %arg1: i32, %arg2: i32) -> (i32, i32) {
    %c0_i32 = arith.constant 0 : i32
    return %arg0, %arg1 : i32, i32
  }
}

</mosaic_0001>

<llo_original>
// kernel: path_multihead_attention.3
$region0: #{path_multihead_attention.3}
  #allocation0 [shape = 'u32[]', space=smem, size = 0x4, offset = 0x4, fixed_abs, tag = 'smem constant byte address 0x4 - core index']
  #allocation1 [shape = 'u32[72,128]{1,0:T(1,128)}', space=vmem, size = 0x9000, scoped, tag = 'internal scratch']
  #allocation2 [shape = 'f32[16,96]{1,0:T(8,128)}', space=vmem, size = 0x2000, scoped, tag = 'scratch operand']
  %s0 = inlined_call_operand.hbm [shape: f32[16,32], index: 0, kind: input, shape index: {}]
  %s1 = inlined_call_operand.hbm [shape: f32[32,96], index: 1, kind: input, shape index: {}]
  %s2 = inlined_call_operand.vmem [shape: f32[1,96], index: 2, kind: input, shape index: {}]
  %s3 = inlined_call_operand.vmem [shape: f32[16,96], index: 3, kind: output, shape index: {}]
  %s4 = sld [smem:[#allocation0]]
  $region38: #{path_multihead_attention.3} parent=0
    _
  %s6 = ssub.s32 1, %s4
  %s7 = scalar_select 0, %s6, %s4
  $region1: #{path_multihead_attention.3} parent=0
    #allocation3 [shape = 'u8[8192]{0}', space=vmem, size = 0x2000, scoped, tag = 'input window, operand 0, single buffered']
    #allocation4 [shape = 's32[1]{0}', space=sflag, size = 0x4, scoped, tag = 'scoped memory for path_multihead_attention.3']
    #allocation5 [shape = 'u8[16384]{0}', space=vmem, size = 0x4000, scoped, tag = 'input window, operand 1, single buffered']
    #allocation6 [shape = 's32[1]{0}', space=sflag, size = 0x4, scoped, tag = 'scoped memory for path_multihead_attention.3']
    %8 = vsyncpa [#allocation4], 0
    %9 = vsyncpa [#allocation6], 0
    // Predicated region
    $region2: #{path_multihead_attention.3} parent=1 // pred_check
      _
    $region3: #{path_multihead_attention.3} parent=1 // pred_check_branch
      %11 = sbr.rel (0) target = $region5
    $region4: #{path_multihead_attention.3} parent=1 // pred_region
      %13 = vsyncadd [#allocation4], 0
      %s14 = sshll.u32 %s0, 4
      %s15 = int_to_ptr.hbm [resolvable:$true] %s14
      %s16 = sshll.u32 [#allocation3], 4
      %s17 = int_to_ptr.vmem [resolvable:$true] %s16
      %22 = dma.hbm_to_vmem [thread:$0]  %s15, 256, %s17, [#allocation4], 128, 128, 8
    $region5: #{path_multihead_attention.3} parent=1 // pred_fallthru
      _
    // Predicated region
    $region6: #{path_multihead_attention.3} parent=1 // pred_check
      _
    $region7: #{path_multihead_attention.3} parent=1 // pred_check_branch
      %24 = sbr.rel (0) target = $region9
    $region8: #{path_multihead_attention.3} parent=1 // pred_region
      %26 = vsyncadd [#allocation6], 0
      %s27 = sshll.u32 %s1, 4
      %s28 = int_to_ptr.hbm [resolvable:$true] %s27
      %s29 = sshll.u32 [#allocation5], 4
      %s30 = int_to_ptr.vmem [resolvable:$true] %s29
      %35 = dma.hbm_to_vmem [thread:$0]  %s28, 512, %s30, [#allocation6], 128, 128, 8
    $region9: #{path_multihead_attention.3} parent=1 // pred_fallthru
      _
    // Predicated region
    $region10: #{path_multihead_attention.3} parent=1 // pred_check
      _
    $region11: #{path_multihead_attention.3} parent=1 // pred_check_branch
      %37 = sbr.rel (0) target = $region13
    $region12: #{path_multihead_attention.3} parent=1 // pred_region
      _
    $region13: #{path_multihead_attention.3} parent=1 // pred_fallthru
      _
    // Predicated region
    $region14: #{path_multihead_attention.3} parent=1 // pred_check
      _
    $region15: #{path_multihead_attention.3} parent=1 // pred_check_branch
      %39 = sbr.rel (0) target = $region17
    $region16: #{path_multihead_attention.3} parent=1 // pred_region
      %41 = dma.done [#allocation4], 256
    $region17: #{path_multihead_attention.3} parent=1 // pred_fallthru
      _
    // Predicated region
    $region18: #{path_multihead_attention.3} parent=1 // pred_check
      _
    $region19: #{path_multihead_attention.3} parent=1 // pred_check_branch
      %43 = sbr.rel (0) target = $region21
    $region20: #{path_multihead_attention.3} parent=1 // pred_region
      %45 = dma.done [#allocation6], 512
    $region21: #{path_multihead_attention.3} parent=1 // pred_fallthru
      _
    %p46 = scmp.eq.s32.totalorder 0, 0
    // Predicated region
    $region22: #{path_multihead_attention.3} parent=1 // pred_check
      %p47 = pneg %p46
    $region23: #{path_multihead_attention.3} parent=1 // pred_check_branch
      %49 = sbr.rel (%p47) target = $region25
    $region24: #{path_multihead_attention.3} parent=1 // pred_region
      %vm50 = vcmask 785408
      %51 = vst.msk [vmem:[#allocation2] sm:$0xff] %vm50, 0.0
      %52 = vst.msk [vmem:[#allocation2 + $0x8] sm:$0xff] %vm50, 0.0
    $region25: #{path_multihead_attention.3} parent=1 // pred_fallthru
      _
    %v53 = vld [vmem:[#allocation2] sm:$0xff]
    %v54 = vld [vmem:[#allocation2 + $0x8] sm:$0xff]
    %v55 = vld [vmem:[#allocation3] sm:$0xff]
    %v56 = vld [vmem:[#allocation3 + $0x8] sm:$0xff]
    %v57 = vld [vmem:[#allocation5] sm:$0xff]
    %v58 = vld [vmem:[#allocation5 + $0x8] sm:$0xff]
    %v59 = vld [vmem:[#allocation5 + $0x10] sm:$0xff]
    %v60 = vld [vmem:[#allocation5 + $0x18] sm:$0xff]
    %vm61 = vcmask 261120
    %v63 = vsel %vm61, %v55, 0
    %v66 = vsel %vm61, %v56, 0
    %68 = vmatpush.msra.mxu0 0.0
    %69 = vmatpush.msra.mxu0 0.0
    %70 = vmatpush.msra.mxu0 0.0
    %71 = vmatpush.msra.mxu0 0.0
    %72 = vmatpush.msra.mxu0 0.0
    %73 = vmatpush.msra.mxu0 0.0
    %74 = vmatpush.msra.mxu0 0.0
    %75 = vmatpush.msra.mxu0 0.0
    %76 = vmatpush.msra.mxu0 0.0
    %77 = vmatpush.msra.mxu0 0.0
    %78 = vmatpush.msra.mxu0 0.0
    %79 = vmatpush.msra.mxu0 0.0
    %80 = vmatpush.msra.mxu0 %v60
    %81 = vmatpush.msra.mxu0 %v59
    %82 = vmatpush.msra.mxu0 %v58
    %83 = vmatpush.msra.mxu0 %v57
    %84 = vmatmul.f32.gmra.mxu0 %v63
    %v85 = vpop.f32.mrf.mxu0
    %v86 = vadd.f32 0.0, %v85
    %87 = vmatmul.f32.gmra.mxu0 %v66
    %v88 = vpop.f32.mrf.mxu0
    %v89 = vadd.f32 0.0, %v88
    %90 = vdwg.mxu0
    %v91 = vadd.f32 %v53, %v86
    %v92 = vadd.f32 %v54, %v89
    %vm93 = vcmask 785408
    %94 = vst.msk [vmem:[#allocation2] sm:$0xff] %vm93, %v91
    %95 = vst.msk [vmem:[#allocation2 + $0x8] sm:$0xff] %vm93, %v92
    // Predicated region
    $region26: #{path_multihead_attention.3} parent=1 // pred_check
      %p96 = pneg %p46
    $region27: #{path_multihead_attention.3} parent=1 // pred_check_branch
      %98 = sbr.rel (%p96) target = $region29
    $region28: #{path_multihead_attention.3} parent=1 // pred_region
      %v99 = vld [vmem:[#allocation2] sm:$0xff]
      %v100 = vld [vmem:[#allocation2 + $0x8] sm:$0xff]
      %v101 = vld [vmem:[%s2] sm:$0x1]
      %v103 = vperm.slane %v101, 0
      %v105 = vadd.f32 %v99, %v103
      %v106 = vadd.f32 %v100, %v103
      %107 = vst.msk [vmem:[%s3] sm:$0xff] %vm93, %v105
      %108 = vst.msk [vmem:[%s3 + $0x8] sm:$0xff] %vm93, %v106
    $region29: #{path_multihead_attention.3} parent=1 // pred_fallthru
      _
    // Predicated region
    $region30: #{path_multihead_attention.3} parent=1 // pred_check
      _
    $region31: #{path_multihead_attention.3} parent=1 // pred_check_branch
      %110 = sbr.rel (0) target = $region33
    $region32: #{path_multihead_attention.3} parent=1 // pred_region
      _
    $region33: #{path_multihead_attention.3} parent=1 // pred_fallthru
      _
    // Predicated region
    $region34: #{path_multihead_attention.3} parent=1 // pred_check
      _
    $region35: #{path_multihead_attention.3} parent=1 // pred_check_branch
      %112 = sbr.rel (0) target = $region37
    $region36: #{path_multihead_attention.3} parent=1 // pred_region
      _
    $region37: #{path_multihead_attention.3} parent=1 // pred_fallthru
      _
    %113 = vsyncpa [#allocation4], 1
    %114 = vsyncpa [#allocation6], 1

// kernel: path_multihead_attention.5
$region0: #{path_multihead_attention.5}
  #allocation0 [shape = 'u32[]', space=smem, size = 0x4, offset = 0x4, fixed_abs, tag = 'smem constant byte address 0x4 - core index']
  #allocation1 [shape = 'u32[72,128]{1,0:T(1,128)}', space=vmem, size = 0x9000, scoped, tag = 'internal scratch']
  #allocation2 [shape = 'f32[16,32]{1,0:T(8,128)}', space=vmem, size = 0x2000, scoped, tag = 'scratch operand']
  %s0 = inlined_call_operand.vmem [shape: f32[16,32], index: 0, kind: input, shape index: {}]
  %s1 = inlined_call_operand.vmem [shape: f32[32,32], index: 1, kind: input, shape index: {}]
  %s2 = inlined_call_operand.vmem [shape: f32[1,32], index: 2, kind: input, shape index: {}]
  %s3 = inlined_call_operand.hbm [shape: f32[16,32], index: 3, kind: output, shape index: {}]
  %s4 = sld [smem:[#allocation0]]
  $region30: #{path_multihead_attention.5} parent=0
    _
  %s6 = ssub.s32 1, %s4
  %s7 = scalar_select 0, %s6, %s4
  $region1: #{path_multihead_attention.5} parent=0
    #allocation3 [shape = 'u8[8192]{0}', space=vmem, size = 0x2000, scoped, tag = 'output window, operand 0, single buffered']
    #allocation4 [shape = 's32[1]{0}', space=sflag, size = 0x4, scoped, tag = 'scoped memory for path_multihead_attention.5']
    %8 = vsyncpa [#allocation4], 0
    // Predicated region
    $region2: #{path_multihead_attention.5} parent=1 // pred_check
      _
    $region3: #{path_multihead_attention.5} parent=1 // pred_check_branch
      %10 = sbr.rel (0) target = $region5
    $region4: #{path_multihead_attention.5} parent=1 // pred_region
      _
    $region5: #{path_multihead_attention.5} parent=1 // pred_fallthru
      _
    // Predicated region
    $region6: #{path_multihead_attention.5} parent=1 // pred_check
      _
    $region7: #{path_multihead_attention.5} parent=1 // pred_check_branch
      %12 = sbr.rel (0) target = $region9
    $region8: #{path_multihead_attention.5} parent=1 // pred_region
      _
    $region9: #{path_multihead_attention.5} parent=1 // pred_fallthru
      _
    // Predicated region
    $region10: #{path_multihead_attention.5} parent=1 // pred_check
      _
    $region11: #{path_multihead_attention.5} parent=1 // pred_check_branch
      %14 = sbr.rel (0) target = $region13
    $region12: #{path_multihead_attention.5} parent=1 // pred_region
      _
    $region13: #{path_multihead_attention.5} parent=1 // pred_fallthru
      _
    %p15 = scmp.eq.s32.totalorder 0, 0
    // Predicated region
    $region14: #{path_multihead_attention.5} parent=1 // pred_check
      %p16 = pneg %p15
    $region15: #{path_multihead_attention.5} parent=1 // pred_check_branch
      %18 = sbr.rel (%p16) target = $region17
    $region16: #{path_multihead_attention.5} parent=1 // pred_region
      %vm19 = vcmask 261120
      %20 = vst.msk [vmem:[#allocation2] sm:$0xff] %vm19, 0.0
      %21 = vst.msk [vmem:[#allocation2 + $0x8] sm:$0xff] %vm19, 0.0
    $region17: #{path_multihead_attention.5} parent=1 // pred_fallthru
      _
    %v22 = vld [vmem:[#allocation2] sm:$0xff]
    %v23 = vld [vmem:[#allocation2 + $0x8] sm:$0xff]
    %v24 = vld [vmem:[%s0] sm:$0xff]
    %v25 = vld [vmem:[%s0 + $0x8] sm:$0xff]
    %v26 = vld [vmem:[%s1] sm:$0xff]
    %v27 = vld [vmem:[%s1 + $0x8] sm:$0xff]
    %v28 = vld [vmem:[%s1 + $0x10] sm:$0xff]
    %v29 = vld [vmem:[%s1 + $0x18] sm:$0xff]
    %vm30 = vcmask 261120
    %v32 = vsel %vm30, %v24, 0
    %v35 = vsel %vm30, %v25, 0
    %37 = vmatpush.msra.mxu0 0.0
    %38 = vmatpush.msra.mxu0 0.0
    %39 = vmatpush.msra.mxu0 0.0
    %40 = vmatpush.msra.mxu0 0.0
    %41 = vmatpush.msra.mxu0 0.0
    %42 = vmatpush.msra.mxu0 0.0
    %43 = vmatpush.msra.mxu0 0.0
    %44 = vmatpush.msra.mxu0 0.0
    %45 = vmatpush.msra.mxu0 0.0
    %46 = vmatpush.msra.mxu0 0.0
    %47 = vmatpush.msra.mxu0 0.0
    %48 = vmatpush.msra.mxu0 0.0
    %49 = vmatpush.msra.mxu0 %v29
    %50 = vmatpush.msra.mxu0 %v28
    %51 = vmatpush.msra.mxu0 %v27
    %52 = vmatpush.msra.mxu0 %v26
    %53 = vmatmul.f32.gmra.mxu0 %v32
    %v54 = vpop.f32.mrf.mxu0
    %v55 = vadd.f32 0.0, %v54
    %56 = vmatmul.f32.gmra.mxu0 %v35
    %v57 = vpop.f32.mrf.mxu0
    %v58 = vadd.f32 0.0, %v57
    %59 = vdwg.mxu0
    %v60 = vadd.f32 %v22, %v55
    %v61 = vadd.f32 %v23, %v58
    %62 = vst.msk [vmem:[#allocation2] sm:$0xff] %vm30, %v60
    %63 = vst.msk [vmem:[#allocation2 + $0x8] sm:$0xff] %vm30, %v61
    // Predicated region
    $region18: #{path_multihead_attention.5} parent=1 // pred_check
      %p64 = pneg %p15
    $region19: #{path_multihead_attention.5} parent=1 // pred_check_branch
      %66 = sbr.rel (%p64) target = $region21
    $region20: #{path_multihead_attention.5} parent=1 // pred_region
      %v67 = vld [vmem:[#allocation2] sm:$0xff]
      %v68 = vld [vmem:[#allocation2 + $0x8] sm:$0xff]
      %v69 = vld [vmem:[%s2] sm:$0x1]
      %v71 = vperm.slane %v69, 0
      %v73 = vadd.f32 %v67, %v71
      %v74 = vadd.f32 %v68, %v71
      %75 = vst.msk [vmem:[#allocation3] sm:$0xff] %vm30, %v73
      %76 = vst.msk [vmem:[#allocation3 + $0x8] sm:$0xff] %vm30, %v74
    $region21: #{path_multihead_attention.5} parent=1 // pred_fallthru
      _
    // Predicated region
    $region22: #{path_multihead_attention.5} parent=1 // pred_check
      _
    $region23: #{path_multihead_attention.5} parent=1 // pred_check_branch
      %78 = sbr.rel (0) target = $region25
    $region24: #{path_multihead_attention.5} parent=1 // pred_region
      %80 = vsyncadd [#allocation4], 0
      %s81 = sshll.u32 [#allocation3], 4
      %s82 = int_to_ptr.vmem [resolvable:$true] %s81
      %s83 = sshll.u32 %s3, 4
      %s84 = int_to_ptr.hbm [resolvable:$true] %s83
      %89 = dma.vmem_to_hbm [thread:$0]  %s82, 256, %s84, [#allocation4], 128, 128, 8
    $region25: #{path_multihead_attention.5} parent=1 // pred_fallthru
      _
    // Predicated region
    $region26: #{path_multihead_attention.5} parent=1 // pred_check
      _
    $region27: #{path_multihead_attention.5} parent=1 // pred_check_branch
      %91 = sbr.rel (0) target = $region29
    $region28: #{path_multihead_attention.5} parent=1 // pred_region
      %93 = dma.done [#allocation4], 256
    $region29: #{path_multihead_attention.5} parent=1 // pred_fallthru
      _
    %94 = vsyncpa [#allocation4], 1

// kernel: path_multihead_attention.4
$region0: #{path_multihead_attention.4}
  #allocation0 [shape = 'u32[]', space=smem, size = 0x4, offset = 0x4, fixed_abs, tag = 'smem constant byte address 0x4 - core index']
  #allocation1 [shape = 'u32[72,128]{1,0:T(1,128)}', space=vmem, size = 0x9000, scoped, tag = 'internal scratch']
  #allocation2 [shape = 'f32[4,8,1]{2,1,0:T(8,128)}', space=vmem, size = 0x4000, scoped, tag = 'scratch operand']
  #allocation3 [shape = 'f32[4,8,1]{2,1,0:T(8,128)}', space=vmem, size = 0x4000, scoped, tag = 'scratch operand']
  #allocation4 [shape = 'f32[8,4,8]{2,1,0:T(4,128)}', space=vmem, size = 0x4000, scoped, tag = 'scratch operand']
  %s0 = inlined_call_operand.vmem [shape: f32[8,2,3,4,8], index: 0, kind: input, shape index: {}, may-alias: {0,1,2}]
  %s1 = inlined_call_operand.vmem [shape: f32[8,2,3,4,8], index: 1, kind: input, shape index: {}, may-alias: {0,1,2}]
  %s2 = inlined_call_operand.vmem [shape: f32[8,2,3,4,8], index: 2, kind: input, shape index: {}, may-alias: {0,1,2}]
  %s3 = inlined_call_operand.vmem [shape: f32[8,2,4,8], index: 3, kind: output, shape index: {0}]
  %s4 = inlined_call_operand.hbm [shape: f32[8,8,8], index: 4, kind: output, shape index: {1}]
  %5 = xla_tuple %s3, %s4
  %s6 = sld [smem:[#allocation0]]
  $region221: #{path_multihead_attention.4} parent=0
    _
  %s8 = ssub.s32 1, %s6
  %s9 = scalar_select 0, %s8, %s6
  $region1: #{path_multihead_attention.4} parent=0
    #allocation5 [shape = 'u8[32768]{0}', space=vmem, size = 0x8000, scoped, tag = 'input window, operand 0']
    #allocation6 [shape = 'u8[32768]{0}', space=vmem, size = 0x8000, scoped, tag = 'input window, operand 1']
    #allocation7 [shape = 'u8[32768]{0}', space=vmem, size = 0x8000, scoped, tag = 'input window, operand 2']
    #allocation8 [shape = 'u8[32768]{0}', space=vmem, size = 0x8000, scoped, tag = 'output window, operand 0']
    #allocation9 [shape = 'u8[32768]{0}', space=vmem, size = 0x8000, scoped, tag = 'output window, operand 1']
    #allocation10 [shape = 's32[2]{0}', space=sflag, size = 0x8, scoped, tag = 'scoped memory for path_multihead_attention.4']
    %10 = vsyncpa [#allocation10], 0
    %s11 = scalar_lea.sflag [#allocation10], 1
    %12 = vsyncpa %s11, 0
    loop: start=0, step=1, limit=4
    $region2: #{path_multihead_attention.4} parent=1 // loop_pre_header
      _
    $region3: #{path_multihead_attention.4} parent=1 // loop_header
      %s14 = sphi 0, %s18
      %p15 = scmp.ge.s32.totalorder %s14, 4
      %s21 = sphi 0, %s40
      %s22 = sphi 0, %s36
      %s23 = sphi 0, %s32
      %s24 = sphi 0, %s21
      %s25 = sphi 0, %s22
      %s26 = sphi 0, %s23
      %s27 = sphi 0, %s24
      %s28 = sphi 0, %s25
      %s29 = sphi 0, %s26
      %s45 = sphi 0, %s47
      %s48 = sphi 0, %s45
      %s49 = sphi 0, %s48
      %s65 = sphi 0, %s49
      %s73 = sphi 0, %s75
      %s76 = sphi 0, %s73
      %s77 = sphi 0, %s76
      %s93 = sphi 0, %s77
      %s101 = sphi 0, %s103
      %s104 = sphi 0, %s101
      %s105 = sphi 0, %s104
      %s121 = sphi 0, %s105
      %s129 = sphi 0, %s131
      %s132 = sphi 0, %s129
      %s133 = sphi 0, %s132
      %s149 = sphi 0, %s133
      %s159 = sphi 0, %s161
      %s162 = sphi 0, %s159
      %s163 = sphi 0, %s162
      %s179 = sphi 0, %s163
    $region4: #{path_multihead_attention.4} parent=1 // loop_header_branch
      %17 = sbr.rel (%p15) target = $region8
    $region5: #{path_multihead_attention.4} parent=1 // loop_body
      %s19 = ssub.s32 %s14, 1
      %s20 = ssub.s32 %s14, 2
      %s30 = sadd.s32 1, %s23
      %p31 = scmp.ge.s32.totalorder %s30, 1
      %s32 = scalar_select %p31, 0, %s30
      %s33 = sadd.s32 1, %s22
      %s34 = scalar_select %p31, %s33, %s22
      %p35 = scmp.ge.s32.totalorder %s34, 1
      %s36 = scalar_select %p35, 0, %s34
      %s37 = sadd.s32 1, %s21
      %s38 = scalar_select %p35, %s37, %s21
      %p39 = scmp.ge.s32.totalorder %s38, 2
      %s40 = scalar_select %p39, 0, %s38
      %s41 = ssub.s32 %s22, %s36
      %s42 = ssub.s32 %s21, %s40
      %s43 = sor.u32 %s41, %s42
      %p44 = scmp.eq.s32.totalorder %s43, 0
      %s46 = sadd.s32 %s45, 1
      %s47 = scalar_select %p44, %s45, %s46
      %p50 = pneg %p44
      %p51 = scmp.eq.s32.totalorder %s14, 1
      %p52 = por %p50, %p51
      %p53 = scmp.ne.s32.totalorder %s45, %s48
      %p54 = scmp.eq.s32.totalorder %s14, 0
      %p55 = por %p53, %p54
      %p56 = scmp.ne.s32.totalorder %s45, %s48
      %p57 = scmp.eq.s32.totalorder %s19, 1
      %p58 = por %p56, %p57
      %p59 = scmp.ne.s32.totalorder %s48, %s49
      %p60 = scmp.eq.s32.totalorder %s19, 0
      %p61 = por %p59, %p60
      %p62 = scmp.ne.s32.totalorder %s48, %s49
      %p63 = scmp.eq.s32.totalorder %s20, 1
      %p64 = por %p62, %p63
      %p66 = scmp.ne.s32.totalorder %s49, %s65
      %p67 = scmp.eq.s32.totalorder %s20, 0
      %p68 = por %p66, %p67
      %s69 = ssub.s32 %s23, %s32
      %s70 = ssub.s32 %s21, %s40
      %s71 = sor.u32 %s69, %s70
      %p72 = scmp.eq.s32.totalorder %s71, 0
      %s74 = sadd.s32 %s73, 1
      %s75 = scalar_select %p72, %s73, %s74
      %p78 = pneg %p72
      %p79 = scmp.eq.s32.totalorder %s14, 1
      %p80 = por %p78, %p79
      %p81 = scmp.ne.s32.totalorder %s73, %s76
      %p82 = scmp.eq.s32.totalorder %s14, 0
      %p83 = por %p81, %p82
      %p84 = scmp.ne.s32.totalorder %s73, %s76
      %p85 = scmp.eq.s32.totalorder %s19, 1
      %p86 = por %p84, %p85
      %p87 = scmp.ne.s32.totalorder %s76, %s77
      %p88 = scmp.eq.s32.totalorder %s19, 0
      %p89 = por %p87, %p88
      %p90 = scmp.ne.s32.totalorder %s76, %s77
      %p91 = scmp.eq.s32.totalorder %s20, 1
      %p92 = por %p90, %p91
      %p94 = scmp.ne.s32.totalorder %s77, %s93
      %p95 = scmp.eq.s32.totalorder %s20, 0
      %p96 = por %p94, %p95
      %s97 = ssub.s32 %s23, %s32
      %s98 = ssub.s32 %s21, %s40
      %s99 = sor.u32 %s97, %s98
      %p100 = scmp.eq.s32.totalorder %s99, 0
      %s102 = sadd.s32 %s101, 1
      %s103 = scalar_select %p100, %s101, %s102
      %p106 = pneg %p100
      %p107 = scmp.eq.s32.totalorder %s14, 1
      %p108 = por %p106, %p107
      %p109 = scmp.ne.s32.totalorder %s101, %s104
      %p110 = scmp.eq.s32.totalorder %s14, 0
      %p111 = por %p109, %p110
      %p112 = scmp.ne.s32.totalorder %s101, %s104
      %p113 = scmp.eq.s32.totalorder %s19, 1
      %p114 = por %p112, %p113
      %p115 = scmp.ne.s32.totalorder %s104, %s105
      %p116 = scmp.eq.s32.totalorder %s19, 0
      %p117 = por %p115, %p116
      %p118 = scmp.ne.s32.totalorder %s104, %s105
      %p119 = scmp.eq.s32.totalorder %s20, 1
      %p120 = por %p118, %p119
      %p122 = scmp.ne.s32.totalorder %s105, %s121
      %p123 = scmp.eq.s32.totalorder %s20, 0
      %p124 = por %p122, %p123
      %s125 = ssub.s32 %s22, %s36
      %s126 = ssub.s32 %s21, %s40
      %s127 = sor.u32 %s125, %s126
      %p128 = scmp.eq.s32.totalorder %s127, 0
      %s130 = sadd.s32 %s129, 1
      %s131 = scalar_select %p128, %s129, %s130
      %p134 = pneg %p128
      %p135 = scmp.eq.s32.totalorder %s14, 1
      %p136 = por %p134, %p135
      %p137 = scmp.ne.s32.totalorder %s129, %s132
      %p138 = scmp.eq.s32.totalorder %s14, 0
      %p139 = por %p137, %p138
      %p140 = scmp.ne.s32.totalorder %s129, %s132
      %p141 = scmp.eq.s32.totalorder %s19, 1
      %p142 = por %p140, %p141
      %p143 = scmp.ne.s32.totalorder %s132, %s133
      %p144 = scmp.eq.s32.totalorder %s19, 0
      %p145 = por %p143, %p144
      %p146 = scmp.ne.s32.totalorder %s132, %s133
      %p147 = scmp.eq.s32.totalorder %s20, 1
      %p148 = por %p146, %p147
      %p150 = scmp.ne.s32.totalorder %s133, %s149
      %p151 = scmp.eq.s32.totalorder %s20, 0
      %p152 = por %p150, %p151
      %s153 = ssub.s32 %s21, %s40
      %s154 = ssub.s32 %s22, %s36
      %s155 = sor.u32 %s153, %s154
      %s156 = ssub.s32 %s23, %s32
      %s157 = sor.u32 %s155, %s156
      %p158 = scmp.eq.s32.totalorder %s157, 0
      %s160 = sadd.s32 %s159, 1
      %s161 = scalar_select %p158, %s159, %s160
      %p164 = pneg %p158
      %p165 = scmp.eq.s32.totalorder %s14, 1
      %p166 = por %p164, %p165
      %p167 = scmp.ne.s32.totalorder %s159, %s162
      %p168 = scmp.eq.s32.totalorder %s14, 0
      %p169 = por %p167, %p168
      %p170 = scmp.ne.s32.totalorder %s159, %s162
      %p171 = scmp.eq.s32.totalorder %s19, 1
      %p172 = por %p170, %p171
      %p173 = scmp.ne.s32.totalorder %s162, %s163
      %p174 = scmp.eq.s32.totalorder %s19, 0
      %p175 = por %p173, %p174
      %p176 = scmp.ne.s32.totalorder %s162, %s163
      %p177 = scmp.eq.s32.totalorder %s20, 1
      %p178 = por %p176, %p177
      %p180 = scmp.ne.s32.totalorder %s163, %s179
      %p181 = scmp.eq.s32.totalorder %s20, 0
      %p182 = por %p180, %p181
      %p183 = scmp.le.s32.totalorder 1, %s14
      %p184 = scmp.lt.s32.totalorder %s14, 3
      %p185 = pnand %p183, %p184
      %p186 = pneg %p185
      // Predicated region
      $region9: #{path_multihead_attention.4} parent=5 // pred_check
        _
      $region10: #{path_multihead_attention.4} parent=5 // pred_check_branch
        %188 = sbr.rel (%p185) target = $region12
      $region11: #{path_multihead_attention.4} parent=5 // pred_region
        %s189 = ssub.s32 %s14, 1
      $region12: #{path_multihead_attention.4} parent=5 // pred_fallthru
        _
      %p190 = scmp.lt.s32.totalorder %s14, 2
      // Predicated region
      $region13: #{path_multihead_attention.4} parent=5 // pred_check
        %p191 = pneg %p190
      $region14: #{path_multihead_attention.4} parent=5 // pred_check_branch
        %193 = sbr.rel (%p191) target = $region16
      $region15: #{path_multihead_attention.4} parent=5 // pred_region
        // Predicated region
        $region17: #{path_multihead_attention.4} parent=15 // pred_check
          %p194 = pneg %p55
        $region18: #{path_multihead_attention.4} parent=15 // pred_check_branch
          %196 = sbr.rel (%p194) target = $region20
        $region19: #{path_multihead_attention.4} parent=15 // pred_region
          %s197 = sand.u32 %s45, 1
          %s198 = sand.u32 %s45, 1
          %s199 = smul.addr %s198, 32
          %s200 = scalar_lea.vmem [#allocation5], %s199
          %s201 = smul.u32 8, %s22
          %s202 = smul.addr %s21, 3
          %s203 = smul.addr %s201, 6
          %s204 = sadd.s32 %s202, %s203
          %s205 = smul.addr %s204, 4
          %s206 = scalar_lea.vmem %s0, %s205
          // Predicated region
          $region21: #{path_multihead_attention.4} parent=19 // pred_check
            _
          $region22: #{path_multihead_attention.4} parent=19 // pred_check_branch
            %208 = sbr.rel (0) target = $region24
          $region23: #{path_multihead_attention.4} parent=19 // pred_region
            // Predicated region
            $region25: #{path_multihead_attention.4} parent=23 // pred_check
              _
            $region26: #{path_multihead_attention.4} parent=23 // pred_check_branch
              %210 = sbr.rel target = $region28
            $region27: #{path_multihead_attention.4} parent=23 // pred_region
              // Predicated region
              $region40: #{path_multihead_attention.4} parent=27 // pred_check
                _
              $region41: #{path_multihead_attention.4} parent=27 // pred_check_branch
                %240 = sbr.rel (0) target = $region43
              $region42: #{path_multihead_attention.4} parent=27 // pred_region
                loop: start=0, step=1, limit=1
                $region44: #{path_multihead_attention.4} parent=42 // loop_pre_header
                  _
                $region45: #{path_multihead_attention.4} parent=42 // loop_header
                  %s242 = sphi 0, %s246
                  %p243 = scmp.ge.s32.totalorder %s242, 1
                  %s247 = sphi %s206, %s206
                  %s248 = sphi %s200, %s200
                $region46: #{path_multihead_attention.4} parent=42 // loop_header_branch
                  %245 = sbr.rel (%p243) target = $region50
                $region47: #{path_multihead_attention.4} parent=42 // loop_body
                  _
                $region48: #{path_multihead_attention.4} parent=42 // loop_footer
                  %s246 = sadd.s32 1, %s242
                $region49: #{path_multihead_attention.4} parent=42 // loop_footer_branch
                  %241 = sbr.rel target = $region45
                $region50: #{path_multihead_attention.4} parent=42 // loop_exit
                  _
                %s250 = ssub.s32 16, 1
                loop: start=0, step=1, limit=1
                $region51: #{path_multihead_attention.4} parent=42 // loop_pre_header
                  _
                $region52: #{path_multihead_attention.4} parent=42 // loop_header
                  %s252 = sphi 0, %s256
                  %p253 = scmp.ge.s32.totalorder %s252, 1
                  %s257 = sphi %s206, %s206
                  %s258 = sphi %s200, %s200
                $region53: #{path_multihead_attention.4} parent=42 // loop_header_branch
                  %255 = sbr.rel (%p253) target = $region57
                $region54: #{path_multihead_attention.4} parent=42 // loop_body
                  %v259 = vld [vmem:[%s257] sm:%s250]
                  %260 = vst [vmem:[%s258] sm:%s250] %v259
                  %v261 = vld [vmem:[%s257 + $0x18] sm:%s250]
                  %262 = vst [vmem:[%s258 + $0x4] sm:%s250] %v261
                  %v263 = vld [vmem:[%s257 + $0x30] sm:%s250]
                  %264 = vst [vmem:[%s258 + $0x8] sm:%s250] %v263
                  %v265 = vld [vmem:[%s257 + $0x48] sm:%s250]
                  %266 = vst [vmem:[%s258 + $0xc] sm:%s250] %v265
                  %v267 = vld [vmem:[%s257 + $0x60] sm:%s250]
                  %268 = vst [vmem:[%s258 + $0x10] sm:%s250] %v267
                  %v269 = vld [vmem:[%s257 + $0x78] sm:%s250]
                  %270 = vst [vmem:[%s258 + $0x14] sm:%s250] %v269
                  %v271 = vld [vmem:[%s257 + $0x90] sm:%s250]
                  %272 = vst [vmem:[%s258 + $0x18] sm:%s250] %v271
                  %v273 = vld [vmem:[%s257 + $0xa8] sm:%s250]
                  %274 = vst [vmem:[%s258 + $0x1c] sm:%s250] %v273
                $region55: #{path_multihead_attention.4} parent=42 // loop_footer
                  %s256 = sadd.s32 1, %s252
                $region56: #{path_multihead_attention.4} parent=42 // loop_footer_branch
                  %251 = sbr.rel target = $region52
                $region57: #{path_multihead_attention.4} parent=42 // loop_exit
                  _
              $region43: #{path_multihead_attention.4} parent=27 // pred_fallthru
                _
            $region28: #{path_multihead_attention.4} parent=23 // pred_fallthru
              _
            // Predicated region
            $region29: #{path_multihead_attention.4} parent=23 // pred_check
              _
            $region30: #{path_multihead_attention.4} parent=23 // pred_check_branch
              %212 = sbr.rel (0) target = $region32
            $region31: #{path_multihead_attention.4} parent=23 // pred_region
              %s214 = ssub.s32 16, 1
              loop: start=0, step=1, limit=1
              $region33: #{path_multihead_attention.4} parent=31 // loop_pre_header
                _
              $region34: #{path_multihead_attention.4} parent=31 // loop_header
                %s216 = sphi 0, %s220
                %p217 = scmp.ge.s32.totalorder %s216, 1
                %s221 = sphi %s206, %s206
                %s222 = sphi %s200, %s200
              $region35: #{path_multihead_attention.4} parent=31 // loop_header_branch
                %219 = sbr.rel (%p217) target = $region39
              $region36: #{path_multihead_attention.4} parent=31 // loop_body
                %v223 = vld [vmem:[%s221] sm:%s214]
                %224 = vst [vmem:[%s222] sm:%s214] %v223
                %v225 = vld [vmem:[%s221 + $0x18] sm:%s214]
                %226 = vst [vmem:[%s222 + $0x4] sm:%s214] %v225
                %v227 = vld [vmem:[%s221 + $0x30] sm:%s214]
                %228 = vst [vmem:[%s222 + $0x8] sm:%s214] %v227
                %v229 = vld [vmem:[%s221 + $0x48] sm:%s214]
                %230 = vst [vmem:[%s222 + $0xc] sm:%s214] %v229
                %v231 = vld [vmem:[%s221 + $0x60] sm:%s214]
                %232 = vst [vmem:[%s222 + $0x10] sm:%s214] %v231
                %v233 = vld [vmem:[%s221 + $0x78] sm:%s214]
                %234 = vst [vmem:[%s222 + $0x14] sm:%s214] %v233
                %v235 = vld [vmem:[%s221 + $0x90] sm:%s214]
                %236 = vst [vmem:[%s222 + $0x18] sm:%s214] %v235
                %v237 = vld [vmem:[%s221 + $0xa8] sm:%s214]
                %238 = vst [vmem:[%s222 + $0x1c] sm:%s214] %v237
              $region37: #{path_multihead_attention.4} parent=31 // loop_footer
                %s220 = sadd.s32 1, %s216
              $region38: #{path_multihead_attention.4} parent=31 // loop_footer_branch
                %215 = sbr.rel target = $region34
              $region39: #{path_multihead_attention.4} parent=31 // loop_exit
                _
            $region32: #{path_multihead_attention.4} parent=23 // pred_fallthru
              _
          $region24: #{path_multihead_attention.4} parent=19 // pred_fallthru
            _
          %275 = vnop
        $region20: #{path_multihead_attention.4} parent=15 // pred_fallthru
          _
        // Predicated region
        $region58: #{path_multihead_attention.4} parent=15 // pred_check
          %p276 = pneg %p83
        $region59: #{path_multihead_attention.4} parent=15 // pred_check_branch
          %278 = sbr.rel (%p276) target = $region61
        $region60: #{path_multihead_attention.4} parent=15 // pred_region
          %s279 = sand.u32 %s73, 1
          %s280 = sand.u32 %s73, 1
          %s281 = smul.addr %s280, 32
          %s282 = scalar_lea.vmem [#allocation6], %s281
          %s283 = smul.u32 8, %s23
          %s284 = smul.addr %s21, 3
          %s285 = sadd.s32 1, %s284
          %s286 = smul.addr %s283, 6
          %s287 = sadd.s32 %s285, %s286
          %s288 = smul.addr %s287, 4
          %s289 = scalar_lea.vmem %s1, %s288
          // Predicated region
          $region62: #{path_multihead_attention.4} parent=60 // pred_check
            _
          $region63: #{path_multihead_attention.4} parent=60 // pred_check_branch
            %291 = sbr.rel (0) target = $region65
          $region64: #{path_multihead_attention.4} parent=60 // pred_region
            // Predicated region
            $region66: #{path_multihead_attention.4} parent=64 // pred_check
              _
            $region67: #{path_multihead_attention.4} parent=64 // pred_check_branch
              %293 = sbr.rel target = $region69
            $region68: #{path_multihead_attention.4} parent=64 // pred_region
              // Predicated region
              $region81: #{path_multihead_attention.4} parent=68 // pred_check
                _
              $region82: #{path_multihead_attention.4} parent=68 // pred_check_branch
                %323 = sbr.rel (0) target = $region84
              $region83: #{path_multihead_attention.4} parent=68 // pred_region
                loop: start=0, step=1, limit=1
                $region85: #{path_multihead_attention.4} parent=83 // loop_pre_header
                  _
                $region86: #{path_multihead_attention.4} parent=83 // loop_header
                  %s325 = sphi 0, %s329
                  %p326 = scmp.ge.s32.totalorder %s325, 1
                  %s330 = sphi %s289, %s289
                  %s331 = sphi %s282, %s282
                $region87: #{path_multihead_attention.4} parent=83 // loop_header_branch
                  %328 = sbr.rel (%p326) target = $region91
                $region88: #{path_multihead_attention.4} parent=83 // loop_body
                  _
                $region89: #{path_multihead_attention.4} parent=83 // loop_footer
                  %s329 = sadd.s32 1, %s325
                $region90: #{path_multihead_attention.4} parent=83 // loop_footer_branch
                  %324 = sbr.rel target = $region86
                $region91: #{path_multihead_attention.4} parent=83 // loop_exit
                  _
                %s333 = ssub.s32 16, 1
                loop: start=0, step=1, limit=1
                $region92: #{path_multihead_attention.4} parent=83 // loop_pre_header
                  _
                $region93: #{path_multihead_attention.4} parent=83 // loop_header
                  %s335 = sphi 0, %s339
                  %p336 = scmp.ge.s32.totalorder %s335, 1
                  %s340 = sphi %s289, %s289
                  %s341 = sphi %s282, %s282
                $region94: #{path_multihead_attention.4} parent=83 // loop_header_branch
                  %338 = sbr.rel (%p336) target = $region98
                $region95: #{path_multihead_attention.4} parent=83 // loop_body
                  %v342 = vld [vmem:[%s340] sm:%s333]
                  %343 = vst [vmem:[%s341] sm:%s333] %v342
                  %v344 = vld [vmem:[%s340 + $0x18] sm:%s333]
                  %345 = vst [vmem:[%s341 + $0x4] sm:%s333] %v344
                  %v346 = vld [vmem:[%s340 + $0x30] sm:%s333]
                  %347 = vst [vmem:[%s341 + $0x8] sm:%s333] %v346
                  %v348 = vld [vmem:[%s340 + $0x48] sm:%s333]
                  %349 = vst [vmem:[%s341 + $0xc] sm:%s333] %v348
                  %v350 = vld [vmem:[%s340 + $0x60] sm:%s333]
                  %351 = vst [vmem:[%s341 + $0x10] sm:%s333] %v350
                  %v352 = vld [vmem:[%s340 + $0x78] sm:%s333]
                  %353 = vst [vmem:[%s341 + $0x14] sm:%s333] %v352
                  %v354 = vld [vmem:[%s340 + $0x90] sm:%s333]
                  %355 = vst [vmem:[%s341 + $0x18] sm:%s333] %v354
                  %v356 = vld [vmem:[%s340 + $0xa8] sm:%s333]
                  %357 = vst [vmem:[%s341 + $0x1c] sm:%s333] %v356
                $region96: #{path_multihead_attention.4} parent=83 // loop_footer
                  %s339 = sadd.s32 1, %s335
                $region97: #{path_multihead_attention.4} parent=83 // loop_footer_branch
                  %334 = sbr.rel target = $region93
                $region98: #{path_multihead_attention.4} parent=83 // loop_exit
                  _
              $region84: #{path_multihead_attention.4} parent=68 // pred_fallthru
                _
            $region69: #{path_multihead_attention.4} parent=64 // pred_fallthru
              _
            // Predicated region
            $region70: #{path_multihead_attention.4} parent=64 // pred_check
              _
            $region71: #{path_multihead_attention.4} parent=64 // pred_check_branch
              %295 = sbr.rel (0) target = $region73
            $region72: #{path_multihead_attention.4} parent=64 // pred_region
              %s297 = ssub.s32 16, 1
              loop: start=0, step=1, limit=1
              $region74: #{path_multihead_attention.4} parent=72 // loop_pre_header
                _
              $region75: #{path_multihead_attention.4} parent=72 // loop_header
                %s299 = sphi 0, %s303
                %p300 = scmp.ge.s32.totalorder %s299, 1
                %s304 = sphi %s289, %s289
                %s305 = sphi %s282, %s282
              $region76: #{path_multihead_attention.4} parent=72 // loop_header_branch
                %302 = sbr.rel (%p300) target = $region80
              $region77: #{path_multihead_attention.4} parent=72 // loop_body
                %v306 = vld [vmem:[%s304] sm:%s297]
                %307 = vst [vmem:[%s305] sm:%s297] %v306
                %v308 = vld [vmem:[%s304 + $0x18] sm:%s297]
                %309 = vst [vmem:[%s305 + $0x4] sm:%s297] %v308
                %v310 = vld [vmem:[%s304 + $0x30] sm:%s297]
                %311 = vst [vmem:[%s305 + $0x8] sm:%s297] %v310
                %v312 = vld [vmem:[%s304 + $0x48] sm:%s297]
                %313 = vst [vmem:[%s305 + $0xc] sm:%s297] %v312
                %v314 = vld [vmem:[%s304 + $0x60] sm:%s297]
                %315 = vst [vmem:[%s305 + $0x10] sm:%s297] %v314
                %v316 = vld [vmem:[%s304 + $0x78] sm:%s297]
                %317 = vst [vmem:[%s305 + $0x14] sm:%s297] %v316
                %v318 = vld [vmem:[%s304 + $0x90] sm:%s297]
                %319 = vst [vmem:[%s305 + $0x18] sm:%s297] %v318
                %v320 = vld [vmem:[%s304 + $0xa8] sm:%s297]
                %321 = vst [vmem:[%s305 + $0x1c] sm:%s297] %v320
              $region78: #{path_multihead_attention.4} parent=72 // loop_footer
                %s303 = sadd.s32 1, %s299
              $region79: #{path_multihead_attention.4} parent=72 // loop_footer_branch
                %298 = sbr.rel target = $region75
              $region80: #{path_multihead_attention.4} parent=72 // loop_exit
                _
            $region73: #{path_multihead_attention.4} parent=64 // pred_fallthru
              _
          $region65: #{path_multihead_attention.4} parent=60 // pred_fallthru
            _
          %358 = vnop
        $region61: #{path_multihead_attention.4} parent=15 // pred_fallthru
          _
        // Predicated region
        $region99: #{path_multihead_attention.4} parent=15 // pred_check
          %p359 = pneg %p111
        $region100: #{path_multihead_attention.4} parent=15 // pred_check_branch
          %361 = sbr.rel (%p359) target = $region102
        $region101: #{path_multihead_attention.4} parent=15 // pred_region
          %s362 = sand.u32 %s101, 1
          %s363 = sand.u32 %s101, 1
          %s364 = smul.addr %s363, 32
          %s365 = scalar_lea.vmem [#allocation7], %s364
          %s366 = smul.u32 8, %s23
          %s367 = smul.addr %s21, 3
          %s368 = sadd.s32 2, %s367
          %s369 = smul.addr %s366, 6
          %s370 = sadd.s32 %s368, %s369
          %s371 = smul.addr %s370, 4
          %s372 = scalar_lea.vmem %s2, %s371
          // Predicated region
          $region103: #{path_multihead_attention.4} parent=101 // pred_check
            _
          $region104: #{path_multihead_attention.4} parent=101 // pred_check_branch
            %374 = sbr.rel (0) target = $region106
          $region105: #{path_multihead_attention.4} parent=101 // pred_region
            // Predicated region
            $region107: #{path_multihead_attention.4} parent=105 // pred_check
              _
            $region108: #{path_multihead_attention.4} parent=105 // pred_check_branch
              %376 = sbr.rel target = $region110
            $region109: #{path_multihead_attention.4} parent=105 // pred_region
              // Predicated region
              $region122: #{path_multihead_attention.4} parent=109 // pred_check
                _
              $region123: #{path_multihead_attention.4} parent=109 // pred_check_branch
                %406 = sbr.rel (0) target = $region125
              $region124: #{path_multihead_attention.4} parent=109 // pred_region
                loop: start=0, step=1, limit=1
                $region126: #{path_multihead_attention.4} parent=124 // loop_pre_header
                  _
                $region127: #{path_multihead_attention.4} parent=124 // loop_header
                  %s408 = sphi 0, %s412
                  %p409 = scmp.ge.s32.totalorder %s408, 1
                  %s413 = sphi %s372, %s372
                  %s414 = sphi %s365, %s365
                $region128: #{path_multihead_attention.4} parent=124 // loop_header_branch
                  %411 = sbr.rel (%p409) target = $region132
                $region129: #{path_multihead_attention.4} parent=124 // loop_body
                  _
                $region130: #{path_multihead_attention.4} parent=124 // loop_footer
                  %s412 = sadd.s32 1, %s408
                $region131: #{path_multihead_attention.4} parent=124 // loop_footer_branch
                  %407 = sbr.rel target = $region127
                $region132: #{path_multihead_attention.4} parent=124 // loop_exit
                  _
                %s416 = ssub.s32 16, 1
                loop: start=0, step=1, limit=1
                $region133: #{path_multihead_attention.4} parent=124 // loop_pre_header
                  _
                $region134: #{path_multihead_attention.4} parent=124 // loop_header
                  %s418 = sphi 0, %s422
                  %p419 = scmp.ge.s32.totalorder %s418, 1
                  %s423 = sphi %s372, %s372
                  %s424 = sphi %s365, %s365
                $region135: #{path_multihead_attention.4} parent=124 // loop_header_branch
                  %421 = sbr.rel (%p419) target = $region139
                $region136: #{path_multihead_attention.4} parent=124 // loop_body
                  %v425 = vld [vmem:[%s423] sm:%s416]
                  %426 = vst [vmem:[%s424] sm:%s416] %v425
                  %v427 = vld [vmem:[%s423 + $0x18] sm:%s416]
                  %428 = vst [vmem:[%s424 + $0x4] sm:%s416] %v427
                  %v429 = vld [vmem:[%s423 + $0x30] sm:%s416]
                  %430 = vst [vmem:[%s424 + $0x8] sm:%s416] %v429
                  %v431 = vld [vmem:[%s423 + $0x48] sm:%s416]
                  %432 = vst [vmem:[%s424 + $0xc] sm:%s416] %v431
                  %v433 = vld [vmem:[%s423 + $0x60] sm:%s416]
                  %434 = vst [vmem:[%s424 + $0x10] sm:%s416] %v433
                  %v435 = vld [vmem:[%s423 + $0x78] sm:%s416]
                  %436 = vst [vmem:[%s424 + $0x14] sm:%s416] %v435
                  %v437 = vld [vmem:[%s423 + $0x90] sm:%s416]
                  %438 = vst [vmem:[%s424 + $0x18] sm:%s416] %v437
                  %v439 = vld [vmem:[%s423 + $0xa8] sm:%s416]
                  %440 = vst [vmem:[%s424 + $0x1c] sm:%s416] %v439
                $region137: #{path_multihead_attention.4} parent=124 // loop_footer
                  %s422 = sadd.s32 1, %s418
                $region138: #{path_multihead_attention.4} parent=124 // loop_footer_branch
                  %417 = sbr.rel target = $region134
                $region139: #{path_multihead_attention.4} parent=124 // loop_exit
                  _
              $region125: #{path_multihead_attention.4} parent=109 // pred_fallthru
                _
            $region110: #{path_multihead_attention.4} parent=105 // pred_fallthru
              _
            // Predicated region
            $region111: #{path_multihead_attention.4} parent=105 // pred_check
              _
            $region112: #{path_multihead_attention.4} parent=105 // pred_check_branch
              %378 = sbr.rel (0) target = $region114
            $region113: #{path_multihead_attention.4} parent=105 // pred_region
              %s380 = ssub.s32 16, 1
              loop: start=0, step=1, limit=1
              $region115: #{path_multihead_attention.4} parent=113 // loop_pre_header
                _
              $region116: #{path_multihead_attention.4} parent=113 // loop_header
                %s382 = sphi 0, %s386
                %p383 = scmp.ge.s32.totalorder %s382, 1
                %s387 = sphi %s372, %s372
                %s388 = sphi %s365, %s365
              $region117: #{path_multihead_attention.4} parent=113 // loop_header_branch
                %385 = sbr.rel (%p383) target = $region121
              $region118: #{path_multihead_attention.4} parent=113 // loop_body
                %v389 = vld [vmem:[%s387] sm:%s380]
                %390 = vst [vmem:[%s388] sm:%s380] %v389
                %v391 = vld [vmem:[%s387 + $0x18] sm:%s380]
                %392 = vst [vmem:[%s388 + $0x4] sm:%s380] %v391
                %v393 = vld [vmem:[%s387 + $0x30] sm:%s380]
                %394 = vst [vmem:[%s388 + $0x8] sm:%s380] %v393
                %v395 = vld [vmem:[%s387 + $0x48] sm:%s380]
                %396 = vst [vmem:[%s388 + $0xc] sm:%s380] %v395
                %v397 = vld [vmem:[%s387 + $0x60] sm:%s380]
                %398 = vst [vmem:[%s388 + $0x10] sm:%s380] %v397
                %v399 = vld [vmem:[%s387 + $0x78] sm:%s380]
                %400 = vst [vmem:[%s388 + $0x14] sm:%s380] %v399
                %v401 = vld [vmem:[%s387 + $0x90] sm:%s380]
                %402 = vst [vmem:[%s388 + $0x18] sm:%s380] %v401
                %v403 = vld [vmem:[%s387 + $0xa8] sm:%s380]
                %404 = vst [vmem:[%s388 + $0x1c] sm:%s380] %v403
              $region119: #{path_multihead_attention.4} parent=113 // loop_footer
                %s386 = sadd.s32 1, %s382
              $region120: #{path_multihead_attention.4} parent=113 // loop_footer_branch
                %381 = sbr.rel target = $region116
              $region121: #{path_multihead_attention.4} parent=113 // loop_exit
                _
            $region114: #{path_multihead_attention.4} parent=105 // pred_fallthru
              _
          $region106: #{path_multihead_attention.4} parent=101 // pred_fallthru
            _
          %441 = vnop
        $region102: #{path_multihead_attention.4} parent=15 // pred_fallthru
          _
      $region16: #{path_multihead_attention.4} parent=5 // pred_fallthru
        _
      %p442 = scmp.le.s32.totalorder 1, %s14
      %p443 = scmp.lt.s32.totalorder %s14, 3
      %p444 = pnand %p442, %p443
      %p445 = pneg %p444
      // Predicated region
      $region140: #{path_multihead_attention.4} parent=5 // pred_check
        _
      $region141: #{path_multihead_attention.4} parent=5 // pred_check_branch
        %447 = sbr.rel (%p444) target = $region143
      $region142: #{path_multihead_attention.4} parent=5 // pred_region
        %s448 = ssub.s32 %s14, 1
        %s449 = sand.u32 %s48, 1
        %s450 = sand.u32 %s48, 1
        %s451 = smul.addr %s450, 32
        %s452 = scalar_lea.vmem [#allocation5], %s451
        // Predicated region
        $region144: #{path_multihead_attention.4} parent=142 // pred_check
          %p453 = pneg %p61
        $region145: #{path_multihead_attention.4} parent=142 // pred_check_branch
          %455 = sbr.rel (%p453) target = $region147
        $region146: #{path_multihead_attention.4} parent=142 // pred_region
          _
        $region147: #{path_multihead_attention.4} parent=142 // pred_fallthru
          _
        %s456 = sand.u32 %s76, 1
        %s457 = sand.u32 %s76, 1
        %s458 = smul.addr %s457, 32
        %s459 = scalar_lea.vmem [#allocation6], %s458
        // Predicated region
        $region148: #{path_multihead_attention.4} parent=142 // pred_check
          %p460 = pneg %p89
        $region149: #{path_multihead_attention.4} parent=142 // pred_check_branch
          %462 = sbr.rel (%p460) target = $region151
        $region150: #{path_multihead_attention.4} parent=142 // pred_region
          _
        $region151: #{path_multihead_attention.4} parent=142 // pred_fallthru
          _
        %s463 = sand.u32 %s104, 1
        %s464 = sand.u32 %s104, 1
        %s465 = smul.addr %s464, 32
        %s466 = scalar_lea.vmem [#allocation7], %s465
        // Predicated region
        $region152: #{path_multihead_attention.4} parent=142 // pred_check
          %p467 = pneg %p117
        $region153: #{path_multihead_attention.4} parent=142 // pred_check_branch
          %469 = sbr.rel (%p467) target = $region155
        $region154: #{path_multihead_attention.4} parent=142 // pred_region
          _
        $region155: #{path_multihead_attention.4} parent=142 // pred_fallthru
          _
        %s470 = sand.u32 %s48, 1
        %s471 = sand.u32 %s48, 1
        %s472 = smul.addr %s471, 32
        %s473 = scalar_lea.vmem [#allocation5], %s472
        %p474 = pneg %p61
        %p475 = pneg %p58
        %s476 = sand.u32 %s76, 1
        %s477 = sand.u32 %s76, 1
        %s478 = smul.addr %s477, 32
        %s479 = scalar_lea.vmem [#allocation6], %s478
        %p480 = pneg %p89
        %p481 = pneg %p86
        %s482 = sand.u32 %s104, 1
        %s483 = sand.u32 %s104, 1
        %s484 = smul.addr %s483, 32
        %s485 = scalar_lea.vmem [#allocation7], %s484
        %p486 = pneg %p117
        %p487 = pneg %p114
        %p488 = pneg %p145
        %p489 = pneg %p142
        %s490 = sand.u32 %s132, 1
        %s491 = sand.u32 %s132, 1
        %s492 = smul.addr %s491, 32
        %s493 = scalar_lea.vmem [#allocation8], %s492
        %p494 = pneg %p175
        %p495 = pneg %p172
        %s496 = sand.u32 %s162, 1
        %s497 = scalar_lea.sflag [#allocation10], %s496
        %s498 = sand.u32 %s162, 1
        %s499 = smul.addr %s498, 32
        %s500 = scalar_lea.vmem [#allocation9], %s499
        %s501 = smul.u32 8, %s25
        %s502 = smul.u32 8, %s26
        %s503 = smul.u32 8, %s26
        %s504 = smul.u32 8, %s25
        %s505 = smul.u32 4, %s24
        %p506 = scmp.eq.s32.totalorder %s26, 0
        // Predicated region
        $region156: #{path_multihead_attention.4} parent=142 // pred_check
          %p507 = pneg %p506
        $region157: #{path_multihead_attention.4} parent=142 // pred_check_branch
          %509 = sbr.rel (%p507) target = $region159
        $region158: #{path_multihead_attention.4} parent=142 // pred_region
          %vm510 = vcmask 7168
          %511 = vst.msk [vmem:[#allocation2] sm:$0xff] %vm510, -inf
          %512 = vst.msk [vmem:[#allocation2 + $0x8] sm:$0xff] %vm510, -inf
          %513 = vst.msk [vmem:[#allocation2 + $0x10] sm:$0xff] %vm510, -inf
          %514 = vst.msk [vmem:[#allocation2 + $0x18] sm:$0xff] %vm510, -inf
          %515 = vst.msk [vmem:[#allocation3] sm:$0xff] %vm510, 0.0
          %516 = vst.msk [vmem:[#allocation3 + $0x8] sm:$0xff] %vm510, 0.0
          %517 = vst.msk [vmem:[#allocation3 + $0x10] sm:$0xff] %vm510, 0.0
          %518 = vst.msk [vmem:[#allocation3 + $0x18] sm:$0xff] %vm510, 0.0
          %vm519 = vcmask 60416
          %520 = vst.msk [vmem:[#allocation4] sm:$0xf] %vm519, 0.0
          %521 = vst.msk [vmem:[#allocation4 + $0x4] sm:$0xf] %vm519, 0.0
          %522 = vst.msk [vmem:[#allocation4 + $0x8] sm:$0xf] %vm519, 0.0
          %523 = vst.msk [vmem:[#allocation4 + $0xc] sm:$0xf] %vm519, 0.0
          %524 = vst.msk [vmem:[#allocation4 + $0x10] sm:$0xf] %vm519, 0.0
          %525 = vst.msk [vmem:[#allocation4 + $0x14] sm:$0xf] %vm519, 0.0
          %526 = vst.msk [vmem:[#allocation4 + $0x18] sm:$0xf] %vm519, 0.0
          %527 = vst.msk [vmem:[#allocation4 + $0x1c] sm:$0xf] %vm519, 0.0
        $region159: #{path_multihead_attention.4} parent=142 // pred_fallthru
          _
        %v528 = vld [vmem:[%s452] sm:$0x1]
        %v529 = vld [vmem:[%s452 + $0x4] sm:$0x1]
        %v530 = vld [vmem:[%s452 + $0x8] sm:$0x1]
        %v531 = vld [vmem:[%s452 + $0xc] sm:$0x1]
        %v532 = vld [vmem:[%s452 + $0x10] sm:$0x1]
        %v533 = vld [vmem:[%s452 + $0x14] sm:$0x1]
        %v534 = vld [vmem:[%s452 + $0x18] sm:$0x1]
        %v535 = vld [vmem:[%s452 + $0x1c] sm:$0x1]
        %v536 = vld [vmem:[%s459] sm:$0x1]
        %v537 = vld [vmem:[%s459 + $0x4] sm:$0x1]
        %v538 = vld [vmem:[%s459 + $0x8] sm:$0x1]
        %v539 = vld [vmem:[%s459 + $0xc] sm:$0x1]
        %v540 = vld [vmem:[%s459 + $0x10] sm:$0x1]
        %v541 = vld [vmem:[%s459 + $0x14] sm:$0x1]
        %v542 = vld [vmem:[%s459 + $0x18] sm:$0x1]
        %v543 = vld [vmem:[%s459 + $0x1c] sm:$0x1]
        %v544 = vld [vmem:[%s466] sm:$0x1]
        %v545 = vld [vmem:[%s466 + $0x4] sm:$0x1]
        %v546 = vld [vmem:[%s466 + $0x8] sm:$0x1]
        %v547 = vld [vmem:[%s466 + $0xc] sm:$0x1]
        %v548 = vld [vmem:[%s466 + $0x10] sm:$0x1]
        %v549 = vld [vmem:[%s466 + $0x14] sm:$0x1]
        %v550 = vld [vmem:[%s466 + $0x18] sm:$0x1]
        %v551 = vld [vmem:[%s466 + $0x1c] sm:$0x1]
        %v560 = vrot.slane %v529, 7
        %vm561 = vcmask 1041409
        %v562 = vsel %vm561, %v560, %v528
        %v563 = vrot.slane %v530, 6
        %vm564 = vcmask 1042434
        %v565 = vsel %vm564, %v563, %v562
        %v566 = vrot.slane %v531, 5
        %vm567 = vcmask 1043459
        %v568 = vsel %vm567, %v566, %v565
        %v569 = vrot.slane %v532, 4
        %vm570 = vcmask 1044484
        %v571 = vsel %vm570, %v569, %v568
        %v572 = vrot.slane %v533, 3
        %vm573 = vcmask 1045509
        %v574 = vsel %vm573, %v572, %v571
        %v575 = vrot.slane %v534, 2
        %vm576 = vcmask 1046534
        %v577 = vsel %vm576, %v575, %v574
        %v578 = vrot.slane %v535, 1
        %vm579 = vcmask 1047559
        %v580 = vsel %vm579, %v578, %v577
        %v589 = vrot.slane %v537, 7
        %v590 = vsel %vm561, %v589, %v536
        %v591 = vrot.slane %v538, 6
        %v592 = vsel %vm564, %v591, %v590
        %v593 = vrot.slane %v539, 5
        %v594 = vsel %vm567, %v593, %v592
        %v595 = vrot.slane %v540, 4
        %v596 = vsel %vm570, %v595, %v594
        %v597 = vrot.slane %v541, 3
        %v598 = vsel %vm573, %v597, %v596
        %v599 = vrot.slane %v542, 2
        %v600 = vsel %vm576, %v599, %v598
        %v601 = vrot.slane %v543, 1
        %v602 = vsel %vm579, %v601, %v600
        %vm603 = vcmask 64512
        %v604 = vsel %vm603, %v580, 0
        %v606 = vsel %vm603, %v602, 0
        %608 = vmatpush.xpose.msra.mxu0 0.0
        %609 = vmatpush.xpose.msra.mxu0 0.0
        %610 = vmatpush.xpose.msra.mxu0 0.0
        %611 = vmatpush.xpose.msra.mxu0 0.0
        %612 = vmatpush.xpose.msra.mxu0 0.0
        %613 = vmatpush.xpose.msra.mxu0 0.0
        %614 = vmatpush.xpose.msra.mxu0 0.0
        %615 = vmatpush.xpose.msra.mxu0 0.0
        %616 = vmatpush.xpose.msra.mxu0 0.0
        %617 = vmatpush.xpose.msra.mxu0 0.0
        %618 = vmatpush.xpose.msra.mxu0 0.0
        %619 = vmatpush.xpose.msra.mxu0 0.0
        %620 = vmatpush.xpose.msra.mxu0 0.0
        %621 = vmatpush.xpose.msra.mxu0 0.0
        %622 = vmatpush.xpose.msra.mxu0 0.0
        %623 = vmatpush.xpose.msra.mxu0 %v606
        %624 = vmatmul.f32.gmra.mxu0 %v604
        %v625 = vpop.f32.mrf.mxu0
        %v626 = vadd.f32 0.0, %v625
        %627 = vdwg.mxu0
        %628 = vst.msk [vmem:[%s500] sm:$0xff] %vm603, %v626
        %v629 = vld [vmem:[#allocation2] sm:$0xff]
        %v630 = vsel %vm603, %v626, -inf
        %631 = vmax.xlane.f32.xlu0 %v630
        %v632 = vpop.xlane.xlu0 %631
        %v633 = vmax.f32 %v629, %v632
        %v634 = vsub.f32 %v629, %v633
        %v635 = vmul.f32 %v634, 1.442695
        %v636 = vpow.pop %v635
        %638 = vset.pattern.permute.xlu0 0
        %639 = vperm.xlu0 %638, %v633
        %v640 = vpop.permute.xlu0 %639
        %v642 = vsub.f32 %v626, %v640
        %v643 = vmul.f32 %v642, 1.442695
        %v644 = vpow.pop %v643
        %v645 = vld [vmem:[#allocation3] sm:$0xff]
        %v646 = vmul.f32 %v636, %v645
        %v647 = vsel %vm603, %v644, 0.0
        %648 = vadd.xlane.f32.xlu0 %v647
        %v649 = vpop.xlane.xlu0 %648
        %v650 = vadd.f32 %v646, %v649
        %vm651 = vcmask 7168
        %652 = vst.msk [vmem:[#allocation3] sm:$0xff] %vm651, %v650
        %v661 = vrot.slane %v545, 7
        %v662 = vsel %vm561, %v661, %v544
        %v663 = vrot.slane %v546, 6
        %v664 = vsel %vm564, %v663, %v662
        %v665 = vrot.slane %v547, 5
        %v666 = vsel %vm567, %v665, %v664
        %v667 = vrot.slane %v548, 4
        %v668 = vsel %vm570, %v667, %v666
        %v669 = vrot.slane %v549, 3
        %v670 = vsel %vm573, %v669, %v668
        %v671 = vrot.slane %v550, 2
        %v672 = vsel %vm576, %v671, %v670
        %v673 = vrot.slane %v551, 1
        %v674 = vsel %vm579, %v673, %v672
        %v677 = vsel %vm603, %v644, 0
        %679 = vmatpush.msra.mxu0 0.0
        %680 = vmatpush.msra.mxu0 0.0
        %681 = vmatpush.msra.mxu0 0.0
        %682 = vmatpush.msra.mxu0 0.0
        %683 = vmatpush.msra.mxu0 0.0
        %684 = vmatpush.msra.mxu0 0.0
        %685 = vmatpush.msra.mxu0 0.0
        %686 = vmatpush.msra.mxu0 0.0
        %687 = vmatpush.msra.mxu0 0.0
        %688 = vmatpush.msra.mxu0 0.0
        %689 = vmatpush.msra.mxu0 0.0
        %690 = vmatpush.msra.mxu0 0.0
        %691 = vmatpush.msra.mxu0 0.0
        %692 = vmatpush.msra.mxu0 0.0
        %693 = vmatpush.msra.mxu0 0.0
        %694 = vmatpush.msra.mxu0 %v674
        %695 = vmatmul.f32.gmra.mxu0 %v677
        %v696 = vpop.f32.mrf.mxu0
        %v697 = vadd.f32 0.0, %v696
        %698 = vdwg.mxu0
        %v699 = vld [vmem:[#allocation4] sm:$0x1]
        %v700 = vld [vmem:[#allocation4 + $0x4] sm:$0x1]
        %v701 = vld [vmem:[#allocation4 + $0x8] sm:$0x1]
        %v702 = vld [vmem:[#allocation4 + $0xc] sm:$0x1]
        %v703 = vld [vmem:[#allocation4 + $0x10] sm:$0x1]
        %v704 = vld [vmem:[#allocation4 + $0x14] sm:$0x1]
        %v705 = vld [vmem:[#allocation4 + $0x18] sm:$0x1]
        %v706 = vld [vmem:[#allocation4 + $0x1c] sm:$0x1]
        %708 = vset.pattern.permute.xlu0 0
        %709 = vperm.xlu0 %708, %v636
        %v710 = vpop.permute.xlu0 %709
        %v720 = vrot.slane %v700, 7
        %v721 = vsel %vm561, %v720, %v699
        %v722 = vrot.slane %v701, 6
        %v723 = vsel %vm564, %v722, %v721
        %v724 = vrot.slane %v702, 5
        %v725 = vsel %vm567, %v724, %v723
        %v726 = vrot.slane %v703, 4
        %v727 = vsel %vm570, %v726, %v725
        %v728 = vrot.slane %v704, 3
        %v729 = vsel %vm573, %v728, %v727
        %v730 = vrot.slane %v705, 2
        %v731 = vsel %vm576, %v730, %v729
        %v732 = vrot.slane %v706, 1
        %v733 = vsel %vm579, %v732, %v731
        %v735 = vmul.f32 %v710, %v733
        %v736 = vadd.f32 %v735, %v697
        %v738 = vrot.slane %v736, 1
        %v739 = vrot.slane %v736, 2
        %v740 = vrot.slane %v736, 3
        %v741 = vrot.slane %v736, 4
        %v742 = vrot.slane %v736, 5
        %v743 = vrot.slane %v736, 6
        %v744 = vrot.slane %v736, 7
        %vm752 = vcmask 57344
        %753 = vst.msk [vmem:[#allocation4] sm:$0x1] %vm752, %v736
        %754 = vst.msk [vmem:[#allocation4 + $0x4] sm:$0x1] %vm752, %v738
        %755 = vst.msk [vmem:[#allocation4 + $0x8] sm:$0x1] %vm752, %v739
        %756 = vst.msk [vmem:[#allocation4 + $0xc] sm:$0x1] %vm752, %v740
        %757 = vst.msk [vmem:[#allocation4 + $0x10] sm:$0x1] %vm752, %v741
        %758 = vst.msk [vmem:[#allocation4 + $0x14] sm:$0x1] %vm752, %v742
        %759 = vst.msk [vmem:[#allocation4 + $0x18] sm:$0x1] %vm752, %v743
        %760 = vst.msk [vmem:[#allocation4 + $0x1c] sm:$0x1] %vm752, %v744
        %761 = vst.msk [vmem:[#allocation2] sm:$0xff] %vm651, %v633
        %v762 = vld [vmem:[%s452 + $0x1] sm:$0x1]
        %v763 = vld [vmem:[%s452 + $0x5] sm:$0x1]
        %v764 = vld [vmem:[%s452 + $0x9] sm:$0x1]
        %v765 = vld [vmem:[%s452 + $0xd] sm:$0x1]
        %v766 = vld [vmem:[%s452 + $0x11] sm:$0x1]
        %v767 = vld [vmem:[%s452 + $0x15] sm:$0x1]
        %v768 = vld [vmem:[%s452 + $0x19] sm:$0x1]
        %v769 = vld [vmem:[%s452 + $0x1d] sm:$0x1]
        %v770 = vld [vmem:[%s459 + $0x1] sm:$0x1]
        %v771 = vld [vmem:[%s459 + $0x5] sm:$0x1]
        %v772 = vld [vmem:[%s459 + $0x9] sm:$0x1]
        %v773 = vld [vmem:[%s459 + $0xd] sm:$0x1]
        %v774 = vld [vmem:[%s459 + $0x11] sm:$0x1]
        %v775 = vld [vmem:[%s459 + $0x15] sm:$0x1]
        %v776 = vld [vmem:[%s459 + $0x19] sm:$0x1]
        %v777 = vld [vmem:[%s459 + $0x1d] sm:$0x1]
        %v778 = vld [vmem:[%s466 + $0x1] sm:$0x1]
        %v779 = vld [vmem:[%s466 + $0x5] sm:$0x1]
        %v780 = vld [vmem:[%s466 + $0x9] sm:$0x1]
        %v781 = vld [vmem:[%s466 + $0xd] sm:$0x1]
        %v782 = vld [vmem:[%s466 + $0x11] sm:$0x1]
        %v783 = vld [vmem:[%s466 + $0x15] sm:$0x1]
        %v784 = vld [vmem:[%s466 + $0x19] sm:$0x1]
        %v785 = vld [vmem:[%s466 + $0x1d] sm:$0x1]
        %v794 = vrot.slane %v763, 7
        %v795 = vsel %vm561, %v794, %v762
        %v796 = vrot.slane %v764, 6
        %v797 = vsel %vm564, %v796, %v795
        %v798 = vrot.slane %v765, 5
        %v799 = vsel %vm567, %v798, %v797
        %v800 = vrot.slane %v766, 4
        %v801 = vsel %vm570, %v800, %v799
        %v802 = vrot.slane %v767, 3
        %v803 = vsel %vm573, %v802, %v801
        %v804 = vrot.slane %v768, 2
        %v805 = vsel %vm576, %v804, %v803
        %v806 = vrot.slane %v769, 1
        %v807 = vsel %vm579, %v806, %v805
        %v816 = vrot.slane %v771, 7
        %v817 = vsel %vm561, %v816, %v770
        %v818 = vrot.slane %v772, 6
        %v819 = vsel %vm564, %v818, %v817
        %v820 = vrot.slane %v773, 5
        %v821 = vsel %vm567, %v820, %v819
        %v822 = vrot.slane %v774, 4
        %v823 = vsel %vm570, %v822, %v821
        %v824 = vrot.slane %v775, 3
        %v825 = vsel %vm573, %v824, %v823
        %v826 = vrot.slane %v776, 2
        %v827 = vsel %vm576, %v826, %v825
        %v828 = vrot.slane %v777, 1
        %v829 = vsel %vm579, %v828, %v827
        %v830 = vsel %vm603, %v807, 0
        %v832 = vsel %vm603, %v829, 0
        %834 = vmatpush.xpose.msra.mxu0 0.0
        %835 = vmatpush.xpose.msra.mxu0 0.0
        %836 = vmatpush.xpose.msra.mxu0 0.0
        %837 = vmatpush.xpose.msra.mxu0 0.0
        %838 = vmatpush.xpose.msra.mxu0 0.0
        %839 = vmatpush.xpose.msra.mxu0 0.0
        %840 = vmatpush.xpose.msra.mxu0 0.0
        %841 = vmatpush.xpose.msra.mxu0 0.0
        %842 = vmatpush.xpose.msra.mxu0 0.0
        %843 = vmatpush.xpose.msra.mxu0 0.0
        %844 = vmatpush.xpose.msra.mxu0 0.0
        %845 = vmatpush.xpose.msra.mxu0 0.0
        %846 = vmatpush.xpose.msra.mxu0 0.0
        %847 = vmatpush.xpose.msra.mxu0 0.0
        %848 = vmatpush.xpose.msra.mxu0 0.0
        %849 = vmatpush.xpose.msra.mxu0 %v832
        %850 = vmatmul.f32.gmra.mxu0 %v830
        %v851 = vpop.f32.mrf.mxu0
        %v852 = vadd.f32 0.0, %v851
        %853 = vdwg.mxu0
        %s854 = scalar_lea.vmem %s500, 8 [#allocation9]
        %855 = vst.msk [vmem:[%s854] sm:$0xff] %vm603, %v852
        %s856 = scalar_lea.vmem [#allocation2], 8
        %v857 = vld [vmem:[%s856] sm:$0xff]
        %v858 = vsel %vm603, %v852, -inf
        %859 = vmax.xlane.f32.xlu0 %v858
        %v860 = vpop.xlane.xlu0 %859
        %v861 = vmax.f32 %v857, %v860
        %v862 = vsub.f32 %v857, %v861
        %v863 = vmul.f32 %v862, 1.442695
        %v864 = vpow.pop %v863
        %866 = vset.pattern.permute.xlu0 0
        %867 = vperm.xlu0 %866, %v861
        %v868 = vpop.permute.xlu0 %867
        %v870 = vsub.f32 %v852, %v868
        %v871 = vmul.f32 %v870, 1.442695
        %v872 = vpow.pop %v871
        %s873 = scalar_lea.vmem [#allocation3], 8
        %v874 = vld [vmem:[%s873] sm:$0xff]
        %v875 = vmul.f32 %v864, %v874
        %v876 = vsel %vm603, %v872, 0.0
        %877 = vadd.xlane.f32.xlu0 %v876
        %v878 = vpop.xlane.xlu0 %877
        %v879 = vadd.f32 %v875, %v878
        %880 = vst.msk [vmem:[%s873] sm:$0xff] %vm651, %v879
        %v889 = vrot.slane %v779, 7
        %v890 = vsel %vm561, %v889, %v778
        %v891 = vrot.slane %v780, 6
        %v892 = vsel %vm564, %v891, %v890
        %v893 = vrot.slane %v781, 5
        %v894 = vsel %vm567, %v893, %v892
        %v895 = vrot.slane %v782, 4
        %v896 = vsel %vm570, %v895, %v894
        %v897 = vrot.slane %v783, 3
        %v898 = vsel %vm573, %v897, %v896
        %v899 = vrot.slane %v784, 2
        %v900 = vsel %vm576, %v899, %v898
        %v901 = vrot.slane %v785, 1
        %v902 = vsel %vm579, %v901, %v900
        %v905 = vsel %vm603, %v872, 0
        %907 = vmatpush.msra.mxu0 0.0
        %908 = vmatpush.msra.mxu0 0.0
        %909 = vmatpush.msra.mxu0 0.0
        %910 = vmatpush.msra.mxu0 0.0
        %911 = vmatpush.msra.mxu0 0.0
        %912 = vmatpush.msra.mxu0 0.0
        %913 = vmatpush.msra.mxu0 0.0
        %914 = vmatpush.msra.mxu0 0.0
        %915 = vmatpush.msra.mxu0 0.0
        %916 = vmatpush.msra.mxu0 0.0
        %917 = vmatpush.msra.mxu0 0.0
        %918 = vmatpush.msra.mxu0 0.0
        %919 = vmatpush.msra.mxu0 0.0
        %920 = vmatpush.msra.mxu0 0.0
        %921 = vmatpush.msra.mxu0 0.0
        %922 = vmatpush.msra.mxu0 %v902
        %923 = vmatmul.f32.gmra.mxu0 %v905
        %v924 = vpop.f32.mrf.mxu0
        %v925 = vadd.f32 0.0, %v924
        %926 = vdwg.mxu0
        %v927 = vld [vmem:[#allocation4 + $0x1] sm:$0x1]
        %v928 = vld [vmem:[#allocation4 + $0x5] sm:$0x1]
        %v929 = vld [vmem:[#allocation4 + $0x9] sm:$0x1]
        %v930 = vld [vmem:[#allocation4 + $0xd] sm:$0x1]
        %v931 = vld [vmem:[#allocation4 + $0x11] sm:$0x1]
        %v932 = vld [vmem:[#allocation4 + $0x15] sm:$0x1]
        %v933 = vld [vmem:[#allocation4 + $0x19] sm:$0x1]
        %v934 = vld [vmem:[#allocation4 + $0x1d] sm:$0x1]
        %936 = vset.pattern.permute.xlu0 0
        %937 = vperm.xlu0 %936, %v864
        %v938 = vpop.permute.xlu0 %937
        %v948 = vrot.slane %v928, 7
        %v949 = vsel %vm561, %v948, %v927
        %v950 = vrot.slane %v929, 6
        %v951 = vsel %vm564, %v950, %v949
        %v952 = vrot.slane %v930, 5
        %v953 = vsel %vm567, %v952, %v951
        %v954 = vrot.slane %v931, 4
        %v955 = vsel %vm570, %v954, %v953
        %v956 = vrot.slane %v932, 3
        %v957 = vsel %vm573, %v956, %v955
        %v958 = vrot.slane %v933, 2
        %v959 = vsel %vm576, %v958, %v957
        %v960 = vrot.slane %v934, 1
        %v961 = vsel %vm579, %v960, %v959
        %v963 = vmul.f32 %v938, %v961
        %v964 = vadd.f32 %v963, %v925
        %v966 = vrot.slane %v964, 1
        %v967 = vrot.slane %v964, 2
        %v968 = vrot.slane %v964, 3
        %v969 = vrot.slane %v964, 4
        %v970 = vrot.slane %v964, 5
        %v971 = vrot.slane %v964, 6
        %v972 = vrot.slane %v964, 7
        %980 = vst.msk [vmem:[#allocation4 + $0x1] sm:$0x1] %vm752, %v964
        %981 = vst.msk [vmem:[#allocation4 + $0x5] sm:$0x1] %vm752, %v966
        %982 = vst.msk [vmem:[#allocation4 + $0x9] sm:$0x1] %vm752, %v967
        %983 = vst.msk [vmem:[#allocation4 + $0xd] sm:$0x1] %vm752, %v968
        %984 = vst.msk [vmem:[#allocation4 + $0x11] sm:$0x1] %vm752, %v969
        %985 = vst.msk [vmem:[#allocation4 + $0x15] sm:$0x1] %vm752, %v970
        %986 = vst.msk [vmem:[#allocation4 + $0x19] sm:$0x1] %vm752, %v971
        %987 = vst.msk [vmem:[#allocation4 + $0x1d] sm:$0x1] %vm752, %v972
        %988 = vst.msk [vmem:[%s856] sm:$0xff] %vm651, %v861
        %v989 = vld [vmem:[%s452 + $0x2] sm:$0x1]
        %v990 = vld [vmem:[%s452 + $0x6] sm:$0x1]
        %v991 = vld [vmem:[%s452 + $0xa] sm:$0x1]
        %v992 = vld [vmem:[%s452 + $0xe] sm:$0x1]
        %v993 = vld [vmem:[%s452 + $0x12] sm:$0x1]
        %v994 = vld [vmem:[%s452 + $0x16] sm:$0x1]
        %v995 = vld [vmem:[%s452 + $0x1a] sm:$0x1]
        %v996 = vld [vmem:[%s452 + $0x1e] sm:$0x1]
        %v997 = vld [vmem:[%s459 + $0x2] sm:$0x1]
        %v998 = vld [vmem:[%s459 + $0x6] sm:$0x1]
        %v999 = vld [vmem:[%s459 + $0xa] sm:$0x1]
        %v1000 = vld [vmem:[%s459 + $0xe] sm:$0x1]
        %v1001 = vld [vmem:[%s459 + $0x12] sm:$0x1]
        %v1002 = vld [vmem:[%s459 + $0x16] sm:$0x1]
        %v1003 = vld [vmem:[%s459 + $0x1a] sm:$0x1]
        %v1004 = vld [vmem:[%s459 + $0x1e] sm:$0x1]
        %v1005 = vld [vmem:[%s466 + $0x2] sm:$0x1]
        %v1006 = vld [vmem:[%s466 + $0x6] sm:$0x1]
        %v1007 = vld [vmem:[%s466 + $0xa] sm:$0x1]
        %v1008 = vld [vmem:[%s466 + $0xe] sm:$0x1]
        %v1009 = vld [vmem:[%s466 + $0x12] sm:$0x1]
        %v1010 = vld [vmem:[%s466 + $0x16] sm:$0x1]
        %v1011 = vld [vmem:[%s466 + $0x1a] sm:$0x1]
        %v1012 = vld [vmem:[%s466 + $0x1e] sm:$0x1]
        %v1021 = vrot.slane %v990, 7
        %v1022 = vsel %vm561, %v1021, %v989
        %v1023 = vrot.slane %v991, 6
        %v1024 = vsel %vm564, %v1023, %v1022
        %v1025 = vrot.slane %v992, 5
        %v1026 = vsel %vm567, %v1025, %v1024
        %v1027 = vrot.slane %v993, 4
        %v1028 = vsel %vm570, %v1027, %v1026
        %v1029 = vrot.slane %v994, 3
        %v1030 = vsel %vm573, %v1029, %v1028
        %v1031 = vrot.slane %v995, 2
        %v1032 = vsel %vm576, %v1031, %v1030
        %v1033 = vrot.slane %v996, 1
        %v1034 = vsel %vm579, %v1033, %v1032
        %v1043 = vrot.slane %v998, 7
        %v1044 = vsel %vm561, %v1043, %v997
        %v1045 = vrot.slane %v999, 6
        %v1046 = vsel %vm564, %v1045, %v1044
        %v1047 = vrot.slane %v1000, 5
        %v1048 = vsel %vm567, %v1047, %v1046
        %v1049 = vrot.slane %v1001, 4
        %v1050 = vsel %vm570, %v1049, %v1048
        %v1051 = vrot.slane %v1002, 3
        %v1052 = vsel %vm573, %v1051, %v1050
        %v1053 = vrot.slane %v1003, 2
        %v1054 = vsel %vm576, %v1053, %v1052
        %v1055 = vrot.slane %v1004, 1
        %v1056 = vsel %vm579, %v1055, %v1054
        %v1057 = vsel %vm603, %v1034, 0
        %v1059 = vsel %vm603, %v1056, 0
        %1061 = vmatpush.xpose.msra.mxu0 0.0
        %1062 = vmatpush.xpose.msra.mxu0 0.0
        %1063 = vmatpush.xpose.msra.mxu0 0.0
        %1064 = vmatpush.xpose.msra.mxu0 0.0
        %1065 = vmatpush.xpose.msra.mxu0 0.0
        %1066 = vmatpush.xpose.msra.mxu0 0.0
        %1067 = vmatpush.xpose.msra.mxu0 0.0
        %1068 = vmatpush.xpose.msra.mxu0 0.0
        %1069 = vmatpush.xpose.msra.mxu0 0.0
        %1070 = vmatpush.xpose.msra.mxu0 0.0
        %1071 = vmatpush.xpose.msra.mxu0 0.0
        %1072 = vmatpush.xpose.msra.mxu0 0.0
        %1073 = vmatpush.xpose.msra.mxu0 0.0
        %1074 = vmatpush.xpose.msra.mxu0 0.0
        %1075 = vmatpush.xpose.msra.mxu0 0.0
        %1076 = vmatpush.xpose.msra.mxu0 %v1059
        %1077 = vmatmul.f32.gmra.mxu0 %v1057
        %v1078 = vpop.f32.mrf.mxu0
        %v1079 = vadd.f32 0.0, %v1078
        %1080 = vdwg.mxu0
        %s1081 = scalar_lea.vmem %s500, 16 [#allocation9]
        %1082 = vst.msk [vmem:[%s1081] sm:$0xff] %vm603, %v1079
        %s1083 = scalar_lea.vmem [#allocation2], 16
        %v1084 = vld [vmem:[%s1083] sm:$0xff]
        %v1085 = vsel %vm603, %v1079, -inf
        %1086 = vmax.xlane.f32.xlu0 %v1085
        %v1087 = vpop.xlane.xlu0 %1086
        %v1088 = vmax.f32 %v1084, %v1087
        %v1089 = vsub.f32 %v1084, %v1088
        %v1090 = vmul.f32 %v1089, 1.442695
        %v1091 = vpow.pop %v1090
        %1093 = vset.pattern.permute.xlu0 0
        %1094 = vperm.xlu0 %1093, %v1088
        %v1095 = vpop.permute.xlu0 %1094
        %v1097 = vsub.f32 %v1079, %v1095
        %v1098 = vmul.f32 %v1097, 1.442695
        %v1099 = vpow.pop %v1098
        %s1100 = scalar_lea.vmem [#allocation3], 16
        %v1101 = vld [vmem:[%s1100] sm:$0xff]
        %v1102 = vmul.f32 %v1091, %v1101
        %v1103 = vsel %vm603, %v1099, 0.0
        %1104 = vadd.xlane.f32.xlu0 %v1103
        %v1105 = vpop.xlane.xlu0 %1104
        %v1106 = vadd.f32 %v1102, %v1105
        %1107 = vst.msk [vmem:[%s1100] sm:$0xff] %vm651, %v1106
        %v1116 = vrot.slane %v1006, 7
        %v1117 = vsel %vm561, %v1116, %v1005
        %v1118 = vrot.slane %v1007, 6
        %v1119 = vsel %vm564, %v1118, %v1117
        %v1120 = vrot.slane %v1008, 5
        %v1121 = vsel %vm567, %v1120, %v1119
        %v1122 = vrot.slane %v1009, 4
        %v1123 = vsel %vm570, %v1122, %v1121
        %v1124 = vrot.slane %v1010, 3
        %v1125 = vsel %vm573, %v1124, %v1123
        %v1126 = vrot.slane %v1011, 2
        %v1127 = vsel %vm576, %v1126, %v1125
        %v1128 = vrot.slane %v1012, 1
        %v1129 = vsel %vm579, %v1128, %v1127
        %v1132 = vsel %vm603, %v1099, 0
        %1134 = vmatpush.msra.mxu0 0.0
        %1135 = vmatpush.msra.mxu0 0.0
        %1136 = vmatpush.msra.mxu0 0.0
        %1137 = vmatpush.msra.mxu0 0.0
        %1138 = vmatpush.msra.mxu0 0.0
        %1139 = vmatpush.msra.mxu0 0.0
        %1140 = vmatpush.msra.mxu0 0.0
        %1141 = vmatpush.msra.mxu0 0.0
        %1142 = vmatpush.msra.mxu0 0.0
        %1143 = vmatpush.msra.mxu0 0.0
        %1144 = vmatpush.msra.mxu0 0.0
        %1145 = vmatpush.msra.mxu0 0.0
        %1146 = vmatpush.msra.mxu0 0.0
        %1147 = vmatpush.msra.mxu0 0.0
        %1148 = vmatpush.msra.mxu0 0.0
        %1149 = vmatpush.msra.mxu0 %v1129
        %1150 = vmatmul.f32.gmra.mxu0 %v1132
        %v1151 = vpop.f32.mrf.mxu0
        %v1152 = vadd.f32 0.0, %v1151
        %1153 = vdwg.mxu0
        %v1154 = vld [vmem:[#allocation4 + $0x2] sm:$0x1]
        %v1155 = vld [vmem:[#allocation4 + $0x6] sm:$0x1]
        %v1156 = vld [vmem:[#allocation4 + $0xa] sm:$0x1]
        %v1157 = vld [vmem:[#allocation4 + $0xe] sm:$0x1]
        %v1158 = vld [vmem:[#allocation4 + $0x12] sm:$0x1]
        %v1159 = vld [vmem:[#allocation4 + $0x16] sm:$0x1]
        %v1160 = vld [vmem:[#allocation4 + $0x1a] sm:$0x1]
        %v1161 = vld [vmem:[#allocation4 + $0x1e] sm:$0x1]
        %1163 = vset.pattern.permute.xlu0 0
        %1164 = vperm.xlu0 %1163, %v1091
        %v1165 = vpop.permute.xlu0 %1164
        %v1175 = vrot.slane %v1155, 7
        %v1176 = vsel %vm561, %v1175, %v1154
        %v1177 = vrot.slane %v1156, 6
        %v1178 = vsel %vm564, %v1177, %v1176
        %v1179 = vrot.slane %v1157, 5
        %v1180 = vsel %vm567, %v1179, %v1178
        %v1181 = vrot.slane %v1158, 4
        %v1182 = vsel %vm570, %v1181, %v1180
        %v1183 = vrot.slane %v1159, 3
        %v1184 = vsel %vm573, %v1183, %v1182
        %v1185 = vrot.slane %v1160, 2
        %v1186 = vsel %vm576, %v1185, %v1184
        %v1187 = vrot.slane %v1161, 1
        %v1188 = vsel %vm579, %v1187, %v1186
        %v1190 = vmul.f32 %v1165, %v1188
        %v1191 = vadd.f32 %v1190, %v1152
        %v1193 = vrot.slane %v1191, 1
        %v1194 = vrot.slane %v1191, 2
        %v1195 = vrot.slane %v1191, 3
        %v1196 = vrot.slane %v1191, 4
        %v1197 = vrot.slane %v1191, 5
        %v1198 = vrot.slane %v1191, 6
        %v1199 = vrot.slane %v1191, 7
        %1207 = vst.msk [vmem:[#allocation4 + $0x2] sm:$0x1] %vm752, %v1191
        %1208 = vst.msk [vmem:[#allocation4 + $0x6] sm:$0x1] %vm752, %v1193
        %1209 = vst.msk [vmem:[#allocation4 + $0xa] sm:$0x1] %vm752, %v1194
        %1210 = vst.msk [vmem:[#allocation4 + $0xe] sm:$0x1] %vm752, %v1195
        %1211 = vst.msk [vmem:[#allocation4 + $0x12] sm:$0x1] %vm752, %v1196
        %1212 = vst.msk [vmem:[#allocation4 + $0x16] sm:$0x1] %vm752, %v1197
        %1213 = vst.msk [vmem:[#allocation4 + $0x1a] sm:$0x1] %vm752, %v1198
        %1214 = vst.msk [vmem:[#allocation4 + $0x1e] sm:$0x1] %vm752, %v1199
        %1215 = vst.msk [vmem:[%s1083] sm:$0xff] %vm651, %v1088
        %v1216 = vld [vmem:[%s452 + $0x3] sm:$0x1]
        %v1217 = vld [vmem:[%s452 + $0x7] sm:$0x1]
        %v1218 = vld [vmem:[%s452 + $0xb] sm:$0x1]
        %v1219 = vld [vmem:[%s452 + $0xf] sm:$0x1]
        %v1220 = vld [vmem:[%s452 + $0x13] sm:$0x1]
        %v1221 = vld [vmem:[%s452 + $0x17] sm:$0x1]
        %v1222 = vld [vmem:[%s452 + $0x1b] sm:$0x1]
        %v1223 = vld [vmem:[%s452 + $0x1f] sm:$0x1]
        %v1224 = vld [vmem:[%s459 + $0x3] sm:$0x1]
        %v1225 = vld [vmem:[%s459 + $0x7] sm:$0x1]
        %v1226 = vld [vmem:[%s459 + $0xb] sm:$0x1]
        %v1227 = vld [vmem:[%s459 + $0xf] sm:$0x1]
        %v1228 = vld [vmem:[%s459 + $0x13] sm:$0x1]
        %v1229 = vld [vmem:[%s459 + $0x17] sm:$0x1]
        %v1230 = vld [vmem:[%s459 + $0x1b] sm:$0x1]
        %v1231 = vld [vmem:[%s459 + $0x1f] sm:$0x1]
        %v1232 = vld [vmem:[%s466 + $0x3] sm:$0x1]
        %v1233 = vld [vmem:[%s466 + $0x7] sm:$0x1]
        %v1234 = vld [vmem:[%s466 + $0xb] sm:$0x1]
        %v1235 = vld [vmem:[%s466 + $0xf] sm:$0x1]
        %v1236 = vld [vmem:[%s466 + $0x13] sm:$0x1]
        %v1237 = vld [vmem:[%s466 + $0x17] sm:$0x1]
        %v1238 = vld [vmem:[%s466 + $0x1b] sm:$0x1]
        %v1239 = vld [vmem:[%s466 + $0x1f] sm:$0x1]
        %v1248 = vrot.slane %v1217, 7
        %v1249 = vsel %vm561, %v1248, %v1216
        %v1250 = vrot.slane %v1218, 6
        %v1251 = vsel %vm564, %v1250, %v1249
        %v1252 = vrot.slane %v1219, 5
        %v1253 = vsel %vm567, %v1252, %v1251
        %v1254 = vrot.slane %v1220, 4
        %v1255 = vsel %vm570, %v1254, %v1253
        %v1256 = vrot.slane %v1221, 3
        %v1257 = vsel %vm573, %v1256, %v1255
        %v1258 = vrot.slane %v1222, 2
        %v1259 = vsel %vm576, %v1258, %v1257
        %v1260 = vrot.slane %v1223, 1
        %v1261 = vsel %vm579, %v1260, %v1259
        %v1270 = vrot.slane %v1225, 7
        %v1271 = vsel %vm561, %v1270, %v1224
        %v1272 = vrot.slane %v1226, 6
        %v1273 = vsel %vm564, %v1272, %v1271
        %v1274 = vrot.slane %v1227, 5
        %v1275 = vsel %vm567, %v1274, %v1273
        %v1276 = vrot.slane %v1228, 4
        %v1277 = vsel %vm570, %v1276, %v1275
        %v1278 = vrot.slane %v1229, 3
        %v1279 = vsel %vm573, %v1278, %v1277
        %v1280 = vrot.slane %v1230, 2
        %v1281 = vsel %vm576, %v1280, %v1279
        %v1282 = vrot.slane %v1231, 1
        %v1283 = vsel %vm579, %v1282, %v1281
        %v1284 = vsel %vm603, %v1261, 0
        %v1286 = vsel %vm603, %v1283, 0
        %1288 = vmatpush.xpose.msra.mxu0 0.0
        %1289 = vmatpush.xpose.msra.mxu0 0.0
        %1290 = vmatpush.xpose.msra.mxu0 0.0
        %1291 = vmatpush.xpose.msra.mxu0 0.0
        %1292 = vmatpush.xpose.msra.mxu0 0.0
        %1293 = vmatpush.xpose.msra.mxu0 0.0
        %1294 = vmatpush.xpose.msra.mxu0 0.0
        %1295 = vmatpush.xpose.msra.mxu0 0.0
        %1296 = vmatpush.xpose.msra.mxu0 0.0
        %1297 = vmatpush.xpose.msra.mxu0 0.0
        %1298 = vmatpush.xpose.msra.mxu0 0.0
        %1299 = vmatpush.xpose.msra.mxu0 0.0
        %1300 = vmatpush.xpose.msra.mxu0 0.0
        %1301 = vmatpush.xpose.msra.mxu0 0.0
        %1302 = vmatpush.xpose.msra.mxu0 0.0
        %1303 = vmatpush.xpose.msra.mxu0 %v1286
        %1304 = vmatmul.f32.gmra.mxu0 %v1284
        %v1305 = vpop.f32.mrf.mxu0
        %v1306 = vadd.f32 0.0, %v1305
        %1307 = vdwg.mxu0
        %s1308 = scalar_lea.vmem %s500, 24 [#allocation9]
        %1309 = vst.msk [vmem:[%s1308] sm:$0xff] %vm603, %v1306
        %s1310 = scalar_lea.vmem [#allocation2], 24
        %v1311 = vld [vmem:[%s1310] sm:$0xff]
        %v1312 = vsel %vm603, %v1306, -inf
        %1313 = vmax.xlane.f32.xlu0 %v1312
        %v1314 = vpop.xlane.xlu0 %1313
        %v1315 = vmax.f32 %v1311, %v1314
        %v1316 = vsub.f32 %v1311, %v1315
        %v1317 = vmul.f32 %v1316, 1.442695
        %v1318 = vpow.pop %v1317
        %1320 = vset.pattern.permute.xlu0 0
        %1321 = vperm.xlu0 %1320, %v1315
        %v1322 = vpop.permute.xlu0 %1321
        %v1324 = vsub.f32 %v1306, %v1322
        %v1325 = vmul.f32 %v1324, 1.442695
        %v1326 = vpow.pop %v1325
        %s1327 = scalar_lea.vmem [#allocation3], 24
        %v1328 = vld [vmem:[%s1327] sm:$0xff]
        %v1329 = vmul.f32 %v1318, %v1328
        %v1330 = vsel %vm603, %v1326, 0.0
        %1331 = vadd.xlane.f32.xlu0 %v1330
        %v1332 = vpop.xlane.xlu0 %1331
        %v1333 = vadd.f32 %v1329, %v1332
        %1334 = vst.msk [vmem:[%s1327] sm:$0xff] %vm651, %v1333
        %v1343 = vrot.slane %v1233, 7
        %v1344 = vsel %vm561, %v1343, %v1232
        %v1345 = vrot.slane %v1234, 6
        %v1346 = vsel %vm564, %v1345, %v1344
        %v1347 = vrot.slane %v1235, 5
        %v1348 = vsel %vm567, %v1347, %v1346
        %v1349 = vrot.slane %v1236, 4
        %v1350 = vsel %vm570, %v1349, %v1348
        %v1351 = vrot.slane %v1237, 3
        %v1352 = vsel %vm573, %v1351, %v1350
        %v1353 = vrot.slane %v1238, 2
        %v1354 = vsel %vm576, %v1353, %v1352
        %v1355 = vrot.slane %v1239, 1
        %v1356 = vsel %vm579, %v1355, %v1354
        %v1359 = vsel %vm603, %v1326, 0
        %1361 = vmatpush.msra.mxu0 0.0
        %1362 = vmatpush.msra.mxu0 0.0
        %1363 = vmatpush.msra.mxu0 0.0
        %1364 = vmatpush.msra.mxu0 0.0
        %1365 = vmatpush.msra.mxu0 0.0
        %1366 = vmatpush.msra.mxu0 0.0
        %1367 = vmatpush.msra.mxu0 0.0
        %1368 = vmatpush.msra.mxu0 0.0
        %1369 = vmatpush.msra.mxu0 0.0
        %1370 = vmatpush.msra.mxu0 0.0
        %1371 = vmatpush.msra.mxu0 0.0
        %1372 = vmatpush.msra.mxu0 0.0
        %1373 = vmatpush.msra.mxu0 0.0
        %1374 = vmatpush.msra.mxu0 0.0
        %1375 = vmatpush.msra.mxu0 0.0
        %1376 = vmatpush.msra.mxu0 %v1356
        %1377 = vmatmul.f32.gmra.mxu0 %v1359
        %v1378 = vpop.f32.mrf.mxu0
        %v1379 = vadd.f32 0.0, %v1378
        %1380 = vdwg.mxu0
        %v1381 = vld [vmem:[#allocation4 + $0x3] sm:$0x1]
        %v1382 = vld [vmem:[#allocation4 + $0x7] sm:$0x1]
        %v1383 = vld [vmem:[#allocation4 + $0xb] sm:$0x1]
        %v1384 = vld [vmem:[#allocation4 + $0xf] sm:$0x1]
        %v1385 = vld [vmem:[#allocation4 + $0x13] sm:$0x1]
        %v1386 = vld [vmem:[#allocation4 + $0x17] sm:$0x1]
        %v1387 = vld [vmem:[#allocation4 + $0x1b] sm:$0x1]
        %v1388 = vld [vmem:[#allocation4 + $0x1f] sm:$0x1]
        %1390 = vset.pattern.permute.xlu0 0
        %1391 = vperm.xlu0 %1390, %v1318
        %v1392 = vpop.permute.xlu0 %1391
        %v1402 = vrot.slane %v1382, 7
        %v1403 = vsel %vm561, %v1402, %v1381
        %v1404 = vrot.slane %v1383, 6
        %v1405 = vsel %vm564, %v1404, %v1403
        %v1406 = vrot.slane %v1384, 5
        %v1407 = vsel %vm567, %v1406, %v1405
        %v1408 = vrot.slane %v1385, 4
        %v1409 = vsel %vm570, %v1408, %v1407
        %v1410 = vrot.slane %v1386, 3
        %v1411 = vsel %vm573, %v1410, %v1409
        %v1412 = vrot.slane %v1387, 2
        %v1413 = vsel %vm576, %v1412, %v1411
        %v1414 = vrot.slane %v1388, 1
        %v1415 = vsel %vm579, %v1414, %v1413
        %v1417 = vmul.f32 %v1392, %v1415
        %v1418 = vadd.f32 %v1417, %v1379
        %v1420 = vrot.slane %v1418, 1
        %v1421 = vrot.slane %v1418, 2
        %v1422 = vrot.slane %v1418, 3
        %v1423 = vrot.slane %v1418, 4
        %v1424 = vrot.slane %v1418, 5
        %v1425 = vrot.slane %v1418, 6
        %v1426 = vrot.slane %v1418, 7
        %1434 = vst.msk [vmem:[#allocation4 + $0x3] sm:$0x1] %vm752, %v1418
        %1435 = vst.msk [vmem:[#allocation4 + $0x7] sm:$0x1] %vm752, %v1420
        %1436 = vst.msk [vmem:[#allocation4 + $0xb] sm:$0x1] %vm752, %v1421
        %1437 = vst.msk [vmem:[#allocation4 + $0xf] sm:$0x1] %vm752, %v1422
        %1438 = vst.msk [vmem:[#allocation4 + $0x13] sm:$0x1] %vm752, %v1423
        %1439 = vst.msk [vmem:[#allocation4 + $0x17] sm:$0x1] %vm752, %v1424
        %1440 = vst.msk [vmem:[#allocation4 + $0x1b] sm:$0x1] %vm752, %v1425
        %1441 = vst.msk [vmem:[#allocation4 + $0x1f] sm:$0x1] %vm752, %v1426
        %1442 = vst.msk [vmem:[%s1310] sm:$0xff] %vm651, %v1315
        // Predicated region
        $region160: #{path_multihead_attention.4} parent=142 // pred_check
          %p1443 = pneg %p506
        $region161: #{path_multihead_attention.4} parent=142 // pred_check_branch
          %1445 = sbr.rel (%p1443) target = $region163
        $region162: #{path_multihead_attention.4} parent=142 // pred_region
          %v1446 = vld [vmem:[#allocation3] sm:$0xff]
          %v1447 = vrcp.pop %v1446
          %v1448 = vld [vmem:[#allocation4] sm:$0x1]
          %v1449 = vld [vmem:[#allocation4 + $0x4] sm:$0x1]
          %v1450 = vld [vmem:[#allocation4 + $0x8] sm:$0x1]
          %v1451 = vld [vmem:[#allocation4 + $0xc] sm:$0x1]
          %v1452 = vld [vmem:[#allocation4 + $0x10] sm:$0x1]
          %v1453 = vld [vmem:[#allocation4 + $0x14] sm:$0x1]
          %v1454 = vld [vmem:[#allocation4 + $0x18] sm:$0x1]
          %v1455 = vld [vmem:[#allocation4 + $0x1c] sm:$0x1]
          %1457 = vset.pattern.permute.xlu0 0
          %1458 = vperm.xlu0 %1457, %v1447
          %v1459 = vpop.permute.xlu0 %1458
          %v1460 = vrot.slane %v1459, 1
          %v1461 = vrot.slane %v1459, 2
          %v1462 = vrot.slane %v1459, 3
          %v1463 = vrot.slane %v1459, 4
          %v1464 = vrot.slane %v1459, 5
          %v1465 = vrot.slane %v1459, 6
          %v1466 = vrot.slane %v1459, 7
          %v1475 = vmul.f32 %v1448, %v1459
          %v1476 = vmul.f32 %v1449, %v1460
          %v1477 = vmul.f32 %v1450, %v1461
          %v1478 = vmul.f32 %v1451, %v1462
          %v1479 = vmul.f32 %v1452, %v1463
          %v1480 = vmul.f32 %v1453, %v1464
          %v1481 = vmul.f32 %v1454, %v1465
          %v1482 = vmul.f32 %v1455, %v1466
          %1483 = vst.msk [vmem:[#allocation4] sm:$0x1] %vm752, %v1475
          %1484 = vst.msk [vmem:[#allocation4 + $0x4] sm:$0x1] %vm752, %v1476
          %1485 = vst.msk [vmem:[#allocation4 + $0x8] sm:$0x1] %vm752, %v1477
          %1486 = vst.msk [vmem:[#allocation4 + $0xc] sm:$0x1] %vm752, %v1478
          %1487 = vst.msk [vmem:[#allocation4 + $0x10] sm:$0x1] %vm752, %v1479
          %1488 = vst.msk [vmem:[#allocation4 + $0x14] sm:$0x1] %vm752, %v1480
          %1489 = vst.msk [vmem:[#allocation4 + $0x18] sm:$0x1] %vm752, %v1481
          %1490 = vst.msk [vmem:[#allocation4 + $0x1c] sm:$0x1] %vm752, %v1482
          %v1491 = vld [vmem:[%s873] sm:$0xff]
          %v1492 = vrcp.pop %v1491
          %v1493 = vld [vmem:[#allocation4 + $0x1] sm:$0x1]
          %v1494 = vld [vmem:[#allocation4 + $0x5] sm:$0x1]
          %v1495 = vld [vmem:[#allocation4 + $0x9] sm:$0x1]
          %v1496 = vld [vmem:[#allocation4 + $0xd] sm:$0x1]
          %v1497 = vld [vmem:[#allocation4 + $0x11] sm:$0x1]
          %v1498 = vld [vmem:[#allocation4 + $0x15] sm:$0x1]
          %v1499 = vld [vmem:[#allocation4 + $0x19] sm:$0x1]
          %v1500 = vld [vmem:[#allocation4 + $0x1d] sm:$0x1]
          %1502 = vset.pattern.permute.xlu0 0
          %1503 = vperm.xlu0 %1502, %v1492
          %v1504 = vpop.permute.xlu0 %1503
          %v1505 = vrot.slane %v1504, 1
          %v1506 = vrot.slane %v1504, 2
          %v1507 = vrot.slane %v1504, 3
          %v1508 = vrot.slane %v1504, 4
          %v1509 = vrot.slane %v1504, 5
          %v1510 = vrot.slane %v1504, 6
          %v1511 = vrot.slane %v1504, 7
          %v1520 = vmul.f32 %v1493, %v1504
          %v1521 = vmul.f32 %v1494, %v1505
          %v1522 = vmul.f32 %v1495, %v1506
          %v1523 = vmul.f32 %v1496, %v1507
          %v1524 = vmul.f32 %v1497, %v1508
          %v1525 = vmul.f32 %v1498, %v1509
          %v1526 = vmul.f32 %v1499, %v1510
          %v1527 = vmul.f32 %v1500, %v1511
          %1528 = vst.msk [vmem:[#allocation4 + $0x1] sm:$0x1] %vm752, %v1520
          %1529 = vst.msk [vmem:[#allocation4 + $0x5] sm:$0x1] %vm752, %v1521
          %1530 = vst.msk [vmem:[#allocation4 + $0x9] sm:$0x1] %vm752, %v1522
          %1531 = vst.msk [vmem:[#allocation4 + $0xd] sm:$0x1] %vm752, %v1523
          %1532 = vst.msk [vmem:[#allocation4 + $0x11] sm:$0x1] %vm752, %v1524
          %1533 = vst.msk [vmem:[#allocation4 + $0x15] sm:$0x1] %vm752, %v1525
          %1534 = vst.msk [vmem:[#allocation4 + $0x19] sm:$0x1] %vm752, %v1526
          %1535 = vst.msk [vmem:[#allocation4 + $0x1d] sm:$0x1] %vm752, %v1527
          %v1536 = vld [vmem:[%s1100] sm:$0xff]
          %v1537 = vrcp.pop %v1536
          %v1538 = vld [vmem:[#allocation4 + $0x2] sm:$0x1]
          %v1539 = vld [vmem:[#allocation4 + $0x6] sm:$0x1]
          %v1540 = vld [vmem:[#allocation4 + $0xa] sm:$0x1]
          %v1541 = vld [vmem:[#allocation4 + $0xe] sm:$0x1]
          %v1542 = vld [vmem:[#allocation4 + $0x12] sm:$0x1]
          %v1543 = vld [vmem:[#allocation4 + $0x16] sm:$0x1]
          %v1544 = vld [vmem:[#allocation4 + $0x1a] sm:$0x1]
          %v1545 = vld [vmem:[#allocation4 + $0x1e] sm:$0x1]
          %1547 = vset.pattern.permute.xlu0 0
          %1548 = vperm.xlu0 %1547, %v1537
          %v1549 = vpop.permute.xlu0 %1548
          %v1550 = vrot.slane %v1549, 1
          %v1551 = vrot.slane %v1549, 2
          %v1552 = vrot.slane %v1549, 3
          %v1553 = vrot.slane %v1549, 4
          %v1554 = vrot.slane %v1549, 5
          %v1555 = vrot.slane %v1549, 6
          %v1556 = vrot.slane %v1549, 7
          %v1565 = vmul.f32 %v1538, %v1549
          %v1566 = vmul.f32 %v1539, %v1550
          %v1567 = vmul.f32 %v1540, %v1551
          %v1568 = vmul.f32 %v1541, %v1552
          %v1569 = vmul.f32 %v1542, %v1553
          %v1570 = vmul.f32 %v1543, %v1554
          %v1571 = vmul.f32 %v1544, %v1555
          %v1572 = vmul.f32 %v1545, %v1556
          %1573 = vst.msk [vmem:[#allocation4 + $0x2] sm:$0x1] %vm752, %v1565
          %1574 = vst.msk [vmem:[#allocation4 + $0x6] sm:$0x1] %vm752, %v1566
          %1575 = vst.msk [vmem:[#allocation4 + $0xa] sm:$0x1] %vm752, %v1567
          %1576 = vst.msk [vmem:[#allocation4 + $0xe] sm:$0x1] %vm752, %v1568
          %1577 = vst.msk [vmem:[#allocation4 + $0x12] sm:$0x1] %vm752, %v1569
          %1578 = vst.msk [vmem:[#allocation4 + $0x16] sm:$0x1] %vm752, %v1570
          %1579 = vst.msk [vmem:[#allocation4 + $0x1a] sm:$0x1] %vm752, %v1571
          %1580 = vst.msk [vmem:[#allocation4 + $0x1e] sm:$0x1] %vm752, %v1572
          %v1581 = vld [vmem:[%s1327] sm:$0xff]
          %v1582 = vrcp.pop %v1581
          %v1583 = vld [vmem:[#allocation4 + $0x3] sm:$0x1]
          %v1584 = vld [vmem:[#allocation4 + $0x7] sm:$0x1]
          %v1585 = vld [vmem:[#allocation4 + $0xb] sm:$0x1]
          %v1586 = vld [vmem:[#allocation4 + $0xf] sm:$0x1]
          %v1587 = vld [vmem:[#allocation4 + $0x13] sm:$0x1]
          %v1588 = vld [vmem:[#allocation4 + $0x17] sm:$0x1]
          %v1589 = vld [vmem:[#allocation4 + $0x1b] sm:$0x1]
          %v1590 = vld [vmem:[#allocation4 + $0x1f] sm:$0x1]
          %1592 = vset.pattern.permute.xlu0 0
          %1593 = vperm.xlu0 %1592, %v1582
          %v1594 = vpop.permute.xlu0 %1593
          %v1595 = vrot.slane %v1594, 1
          %v1596 = vrot.slane %v1594, 2
          %v1597 = vrot.slane %v1594, 3
          %v1598 = vrot.slane %v1594, 4
          %v1599 = vrot.slane %v1594, 5
          %v1600 = vrot.slane %v1594, 6
          %v1601 = vrot.slane %v1594, 7
          %v1610 = vmul.f32 %v1583, %v1594
          %v1611 = vmul.f32 %v1584, %v1595
          %v1612 = vmul.f32 %v1585, %v1596
          %v1613 = vmul.f32 %v1586, %v1597
          %v1614 = vmul.f32 %v1587, %v1598
          %v1615 = vmul.f32 %v1588, %v1599
          %v1616 = vmul.f32 %v1589, %v1600
          %v1617 = vmul.f32 %v1590, %v1601
          %1618 = vst.msk [vmem:[#allocation4 + $0x3] sm:$0x1] %vm752, %v1610
          %1619 = vst.msk [vmem:[#allocation4 + $0x7] sm:$0x1] %vm752, %v1611
          %1620 = vst.msk [vmem:[#allocation4 + $0xb] sm:$0x1] %vm752, %v1612
          %1621 = vst.msk [vmem:[#allocation4 + $0xf] sm:$0x1] %vm752, %v1613
          %1622 = vst.msk [vmem:[#allocation4 + $0x13] sm:$0x1] %vm752, %v1614
          %1623 = vst.msk [vmem:[#allocation4 + $0x17] sm:$0x1] %vm752, %v1615
          %1624 = vst.msk [vmem:[#allocation4 + $0x1b] sm:$0x1] %vm752, %v1616
          %1625 = vst.msk [vmem:[#allocation4 + $0x1f] sm:$0x1] %vm752, %v1617
          %v1626 = vld [vmem:[#allocation4] sm:$0xf]
          %v1627 = vld [vmem:[#allocation4 + $0x4] sm:$0xf]
          %v1628 = vld [vmem:[#allocation4 + $0x8] sm:$0xf]
          %v1629 = vld [vmem:[#allocation4 + $0xc] sm:$0xf]
          %v1630 = vld [vmem:[#allocation4 + $0x10] sm:$0xf]
          %v1631 = vld [vmem:[#allocation4 + $0x14] sm:$0xf]
          %v1632 = vld [vmem:[#allocation4 + $0x18] sm:$0xf]
          %v1633 = vld [vmem:[#allocation4 + $0x1c] sm:$0xf]
          %vm1634 = vcmask 60416
          %1635 = vst.msk [vmem:[%s493] sm:$0xf] %vm1634, %v1626
          %1636 = vst.msk [vmem:[%s493 + $0x4] sm:$0xf] %vm1634, %v1627
          %1637 = vst.msk [vmem:[%s493 + $0x8] sm:$0xf] %vm1634, %v1628
          %1638 = vst.msk [vmem:[%s493 + $0xc] sm:$0xf] %vm1634, %v1629
          %1639 = vst.msk [vmem:[%s493 + $0x10] sm:$0xf] %vm1634, %v1630
          %1640 = vst.msk [vmem:[%s493 + $0x14] sm:$0xf] %vm1634, %v1631
          %1641 = vst.msk [vmem:[%s493 + $0x18] sm:$0xf] %vm1634, %v1632
          %1642 = vst.msk [vmem:[%s493 + $0x1c] sm:$0xf] %vm1634, %v1633
        $region163: #{path_multihead_attention.4} parent=142 // pred_fallthru
          _
        %s1643 = sand.u32 %s132, 1
        %s1644 = sand.u32 %s132, 1
        %s1645 = smul.addr %s1644, 32
        %s1646 = scalar_lea.vmem [#allocation8], %s1645
        %s1647 = sand.u32 %s162, 1
        %s1648 = scalar_lea.sflag [#allocation10], %s1647
        %s1649 = sand.u32 %s162, 1
        %s1650 = smul.addr %s1649, 32
        %s1651 = scalar_lea.vmem [#allocation9], %s1650
        // Predicated region
        $region164: #{path_multihead_attention.4} parent=142 // pred_check
          %p1652 = pneg %p142
        $region165: #{path_multihead_attention.4} parent=142 // pred_check_branch
          %1654 = sbr.rel (%p1652) target = $region167
        $region166: #{path_multihead_attention.4} parent=142 // pred_region
          %s1655 = smul.u32 8, %s25
          %s1656 = smul.addr %s1655, 2
          %s1657 = sadd.s32 %s24, %s1656
          %s1658 = smul.addr %s1657, 4
          %s1659 = scalar_lea.vmem %s3, %s1658
          // Predicated region
          $region168: #{path_multihead_attention.4} parent=166 // pred_check
            _
          $region169: #{path_multihead_attention.4} parent=166 // pred_check_branch
            %1661 = sbr.rel (0) target = $region171
          $region170: #{path_multihead_attention.4} parent=166 // pred_region
            // Predicated region
            $region172: #{path_multihead_attention.4} parent=170 // pred_check
              _
            $region173: #{path_multihead_attention.4} parent=170 // pred_check_branch
              %1663 = sbr.rel target = $region175
            $region174: #{path_multihead_attention.4} parent=170 // pred_region
              // Predicated region
              $region187: #{path_multihead_attention.4} parent=174 // pred_check
                _
              $region188: #{path_multihead_attention.4} parent=174 // pred_check_branch
                %1693 = sbr.rel (0) target = $region190
              $region189: #{path_multihead_attention.4} parent=174 // pred_region
                loop: start=0, step=1, limit=1
                $region191: #{path_multihead_attention.4} parent=189 // loop_pre_header
                  _
                $region192: #{path_multihead_attention.4} parent=189 // loop_header
                  %s1695 = sphi 0, %s1699
                  %p1696 = scmp.ge.s32.totalorder %s1695, 1
                  %s1700 = sphi %s1646, %s1646
                  %s1701 = sphi %s1659, %s1659
                $region193: #{path_multihead_attention.4} parent=189 // loop_header_branch
                  %1698 = sbr.rel (%p1696) target = $region197
                $region194: #{path_multihead_attention.4} parent=189 // loop_body
                  _
                $region195: #{path_multihead_attention.4} parent=189 // loop_footer
                  %s1699 = sadd.s32 1, %s1695
                $region196: #{path_multihead_attention.4} parent=189 // loop_footer_branch
                  %1694 = sbr.rel target = $region192
                $region197: #{path_multihead_attention.4} parent=189 // loop_exit
                  _
                %s1703 = ssub.s32 16, 1
                loop: start=0, step=1, limit=1
                $region198: #{path_multihead_attention.4} parent=189 // loop_pre_header
                  _
                $region199: #{path_multihead_attention.4} parent=189 // loop_header
                  %s1705 = sphi 0, %s1709
                  %p1706 = scmp.ge.s32.totalorder %s1705, 1
                  %s1710 = sphi %s1646, %s1646
                  %s1711 = sphi %s1659, %s1659
                $region200: #{path_multihead_attention.4} parent=189 // loop_header_branch
                  %1708 = sbr.rel (%p1706) target = $region204
                $region201: #{path_multihead_attention.4} parent=189 // loop_body
                  %v1712 = vld [vmem:[%s1710] sm:%s1703]
                  %1713 = vst [vmem:[%s1711] sm:%s1703] %v1712
                  %v1714 = vld [vmem:[%s1710 + $0x4] sm:%s1703]
                  %1715 = vst [vmem:[%s1711 + $0x8] sm:%s1703] %v1714
                  %v1716 = vld [vmem:[%s1710 + $0x8] sm:%s1703]
                  %1717 = vst [vmem:[%s1711 + $0x10] sm:%s1703] %v1716
                  %v1718 = vld [vmem:[%s1710 + $0xc] sm:%s1703]
                  %1719 = vst [vmem:[%s1711 + $0x18] sm:%s1703] %v1718
                  %v1720 = vld [vmem:[%s1710 + $0x10] sm:%s1703]
                  %1721 = vst [vmem:[%s1711 + $0x20] sm:%s1703] %v1720
                  %v1722 = vld [vmem:[%s1710 + $0x14] sm:%s1703]
                  %1723 = vst [vmem:[%s1711 + $0x28] sm:%s1703] %v1722
                  %v1724 = vld [vmem:[%s1710 + $0x18] sm:%s1703]
                  %1725 = vst [vmem:[%s1711 + $0x30] sm:%s1703] %v1724
                  %v1726 = vld [vmem:[%s1710 + $0x1c] sm:%s1703]
                  %1727 = vst [vmem:[%s1711 + $0x38] sm:%s1703] %v1726
                $region202: #{path_multihead_attention.4} parent=189 // loop_footer
                  %s1709 = sadd.s32 1, %s1705
                $region203: #{path_multihead_attention.4} parent=189 // loop_footer_branch
                  %1704 = sbr.rel target = $region199
                $region204: #{path_multihead_attention.4} parent=189 // loop_exit
                  _
              $region190: #{path_multihead_attention.4} parent=174 // pred_fallthru
                _
            $region175: #{path_multihead_attention.4} parent=170 // pred_fallthru
              _
            // Predicated region
            $region176: #{path_multihead_attention.4} parent=170 // pred_check
              _
            $region177: #{path_multihead_attention.4} parent=170 // pred_check_branch
              %1665 = sbr.rel (0) target = $region179
            $region178: #{path_multihead_attention.4} parent=170 // pred_region
              %s1667 = ssub.s32 16, 1
              loop: start=0, step=1, limit=1
              $region180: #{path_multihead_attention.4} parent=178 // loop_pre_header
                _
              $region181: #{path_multihead_attention.4} parent=178 // loop_header
                %s1669 = sphi 0, %s1673
                %p1670 = scmp.ge.s32.totalorder %s1669, 1
                %s1674 = sphi %s1646, %s1646
                %s1675 = sphi %s1659, %s1659
              $region182: #{path_multihead_attention.4} parent=178 // loop_header_branch
                %1672 = sbr.rel (%p1670) target = $region186
              $region183: #{path_multihead_attention.4} parent=178 // loop_body
                %v1676 = vld [vmem:[%s1674] sm:%s1667]
                %1677 = vst [vmem:[%s1675] sm:%s1667] %v1676
                %v1678 = vld [vmem:[%s1674 + $0x4] sm:%s1667]
                %1679 = vst [vmem:[%s1675 + $0x8] sm:%s1667] %v1678
                %v1680 = vld [vmem:[%s1674 + $0x8] sm:%s1667]
                %1681 = vst [vmem:[%s1675 + $0x10] sm:%s1667] %v1680
                %v1682 = vld [vmem:[%s1674 + $0xc] sm:%s1667]
                %1683 = vst [vmem:[%s1675 + $0x18] sm:%s1667] %v1682
                %v1684 = vld [vmem:[%s1674 + $0x10] sm:%s1667]
                %1685 = vst [vmem:[%s1675 + $0x20] sm:%s1667] %v1684
                %v1686 = vld [vmem:[%s1674 + $0x14] sm:%s1667]
                %1687 = vst [vmem:[%s1675 + $0x28] sm:%s1667] %v1686
                %v1688 = vld [vmem:[%s1674 + $0x18] sm:%s1667]
                %1689 = vst [vmem:[%s1675 + $0x30] sm:%s1667] %v1688
                %v1690 = vld [vmem:[%s1674 + $0x1c] sm:%s1667]
                %1691 = vst [vmem:[%s1675 + $0x38] sm:%s1667] %v1690
              $region184: #{path_multihead_attention.4} parent=178 // loop_footer
                %s1673 = sadd.s32 1, %s1669
              $region185: #{path_multihead_attention.4} parent=178 // loop_footer_branch
                %1668 = sbr.rel target = $region181
              $region186: #{path_multihead_attention.4} parent=178 // loop_exit
                _
            $region179: #{path_multihead_attention.4} parent=170 // pred_fallthru
              _
          $region171: #{path_multihead_attention.4} parent=166 // pred_fallthru
            _
          %1728 = vnop
        $region167: #{path_multihead_attention.4} parent=142 // pred_fallthru
          _
        // Predicated region
        $region205: #{path_multihead_attention.4} parent=142 // pred_check
          %p1729 = pneg %p172
        $region206: #{path_multihead_attention.4} parent=142 // pred_check_branch
          %1731 = sbr.rel (%p1729) target = $region208
        $region207: #{path_multihead_attention.4} parent=142 // pred_region
          %s1732 = smul.u32 4, %s24
          %1734 = vsyncadd %s1648, 0
          %s1735 = sadd.s32 %s26, %s25
          %s1736 = sadd.s32 %s1735, %s1732
          %s1737 = smul.addr %s1736, 8
          %s1738 = scalar_lea.hbm %s4, %s1737
          %s1739 = sshll.u32 %s1651, 4
          %s1740 = int_to_ptr.vmem [resolvable:$true] %s1739
          %s1741 = sshll.u32 %s1738, 4
          %s1742 = int_to_ptr.hbm [resolvable:$true] %s1741
          %1747 = dma.vmem_to_hbm [thread:$0]  %s1740, 512, %s1742, %s1648, 128, 128, 8
        $region208: #{path_multihead_attention.4} parent=142 // pred_fallthru
          _
      $region143: #{path_multihead_attention.4} parent=5 // pred_fallthru
        _
      %p1748 = scmp.le.s32.totalorder 2, %s14
      // Predicated region
      $region209: #{path_multihead_attention.4} parent=5 // pred_check
        %p1749 = pneg %p1748
      $region210: #{path_multihead_attention.4} parent=5 // pred_check_branch
        %1751 = sbr.rel (%p1749) target = $region212
      $region211: #{path_multihead_attention.4} parent=5 // pred_region
        %s1752 = ssub.s32 %s14, 2
        // Predicated region
        $region213: #{path_multihead_attention.4} parent=211 // pred_check
          %p1753 = pneg %p148
        $region214: #{path_multihead_attention.4} parent=211 // pred_check_branch
          %1755 = sbr.rel (%p1753) target = $region216
        $region215: #{path_multihead_attention.4} parent=211 // pred_region
          %s1756 = sand.u32 %s133, 1
          %s1757 = sand.u32 %s133, 1
          %s1758 = smul.addr %s1757, 32
          %s1759 = scalar_lea.vmem [#allocation8], %s1758
        $region216: #{path_multihead_attention.4} parent=211 // pred_fallthru
          _
        // Predicated region
        $region217: #{path_multihead_attention.4} parent=211 // pred_check
          %p1760 = pneg %p178
        $region218: #{path_multihead_attention.4} parent=211 // pred_check_branch
          %1762 = sbr.rel (%p1760) target = $region220
        $region219: #{path_multihead_attention.4} parent=211 // pred_region
          %s1763 = sand.u32 %s163, 1
          %s1764 = scalar_lea.sflag [#allocation10], %s1763
          %s1765 = sand.u32 %s163, 1
          %s1766 = smul.addr %s1765, 32
          %s1767 = scalar_lea.vmem [#allocation9], %s1766
          %1769 = dma.done %s1764, 512
        $region220: #{path_multihead_attention.4} parent=211 // pred_fallthru
          _
      $region212: #{path_multihead_attention.4} parent=5 // pred_fallthru
        _
    $region6: #{path_multihead_attention.4} parent=1 // loop_footer
      %s18 = sadd.s32 1, %s14
    $region7: #{path_multihead_attention.4} parent=1 // loop_footer_branch
      %13 = sbr.rel target = $region3
    $region8: #{path_multihead_attention.4} parent=1 // loop_exit
      _
    %1770 = vsyncpa [#allocation10], 1
    %s1771 = scalar_lea.sflag [#allocation10], 1
    %1772 = vsyncpa %s1771, 1

</llo_original>
